<compile_context>
chip_gen: v7x
topology: tpu7x:2x2x1
jax: 0.10.0
libtpu: 0.0.40
codegen_flags: <defaults>
</compile_context>

<pallas_src>
import jax
import jax.numpy as jnp
from jax.experimental import pallas as pl
from jax.experimental.pallas import tpu as pltpu


# ----------------------------------------------------------------------------
# Fixed architecture dims (nn.Conv2d(3,6,5) / pool2 / Conv2d(6,16,5) / pool2 / fc)
# ----------------------------------------------------------------------------
C1, H1, W1 = 3, 32, 32
KH = KW = 5
OC1 = 6
OH1 = OW1 = H1 - KH + 1            # 28
PH1 = PW1 = OH1 // 2               # 14
C2, H2, W2 = OC1, PH1, PW1         # 6, 14, 14
OC2 = 16
OH2 = OW2 = H2 - KH + 1            # 10
PH2 = PW2 = OH2 // 2               # 5
F1, F2, F3 = 120, 84, 10


# ----------------------------------------------------------------------------
# The single fused kernel (one sample per grid step; everything stays in VMEM)
# ----------------------------------------------------------------------------
def _net_kernel(x_ref, t1_ref, b1_ref, s1_ref, r1_ref,
                t2_ref, b2_ref, s2_ref, r2_ref,
                w1_ref, fb1_ref, w2_ref, fb2_ref, w3_ref, fb3_ref,
                o_ref):
    f32 = jnp.float32

    # ---- conv1 + bias + ReLU.  Input layout (C1*H1, W1); output z1[oh, oc*OW1+ow].
    z1 = jnp.zeros((OH1, OC1 * OW1), f32)
    for c in range(C1):
        for ki in range(KH):
            lhs = x_ref[0, c * H1 + ki: c * H1 + ki + OH1, :]              # (28, 32)
            rhs = t1_ref[(c * KH + ki) * W1: (c * KH + ki + 1) * W1, :]    # (32, 168)
            z1 = z1 + jnp.dot(lhs, rhs, preferred_element_type=f32)
    a1 = jnp.maximum(z1 + b1_ref[...], 0.0)                                # (28, 168)

    # ---- 2x2 max-pool via exact 0/1 selection matmuls.
    rows1 = jnp.maximum(jnp.dot(s1_ref[0], a1, preferred_element_type=f32),
                        jnp.dot(s1_ref[1], a1, preferred_element_type=f32))  # (14, 168)
    p1 = jnp.maximum(jnp.dot(rows1, r1_ref[0], preferred_element_type=f32),
                     jnp.dot(rows1, r1_ref[1], preferred_element_type=f32))  # (14, 84)

    # ---- conv2 + bias + ReLU on the (h, c*W2+w) layout produced above.
    z2 = jnp.zeros((OH2, OC2 * OW2), f32)
    for ki in range(KH):
        lhs = p1[ki: ki + OH2, :]                                          # (10, 84)
        rhs = t2_ref[ki * C2 * W2: (ki + 1) * C2 * W2, :]                  # (84, 160)
        z2 = z2 + jnp.dot(lhs, rhs, preferred_element_type=f32)
    a2 = jnp.maximum(z2 + b2_ref[...], 0.0)                                # (10, 160)

    rows2 = jnp.maximum(jnp.dot(s2_ref[0], a2, preferred_element_type=f32),
                        jnp.dot(s2_ref[1], a2, preferred_element_type=f32))  # (5, 160)
    p2 = jnp.maximum(jnp.dot(rows2, r2_ref[0], preferred_element_type=f32),
                     jnp.dot(rows2, r2_ref[1], preferred_element_type=f32))  # (5, 80)

    # ---- fc1 (+ReLU): consumes p2 in its native (h, c*PW2+w) order via the
    #      pre-permuted weight -> no flatten transpose needed.
    y = fb1_ref[...]                                                       # (1, 120)
    for h in range(PH2):
        y = y + jnp.dot(p2[h:h + 1, :],
                        w1_ref[h * OC2 * PW2: (h + 1) * OC2 * PW2, :],
                        preferred_element_type=f32)
    y = jnp.maximum(y, 0.0)
    # ---- fc2 (+ReLU) and fc3.
    y = jnp.maximum(jnp.dot(y, w2_ref[...], preferred_element_type=f32) + fb2_ref[...], 0.0)
    y = jnp.dot(y, w3_ref[...], preferred_element_type=f32) + fb3_ref[...]  # (1, 10)

    o_ref[0] = y.astype(o_ref.dtype)


# ----------------------------------------------------------------------------
# Host-side (one-time) weight lowering helpers
# ----------------------------------------------------------------------------
def _lowered_conv_weight(w4, w_in, row_order):
    """Banded ("Toeplitz") lowering of a conv weight.

    T[row, oc*OW + ow] = w4[oc, c, ki, w - ow]  (if 0 <= w - ow < KW, else 0)
    with row = (c*KH + ki)*w_in + w   for row_order == "ckw"
             = (ki*C  + c )*w_in + w  for row_order == "kcw".
    """
    n_oc, n_c, n_kh, n_kw = w4.shape
    n_ow = w_in - n_kw + 1
    sel = (jnp.arange(w_in)[None, :, None]
           == jnp.arange(n_ow)[None, None, :] + jnp.arange(n_kw)[:, None, None])
    t = jnp.einsum("ocij,jwv->ciwov", w4, sel.astype(w4.dtype))  # (C, KH, W, OC, OW)
    if row_order == "kcw":
        t = jnp.transpose(t, (1, 0, 2, 3, 4))
    return t.reshape(n_c * n_kh * w_in, n_oc * n_ow)


def _row_pool_selectors(oh):
    """(2, OH//2, OH): left-matmul selectors picking even / odd rows."""
    ph = oh // 2
    i = jnp.arange(ph)[:, None]
    j = jnp.arange(oh)[None, :]
    return jnp.stack([(j == 2 * i).astype(jnp.float32),
                      (j == 2 * i + 1).astype(jnp.float32)])


def _col_pool_selectors(n_oc, ow):
    """(2, OC*OW, OC*OW//2): block-diagonal right-matmul selectors (even/odd cols)."""
    pw = ow // 2
    r = jnp.arange(n_oc * ow)[:, None]
    q = jnp.arange(n_oc * pw)[None, :]
    same_ch = (r // ow) == (q // pw)
    even = same_ch & ((r % ow) == 2 * (q % pw))
    odd = same_ch & ((r % ow) == 2 * (q % pw) + 1)
    return jnp.stack([even.astype(jnp.float32), odd.astype(jnp.float32)])


# ----------------------------------------------------------------------------
# Forward pass (single pallas_call) and pure-JAX reference
# ----------------------------------------------------------------------------
def net_forward(params, x):
    """Forward pass of `Net` as one fused Pallas TPU kernel, gridded over the batch."""
    B = x.shape[0]
    assert x.shape[1:] == (C1, H1, W1), x.shape
    f32 = jnp.float32

    xr = x.astype(f32).reshape(B, C1 * H1, W1)      # free reshape of NCHW (no transpose)

    # One-time (cacheable) weight preprocessing, all outside the kernel.
    t1 = _lowered_conv_weight(params["conv1_w"].astype(f32), W1, "ckw")      # (480, 168)
    b1 = jnp.repeat(params["conv1_b"].astype(f32), OW1).reshape(1, OC1 * OW1)
    s1 = _row_pool_selectors(OH1)                                            # (2, 14, 28)
    r1 = _col_pool_selectors(OC1, OW1)                                       # (2, 168, 84)

    t2 = _lowered_conv_weight(params["conv2_w"].astype(f32), W2, "kcw")      # (420, 160)
    b2 = jnp.repeat(params["conv2_b"].astype(f32), OW2).reshape(1, OC2 * OW2)
    s2 = _row_pool_selectors(OH2)                                            # (2, 5, 10)
    r2 = _col_pool_selectors(OC2, OW2)                                       # (2, 160, 80)

    # fc1 weight permuted to the kernel's native (h, c, w) flatten order.
    w1r = (params["fc1_w"].astype(f32)
           .reshape(F1, OC2, PH2, PW2)
           .transpose(2, 1, 3, 0)
           .reshape(PH2 * OC2 * PW2, F1))                                    # (400, 120)
    fb1 = params["fc1_b"].astype(f32).reshape(1, F1)
    w2t = params["fc2_w"].astype(f32).T                                      # (120, 84)
    fb2 = params["fc2_b"].astype(f32).reshape(1, F2)
    w3t = params["fc3_w"].astype(f32).T                                      # (84, 10)
    fb3 = params["fc3_b"].astype(f32).reshape(1, F3)

    consts = (t1, b1, s1, r1, t2, b2, s2, r2, w1r, fb1, w2t, fb2, w3t, fb3)

    flops = B * 2 * (
        C1 * KH * OH1 * W1 * OC1 * OW1
        + 2 * PH1 * OH1 * OC1 * OW1 + 2 * PH1 * OC1 * OW1 * OC1 * PW1
        + KH * OH2 * C2 * W2 * OC2 * OW2
        + 2 * PH2 * OH2 * OC2 * OW2 + 2 * PH2 * OC2 * OW2 * OC2 * PW2
        + PH2 * OC2 * PW2 * F1 + F1 * F2 + F2 * F3)
    const_bytes = 4 * sum(int(a.size) for a in consts)
    cost = pl.CostEstimate(flops=flops, transcendentals=0,
                           bytes_accessed=B * 4 * (C1 * H1 * W1 + F3) + const_bytes)

    def _const_spec(a):
        # Whole-array block, constant index map -> DMA'd once, VMEM-resident.
        if a.ndim == 2:
            return pl.BlockSpec(a.shape, lambda b: (0, 0))
        return pl.BlockSpec(a.shape, lambda b: (0, 0, 0))

    out = pl.pallas_call(
        _net_kernel,
        grid=(B,),
        in_specs=[pl.BlockSpec((1, C1 * H1, W1), lambda b: (b, 0, 0))]
                 + [_const_spec(a) for a in consts],
        out_specs=pl.BlockSpec((1, 1, F3), lambda b: (b, 0, 0)),
        out_shape=jax.ShapeDtypeStruct((B, 1, F3), f32),
        compiler_params=pltpu.CompilerParams(dimension_semantics=("parallel",)),
        cost_estimate=cost,
    )(xr, *consts)
    return out.reshape(B, F3)


def net_forward_reference(params, x):
    """Pure-JAX reference (no Pallas, no shared lowering code) for correctness."""
    hp = jax.lax.Precision.HIGHEST

    def conv_relu(x, w, b):
        y = jax.lax.conv_general_dilated(
            x, w, window_strides=(1, 1), padding="VALID",
            dimension_numbers=("NCHW", "OIHW", "NCHW"), precision=hp)
        return jnp.maximum(y + b[None, :, None, None], 0.0)

    def pool(x):
        B, C, H, W = x.shape
        return x.reshape(B, C, H // 2, 2, W // 2, 2).max(axis=(3, 5))

    x = pool(conv_relu(x, params["conv1_w"], params["conv1_b"]))
    x = pool(conv_relu(x, params["conv2_w"], params["conv2_b"]))
    x = x.reshape(x.shape[0], -1)
    x = jnp.maximum(jnp.dot(x, params["fc1_w"].T, precision=hp) + params["fc1_b"], 0.0)
    x = jnp.maximum(jnp.dot(x, params["fc2_w"].T, precision=hp) + params["fc2_b"], 0.0)
    return jnp.dot(x, params["fc3_w"].T, precision=hp) + params["fc3_b"]


# ----------------------------------------------------------------------------
# Parameter init (deterministic, PyTorch-default-style uniform bounds)
# ----------------------------------------------------------------------------
def _uniform(key, shape, bound):
    return jax.random.uniform(key, shape, jnp.float32, -bound, bound)


def init_params(seed=0):
    key = jax.random.PRNGKey(seed)
    keys = jax.random.split(key, 10)
    params = {}

    def conv_init(kw_, kb_, oc, ic, k):
        fan_in = ic * k * k
        b = 1.0 / float(fan_in) ** 0.5
        return _uniform(kw_, (oc, ic, k, k), b), _uniform(kb_, (oc,), b)

    def fc_init(kw_, kb_, out_f, in_f):
        b = 1.0 / float(in_f) ** 0.5
        return _uniform(kw_, (out_f, in_f), b), _uniform(kb_, (out_f,), b)

    params["conv1_w"], params["conv1_b"] = conv_init(keys[0], keys[1], OC1, C1, KH)
    params["conv2_w"], params["conv2_b"] = conv_init(keys[2], keys[3], OC2, C2, KH)
    params["fc1_w"], params["fc1_b"] = fc_init(keys[4], keys[5], F1, OC2 * PH2 * PW2)
    params["fc2_w"], params["fc2_b"] = fc_init(keys[6], keys[7], F2, F1)
    params["fc3_w"], params["fc3_b"] = fc_init(keys[8], keys[9], F3, F2)
    return params


if __name__ == "__main__":
    key = jax.random.PRNGKey(0)
    x = jax.random.normal(key, (2, C1, H1, W1), jnp.float32)  # NCHW, matches nn.Conv2d(3, ...)
    params = init_params(seed=0)

    fwd = jax.jit(net_forward)
    out = jax.block_until_ready(fwd(params, x))
    assert out.shape == (2, F3), out.shape

    ref = jax.block_until_ready(net_forward_reference(params, x))
    err = float(jnp.max(jnp.abs(out - ref)))
    assert jnp.allclose(out, ref, atol=2e-3, rtol=2e-3), f"mismatch vs reference, max|diff|={err}"

    print("KERNEL_OK")
</pallas_src>

<mosaic_0001>
module attributes {stable_mosaic.version = 11 : i64} {
  func.func @_net_kernel(%arg0: i32, %arg1: memref<1x96x32xf32, #tpu.memory_space<vmem>>, %arg2: memref<480x168xf32, #tpu.memory_space<vmem>>, %arg3: memref<1x168xf32, #tpu.memory_space<vmem>>, %arg4: memref<2x14x28xf32, #tpu.memory_space<vmem>>, %arg5: memref<2x168x84xf32, #tpu.memory_space<vmem>>, %arg6: memref<420x160xf32, #tpu.memory_space<vmem>>, %arg7: memref<1x160xf32, #tpu.memory_space<vmem>>, %arg8: memref<2x5x10xf32, #tpu.memory_space<vmem>>, %arg9: memref<2x160x80xf32, #tpu.memory_space<vmem>>, %arg10: memref<400x120xf32, #tpu.memory_space<vmem>>, %arg11: memref<1x120xf32, #tpu.memory_space<vmem>>, %arg12: memref<120x84xf32, #tpu.memory_space<vmem>>, %arg13: memref<1x84xf32, #tpu.memory_space<vmem>>, %arg14: memref<84x10xf32, #tpu.memory_space<vmem>>, %arg15: memref<1x10xf32, #tpu.memory_space<vmem>>, %arg16: memref<1x1x10xf32, #tpu.memory_space<vmem>>) attributes {dimension_semantics = [#tpu.dimension_semantics<parallel>], iteration_bounds = array<i64: 2>, scalar_prefetch = 0 : i64, scratch_operands = 0 : i64, tpu.core_type = #tpu.core_type<tc>, window_params = [{transform_indices = @transform_0, window_bounds = array<i64: 1, 96, 32>}, {pipeline_mode = #tpu.pipeline_mode<synchronous>, transform_indices = @transform_1, window_bounds = array<i64: 480, 168>}, {pipeline_mode = #tpu.pipeline_mode<synchronous>, transform_indices = @transform_2, window_bounds = array<i64: 1, 168>}, {pipeline_mode = #tpu.pipeline_mode<synchronous>, transform_indices = @transform_3, window_bounds = array<i64: 2, 14, 28>}, {pipeline_mode = #tpu.pipeline_mode<synchronous>, transform_indices = @transform_4, window_bounds = array<i64: 2, 168, 84>}, {pipeline_mode = #tpu.pipeline_mode<synchronous>, transform_indices = @transform_5, window_bounds = array<i64: 420, 160>}, {pipeline_mode = #tpu.pipeline_mode<synchronous>, transform_indices = @transform_6, window_bounds = array<i64: 1, 160>}, {pipeline_mode = #tpu.pipeline_mode<synchronous>, transform_indices = @transform_7, window_bounds = array<i64: 2, 5, 10>}, {pipeline_mode = #tpu.pipeline_mode<synchronous>, transform_indices = @transform_8, window_bounds = array<i64: 2, 160, 80>}, {pipeline_mode = #tpu.pipeline_mode<synchronous>, transform_indices = @transform_9, window_bounds = array<i64: 400, 120>}, {pipeline_mode = #tpu.pipeline_mode<synchronous>, transform_indices = @transform_10, window_bounds = array<i64: 1, 120>}, {pipeline_mode = #tpu.pipeline_mode<synchronous>, transform_indices = @transform_11, window_bounds = array<i64: 120, 84>}, {pipeline_mode = #tpu.pipeline_mode<synchronous>, transform_indices = @transform_12, window_bounds = array<i64: 1, 84>}, {pipeline_mode = #tpu.pipeline_mode<synchronous>, transform_indices = @transform_13, window_bounds = array<i64: 84, 10>}, {pipeline_mode = #tpu.pipeline_mode<synchronous>, transform_indices = @transform_14, window_bounds = array<i64: 1, 10>}, {transform_indices = @transform_15, window_bounds = array<i64: 1, 1, 10>}]} {
    %cst = arith.constant 0.000000e+00 : f32
    %0 = vector.broadcast %cst : f32 to vector<28x168xf32>
    %c0 = arith.constant 0 : index
    %c0_0 = arith.constant 0 : index
    %c0_1 = arith.constant 0 : index
    %1 = vector.load %arg1[%c0, %c0_0, %c0_1] : memref<1x96x32xf32, #tpu.memory_space<vmem>>, vector<1x28x32xf32>
    %2 = vector.shape_cast %1 : vector<1x28x32xf32> to vector<28x32xf32>
    %c0_2 = arith.constant 0 : index
    %c0_3 = arith.constant 0 : index
    %3 = vector.load %arg2[%c0_2, %c0_3] : memref<480x168xf32, #tpu.memory_space<vmem>>, vector<32x168xf32>
    %cst_4 = arith.constant dense<0.000000e+00> : vector<28x168xf32>
    %4 = tpu.matmul %2, %3, %cst_4 {dimension_numbers = #tpu.dot_dimension_numbers<[1], [0], [0], [1], [0, 0, 1, 1], [], []>} : vector<28x32xf32>, vector<32x168xf32>, vector<28x168xf32> -> vector<28x168xf32>
    %5 = arith.addf %0, %4 : vector<28x168xf32>
    %c0_5 = arith.constant 0 : index
    %c1 = arith.constant 1 : index
    %c0_6 = arith.constant 0 : index
    %6 = vector.load %arg1[%c0_5, %c1, %c0_6] : memref<1x96x32xf32, #tpu.memory_space<vmem>>, vector<1x28x32xf32>
    %7 = vector.shape_cast %6 : vector<1x28x32xf32> to vector<28x32xf32>
    %c32 = arith.constant 32 : index
    %c0_7 = arith.constant 0 : index
    %8 = vector.load %arg2[%c32, %c0_7] : memref<480x168xf32, #tpu.memory_space<vmem>>, vector<32x168xf32>
    %cst_8 = arith.constant dense<0.000000e+00> : vector<28x168xf32>
    %9 = tpu.matmul %7, %8, %cst_8 {dimension_numbers = #tpu.dot_dimension_numbers<[1], [0], [0], [1], [0, 0, 1, 1], [], []>} : vector<28x32xf32>, vector<32x168xf32>, vector<28x168xf32> -> vector<28x168xf32>
    %10 = arith.addf %5, %9 : vector<28x168xf32>
    %c0_9 = arith.constant 0 : index
    %c2 = arith.constant 2 : index
    %c0_10 = arith.constant 0 : index
    %11 = vector.load %arg1[%c0_9, %c2, %c0_10] : memref<1x96x32xf32, #tpu.memory_space<vmem>>, vector<1x28x32xf32>
    %12 = vector.shape_cast %11 : vector<1x28x32xf32> to vector<28x32xf32>
    %c64 = arith.constant 64 : index
    %c0_11 = arith.constant 0 : index
    %13 = vector.load %arg2[%c64, %c0_11] : memref<480x168xf32, #tpu.memory_space<vmem>>, vector<32x168xf32>
    %cst_12 = arith.constant dense<0.000000e+00> : vector<28x168xf32>
    %14 = tpu.matmul %12, %13, %cst_12 {dimension_numbers = #tpu.dot_dimension_numbers<[1], [0], [0], [1], [0, 0, 1, 1], [], []>} : vector<28x32xf32>, vector<32x168xf32>, vector<28x168xf32> -> vector<28x168xf32>
    %15 = arith.addf %10, %14 : vector<28x168xf32>
    %c0_13 = arith.constant 0 : index
    %c3 = arith.constant 3 : index
    %c0_14 = arith.constant 0 : index
    %16 = vector.load %arg1[%c0_13, %c3, %c0_14] : memref<1x96x32xf32, #tpu.memory_space<vmem>>, vector<1x28x32xf32>
    %17 = vector.shape_cast %16 : vector<1x28x32xf32> to vector<28x32xf32>
    %c96 = arith.constant 96 : index
    %c0_15 = arith.constant 0 : index
    %18 = vector.load %arg2[%c96, %c0_15] : memref<480x168xf32, #tpu.memory_space<vmem>>, vector<32x168xf32>
    %cst_16 = arith.constant dense<0.000000e+00> : vector<28x168xf32>
    %19 = tpu.matmul %17, %18, %cst_16 {dimension_numbers = #tpu.dot_dimension_numbers<[1], [0], [0], [1], [0, 0, 1, 1], [], []>} : vector<28x32xf32>, vector<32x168xf32>, vector<28x168xf32> -> vector<28x168xf32>
    %20 = arith.addf %15, %19 : vector<28x168xf32>
    %c0_17 = arith.constant 0 : index
    %c4 = arith.constant 4 : index
    %c0_18 = arith.constant 0 : index
    %21 = vector.load %arg1[%c0_17, %c4, %c0_18] : memref<1x96x32xf32, #tpu.memory_space<vmem>>, vector<1x28x32xf32>
    %22 = vector.shape_cast %21 : vector<1x28x32xf32> to vector<28x32xf32>
    %c128 = arith.constant 128 : index
    %c0_19 = arith.constant 0 : index
    %23 = vector.load %arg2[%c128, %c0_19] : memref<480x168xf32, #tpu.memory_space<vmem>>, vector<32x168xf32>
    %cst_20 = arith.constant dense<0.000000e+00> : vector<28x168xf32>
    %24 = tpu.matmul %22, %23, %cst_20 {dimension_numbers = #tpu.dot_dimension_numbers<[1], [0], [0], [1], [0, 0, 1, 1], [], []>} : vector<28x32xf32>, vector<32x168xf32>, vector<28x168xf32> -> vector<28x168xf32>
    %25 = arith.addf %20, %24 : vector<28x168xf32>
    %c0_21 = arith.constant 0 : index
    %c32_22 = arith.constant 32 : index
    %c0_23 = arith.constant 0 : index
    %26 = vector.load %arg1[%c0_21, %c32_22, %c0_23] : memref<1x96x32xf32, #tpu.memory_space<vmem>>, vector<1x28x32xf32>
    %27 = vector.shape_cast %26 : vector<1x28x32xf32> to vector<28x32xf32>
    %c160 = arith.constant 160 : index
    %c0_24 = arith.constant 0 : index
    %28 = vector.load %arg2[%c160, %c0_24] : memref<480x168xf32, #tpu.memory_space<vmem>>, vector<32x168xf32>
    %cst_25 = arith.constant dense<0.000000e+00> : vector<28x168xf32>
    %29 = tpu.matmul %27, %28, %cst_25 {dimension_numbers = #tpu.dot_dimension_numbers<[1], [0], [0], [1], [0, 0, 1, 1], [], []>} : vector<28x32xf32>, vector<32x168xf32>, vector<28x168xf32> -> vector<28x168xf32>
    %30 = arith.addf %25, %29 : vector<28x168xf32>
    %c0_26 = arith.constant 0 : index
    %c33 = arith.constant 33 : index
    %c0_27 = arith.constant 0 : index
    %31 = vector.load %arg1[%c0_26, %c33, %c0_27] : memref<1x96x32xf32, #tpu.memory_space<vmem>>, vector<1x28x32xf32>
    %32 = vector.shape_cast %31 : vector<1x28x32xf32> to vector<28x32xf32>
    %c192 = arith.constant 192 : index
    %c0_28 = arith.constant 0 : index
    %33 = vector.load %arg2[%c192, %c0_28] : memref<480x168xf32, #tpu.memory_space<vmem>>, vector<32x168xf32>
    %cst_29 = arith.constant dense<0.000000e+00> : vector<28x168xf32>
    %34 = tpu.matmul %32, %33, %cst_29 {dimension_numbers = #tpu.dot_dimension_numbers<[1], [0], [0], [1], [0, 0, 1, 1], [], []>} : vector<28x32xf32>, vector<32x168xf32>, vector<28x168xf32> -> vector<28x168xf32>
    %35 = arith.addf %30, %34 : vector<28x168xf32>
    %c0_30 = arith.constant 0 : index
    %c34 = arith.constant 34 : index
    %c0_31 = arith.constant 0 : index
    %36 = vector.load %arg1[%c0_30, %c34, %c0_31] : memref<1x96x32xf32, #tpu.memory_space<vmem>>, vector<1x28x32xf32>
    %37 = vector.shape_cast %36 : vector<1x28x32xf32> to vector<28x32xf32>
    %c224 = arith.constant 224 : index
    %c0_32 = arith.constant 0 : index
    %38 = vector.load %arg2[%c224, %c0_32] : memref<480x168xf32, #tpu.memory_space<vmem>>, vector<32x168xf32>
    %cst_33 = arith.constant dense<0.000000e+00> : vector<28x168xf32>
    %39 = tpu.matmul %37, %38, %cst_33 {dimension_numbers = #tpu.dot_dimension_numbers<[1], [0], [0], [1], [0, 0, 1, 1], [], []>} : vector<28x32xf32>, vector<32x168xf32>, vector<28x168xf32> -> vector<28x168xf32>
    %40 = arith.addf %35, %39 : vector<28x168xf32>
    %c0_34 = arith.constant 0 : index
    %c35 = arith.constant 35 : index
    %c0_35 = arith.constant 0 : index
    %41 = vector.load %arg1[%c0_34, %c35, %c0_35] : memref<1x96x32xf32, #tpu.memory_space<vmem>>, vector<1x28x32xf32>
    %42 = vector.shape_cast %41 : vector<1x28x32xf32> to vector<28x32xf32>
    %c256 = arith.constant 256 : index
    %c0_36 = arith.constant 0 : index
    %43 = vector.load %arg2[%c256, %c0_36] : memref<480x168xf32, #tpu.memory_space<vmem>>, vector<32x168xf32>
    %cst_37 = arith.constant dense<0.000000e+00> : vector<28x168xf32>
    %44 = tpu.matmul %42, %43, %cst_37 {dimension_numbers = #tpu.dot_dimension_numbers<[1], [0], [0], [1], [0, 0, 1, 1], [], []>} : vector<28x32xf32>, vector<32x168xf32>, vector<28x168xf32> -> vector<28x168xf32>
    %45 = arith.addf %40, %44 : vector<28x168xf32>
    %c0_38 = arith.constant 0 : index
    %c36 = arith.constant 36 : index
    %c0_39 = arith.constant 0 : index
    %46 = vector.load %arg1[%c0_38, %c36, %c0_39] : memref<1x96x32xf32, #tpu.memory_space<vmem>>, vector<1x28x32xf32>
    %47 = vector.shape_cast %46 : vector<1x28x32xf32> to vector<28x32xf32>
    %c288 = arith.constant 288 : index
    %c0_40 = arith.constant 0 : index
    %48 = vector.load %arg2[%c288, %c0_40] : memref<480x168xf32, #tpu.memory_space<vmem>>, vector<32x168xf32>
    %cst_41 = arith.constant dense<0.000000e+00> : vector<28x168xf32>
    %49 = tpu.matmul %47, %48, %cst_41 {dimension_numbers = #tpu.dot_dimension_numbers<[1], [0], [0], [1], [0, 0, 1, 1], [], []>} : vector<28x32xf32>, vector<32x168xf32>, vector<28x168xf32> -> vector<28x168xf32>
    %50 = arith.addf %45, %49 : vector<28x168xf32>
    %c0_42 = arith.constant 0 : index
    %c64_43 = arith.constant 64 : index
    %c0_44 = arith.constant 0 : index
    %51 = vector.load %arg1[%c0_42, %c64_43, %c0_44] : memref<1x96x32xf32, #tpu.memory_space<vmem>>, vector<1x28x32xf32>
    %52 = vector.shape_cast %51 : vector<1x28x32xf32> to vector<28x32xf32>
    %c320 = arith.constant 320 : index
    %c0_45 = arith.constant 0 : index
    %53 = vector.load %arg2[%c320, %c0_45] : memref<480x168xf32, #tpu.memory_space<vmem>>, vector<32x168xf32>
    %cst_46 = arith.constant dense<0.000000e+00> : vector<28x168xf32>
    %54 = tpu.matmul %52, %53, %cst_46 {dimension_numbers = #tpu.dot_dimension_numbers<[1], [0], [0], [1], [0, 0, 1, 1], [], []>} : vector<28x32xf32>, vector<32x168xf32>, vector<28x168xf32> -> vector<28x168xf32>
    %55 = arith.addf %50, %54 : vector<28x168xf32>
    %c0_47 = arith.constant 0 : index
    %c65 = arith.constant 65 : index
    %c0_48 = arith.constant 0 : index
    %56 = vector.load %arg1[%c0_47, %c65, %c0_48] : memref<1x96x32xf32, #tpu.memory_space<vmem>>, vector<1x28x32xf32>
    %57 = vector.shape_cast %56 : vector<1x28x32xf32> to vector<28x32xf32>
    %c352 = arith.constant 352 : index
    %c0_49 = arith.constant 0 : index
    %58 = vector.load %arg2[%c352, %c0_49] : memref<480x168xf32, #tpu.memory_space<vmem>>, vector<32x168xf32>
    %cst_50 = arith.constant dense<0.000000e+00> : vector<28x168xf32>
    %59 = tpu.matmul %57, %58, %cst_50 {dimension_numbers = #tpu.dot_dimension_numbers<[1], [0], [0], [1], [0, 0, 1, 1], [], []>} : vector<28x32xf32>, vector<32x168xf32>, vector<28x168xf32> -> vector<28x168xf32>
    %60 = arith.addf %55, %59 : vector<28x168xf32>
    %c0_51 = arith.constant 0 : index
    %c66 = arith.constant 66 : index
    %c0_52 = arith.constant 0 : index
    %61 = vector.load %arg1[%c0_51, %c66, %c0_52] : memref<1x96x32xf32, #tpu.memory_space<vmem>>, vector<1x28x32xf32>
    %62 = vector.shape_cast %61 : vector<1x28x32xf32> to vector<28x32xf32>
    %c384 = arith.constant 384 : index
    %c0_53 = arith.constant 0 : index
    %63 = vector.load %arg2[%c384, %c0_53] : memref<480x168xf32, #tpu.memory_space<vmem>>, vector<32x168xf32>
    %cst_54 = arith.constant dense<0.000000e+00> : vector<28x168xf32>
    %64 = tpu.matmul %62, %63, %cst_54 {dimension_numbers = #tpu.dot_dimension_numbers<[1], [0], [0], [1], [0, 0, 1, 1], [], []>} : vector<28x32xf32>, vector<32x168xf32>, vector<28x168xf32> -> vector<28x168xf32>
    %65 = arith.addf %60, %64 : vector<28x168xf32>
    %c0_55 = arith.constant 0 : index
    %c67 = arith.constant 67 : index
    %c0_56 = arith.constant 0 : index
    %66 = vector.load %arg1[%c0_55, %c67, %c0_56] : memref<1x96x32xf32, #tpu.memory_space<vmem>>, vector<1x28x32xf32>
    %67 = vector.shape_cast %66 : vector<1x28x32xf32> to vector<28x32xf32>
    %c416 = arith.constant 416 : index
    %c0_57 = arith.constant 0 : index
    %68 = vector.load %arg2[%c416, %c0_57] : memref<480x168xf32, #tpu.memory_space<vmem>>, vector<32x168xf32>
    %cst_58 = arith.constant dense<0.000000e+00> : vector<28x168xf32>
    %69 = tpu.matmul %67, %68, %cst_58 {dimension_numbers = #tpu.dot_dimension_numbers<[1], [0], [0], [1], [0, 0, 1, 1], [], []>} : vector<28x32xf32>, vector<32x168xf32>, vector<28x168xf32> -> vector<28x168xf32>
    %70 = arith.addf %65, %69 : vector<28x168xf32>
    %c0_59 = arith.constant 0 : index
    %c68 = arith.constant 68 : index
    %c0_60 = arith.constant 0 : index
    %71 = vector.load %arg1[%c0_59, %c68, %c0_60] : memref<1x96x32xf32, #tpu.memory_space<vmem>>, vector<1x28x32xf32>
    %72 = vector.shape_cast %71 : vector<1x28x32xf32> to vector<28x32xf32>
    %c448 = arith.constant 448 : index
    %c0_61 = arith.constant 0 : index
    %73 = vector.load %arg2[%c448, %c0_61] : memref<480x168xf32, #tpu.memory_space<vmem>>, vector<32x168xf32>
    %cst_62 = arith.constant dense<0.000000e+00> : vector<28x168xf32>
    %74 = tpu.matmul %72, %73, %cst_62 {dimension_numbers = #tpu.dot_dimension_numbers<[1], [0], [0], [1], [0, 0, 1, 1], [], []>} : vector<28x32xf32>, vector<32x168xf32>, vector<28x168xf32> -> vector<28x168xf32>
    %75 = arith.addf %70, %74 : vector<28x168xf32>
    %c0_63 = arith.constant 0 : index
    %c0_64 = arith.constant 0 : index
    %76 = vector.load %arg3[%c0_63, %c0_64] : memref<1x168xf32, #tpu.memory_space<vmem>>, vector<1x168xf32>
    %77 = vector.broadcast %76 : vector<1x168xf32> to vector<28x168xf32>
    %78 = arith.addf %75, %77 : vector<28x168xf32>
    %cst_65 = arith.constant 0.000000e+00 : f32
    %79 = vector.broadcast %cst_65 : f32 to vector<28x168xf32>
    %80 = arith.maximumf %78, %79 : vector<28x168xf32>
    %c0_66 = arith.constant 0 : index
    %c0_67 = arith.constant 0 : index
    %c0_68 = arith.constant 0 : index
    %81 = vector.load %arg4[%c0_66, %c0_67, %c0_68] : memref<2x14x28xf32, #tpu.memory_space<vmem>>, vector<1x14x28xf32>
    %82 = vector.shape_cast %81 : vector<1x14x28xf32> to vector<14x28xf32>
    %cst_69 = arith.constant dense<0.000000e+00> : vector<14x168xf32>
    %83 = tpu.matmul %82, %80, %cst_69 {dimension_numbers = #tpu.dot_dimension_numbers<[1], [0], [0], [1], [0, 0, 1, 1], [], []>} : vector<14x28xf32>, vector<28x168xf32>, vector<14x168xf32> -> vector<14x168xf32>
    %c1_70 = arith.constant 1 : index
    %c0_71 = arith.constant 0 : index
    %c0_72 = arith.constant 0 : index
    %84 = vector.load %arg4[%c1_70, %c0_71, %c0_72] : memref<2x14x28xf32, #tpu.memory_space<vmem>>, vector<1x14x28xf32>
    %85 = vector.shape_cast %84 : vector<1x14x28xf32> to vector<14x28xf32>
    %cst_73 = arith.constant dense<0.000000e+00> : vector<14x168xf32>
    %86 = tpu.matmul %85, %80, %cst_73 {dimension_numbers = #tpu.dot_dimension_numbers<[1], [0], [0], [1], [0, 0, 1, 1], [], []>} : vector<14x28xf32>, vector<28x168xf32>, vector<14x168xf32> -> vector<14x168xf32>
    %87 = arith.maximumf %83, %86 : vector<14x168xf32>
    %c0_74 = arith.constant 0 : index
    %c0_75 = arith.constant 0 : index
    %c0_76 = arith.constant 0 : index
    %88 = vector.load %arg5[%c0_74, %c0_75, %c0_76] : memref<2x168x84xf32, #tpu.memory_space<vmem>>, vector<1x168x84xf32>
    %89 = vector.shape_cast %88 : vector<1x168x84xf32> to vector<168x84xf32>
    %cst_77 = arith.constant dense<0.000000e+00> : vector<14x84xf32>
    %90 = tpu.matmul %87, %89, %cst_77 {dimension_numbers = #tpu.dot_dimension_numbers<[1], [0], [0], [1], [0, 0, 1, 1], [], []>} : vector<14x168xf32>, vector<168x84xf32>, vector<14x84xf32> -> vector<14x84xf32>
    %c1_78 = arith.constant 1 : index
    %c0_79 = arith.constant 0 : index
    %c0_80 = arith.constant 0 : index
    %91 = vector.load %arg5[%c1_78, %c0_79, %c0_80] : memref<2x168x84xf32, #tpu.memory_space<vmem>>, vector<1x168x84xf32>
    %92 = vector.shape_cast %91 : vector<1x168x84xf32> to vector<168x84xf32>
    %cst_81 = arith.constant dense<0.000000e+00> : vector<14x84xf32>
    %93 = tpu.matmul %87, %92, %cst_81 {dimension_numbers = #tpu.dot_dimension_numbers<[1], [0], [0], [1], [0, 0, 1, 1], [], []>} : vector<14x168xf32>, vector<168x84xf32>, vector<14x84xf32> -> vector<14x84xf32>
    %94 = arith.maximumf %90, %93 : vector<14x84xf32>
    %cst_82 = arith.constant 0.000000e+00 : f32
    %95 = vector.broadcast %cst_82 : f32 to vector<10x160xf32>
    %96 = vector.extract_strided_slice %94 {offsets = [0, 0], sizes = [10, 84], strides = [1, 1]} : vector<14x84xf32> to vector<10x84xf32>
    %c0_83 = arith.constant 0 : index
    %c0_84 = arith.constant 0 : index
    %97 = vector.load %arg6[%c0_83, %c0_84] : memref<420x160xf32, #tpu.memory_space<vmem>>, vector<84x160xf32>
    %cst_85 = arith.constant dense<0.000000e+00> : vector<10x160xf32>
    %98 = tpu.matmul %96, %97, %cst_85 {dimension_numbers = #tpu.dot_dimension_numbers<[1], [0], [0], [1], [0, 0, 1, 1], [], []>} : vector<10x84xf32>, vector<84x160xf32>, vector<10x160xf32> -> vector<10x160xf32>
    %99 = arith.addf %95, %98 : vector<10x160xf32>
    %100 = vector.extract_strided_slice %94 {offsets = [1, 0], sizes = [10, 84], strides = [1, 1]} : vector<14x84xf32> to vector<10x84xf32>
    %c84 = arith.constant 84 : index
    %c0_86 = arith.constant 0 : index
    %101 = vector.load %arg6[%c84, %c0_86] : memref<420x160xf32, #tpu.memory_space<vmem>>, vector<84x160xf32>
    %cst_87 = arith.constant dense<0.000000e+00> : vector<10x160xf32>
    %102 = tpu.matmul %100, %101, %cst_87 {dimension_numbers = #tpu.dot_dimension_numbers<[1], [0], [0], [1], [0, 0, 1, 1], [], []>} : vector<10x84xf32>, vector<84x160xf32>, vector<10x160xf32> -> vector<10x160xf32>
    %103 = arith.addf %99, %102 : vector<10x160xf32>
    %104 = vector.extract_strided_slice %94 {offsets = [2, 0], sizes = [10, 84], strides = [1, 1]} : vector<14x84xf32> to vector<10x84xf32>
    %c168 = arith.constant 168 : index
    %c0_88 = arith.constant 0 : index
    %105 = vector.load %arg6[%c168, %c0_88] : memref<420x160xf32, #tpu.memory_space<vmem>>, vector<84x160xf32>
    %cst_89 = arith.constant dense<0.000000e+00> : vector<10x160xf32>
    %106 = tpu.matmul %104, %105, %cst_89 {dimension_numbers = #tpu.dot_dimension_numbers<[1], [0], [0], [1], [0, 0, 1, 1], [], []>} : vector<10x84xf32>, vector<84x160xf32>, vector<10x160xf32> -> vector<10x160xf32>
    %107 = arith.addf %103, %106 : vector<10x160xf32>
    %108 = vector.extract_strided_slice %94 {offsets = [3, 0], sizes = [10, 84], strides = [1, 1]} : vector<14x84xf32> to vector<10x84xf32>
    %c252 = arith.constant 252 : index
    %c0_90 = arith.constant 0 : index
    %109 = vector.load %arg6[%c252, %c0_90] : memref<420x160xf32, #tpu.memory_space<vmem>>, vector<84x160xf32>
    %cst_91 = arith.constant dense<0.000000e+00> : vector<10x160xf32>
    %110 = tpu.matmul %108, %109, %cst_91 {dimension_numbers = #tpu.dot_dimension_numbers<[1], [0], [0], [1], [0, 0, 1, 1], [], []>} : vector<10x84xf32>, vector<84x160xf32>, vector<10x160xf32> -> vector<10x160xf32>
    %111 = arith.addf %107, %110 : vector<10x160xf32>
    %112 = vector.extract_strided_slice %94 {offsets = [4, 0], sizes = [10, 84], strides = [1, 1]} : vector<14x84xf32> to vector<10x84xf32>
    %c336 = arith.constant 336 : index
    %c0_92 = arith.constant 0 : index
    %113 = vector.load %arg6[%c336, %c0_92] : memref<420x160xf32, #tpu.memory_space<vmem>>, vector<84x160xf32>
    %cst_93 = arith.constant dense<0.000000e+00> : vector<10x160xf32>
    %114 = tpu.matmul %112, %113, %cst_93 {dimension_numbers = #tpu.dot_dimension_numbers<[1], [0], [0], [1], [0, 0, 1, 1], [], []>} : vector<10x84xf32>, vector<84x160xf32>, vector<10x160xf32> -> vector<10x160xf32>
    %115 = arith.addf %111, %114 : vector<10x160xf32>
    %c0_94 = arith.constant 0 : index
    %c0_95 = arith.constant 0 : index
    %116 = vector.load %arg7[%c0_94, %c0_95] : memref<1x160xf32, #tpu.memory_space<vmem>>, vector<1x160xf32>
    %117 = vector.broadcast %116 : vector<1x160xf32> to vector<10x160xf32>
    %118 = arith.addf %115, %117 : vector<10x160xf32>
    %cst_96 = arith.constant 0.000000e+00 : f32
    %119 = vector.broadcast %cst_96 : f32 to vector<10x160xf32>
    %120 = arith.maximumf %118, %119 : vector<10x160xf32>
    %c0_97 = arith.constant 0 : index
    %c0_98 = arith.constant 0 : index
    %c0_99 = arith.constant 0 : index
    %121 = vector.load %arg8[%c0_97, %c0_98, %c0_99] : memref<2x5x10xf32, #tpu.memory_space<vmem>>, vector<1x5x10xf32>
    %122 = vector.shape_cast %121 : vector<1x5x10xf32> to vector<5x10xf32>
    %cst_100 = arith.constant dense<0.000000e+00> : vector<5x160xf32>
    %123 = tpu.matmul %122, %120, %cst_100 {dimension_numbers = #tpu.dot_dimension_numbers<[1], [0], [0], [1], [0, 0, 1, 1], [], []>} : vector<5x10xf32>, vector<10x160xf32>, vector<5x160xf32> -> vector<5x160xf32>
    %c1_101 = arith.constant 1 : index
    %c0_102 = arith.constant 0 : index
    %c0_103 = arith.constant 0 : index
    %124 = vector.load %arg8[%c1_101, %c0_102, %c0_103] : memref<2x5x10xf32, #tpu.memory_space<vmem>>, vector<1x5x10xf32>
    %125 = vector.shape_cast %124 : vector<1x5x10xf32> to vector<5x10xf32>
    %cst_104 = arith.constant dense<0.000000e+00> : vector<5x160xf32>
    %126 = tpu.matmul %125, %120, %cst_104 {dimension_numbers = #tpu.dot_dimension_numbers<[1], [0], [0], [1], [0, 0, 1, 1], [], []>} : vector<5x10xf32>, vector<10x160xf32>, vector<5x160xf32> -> vector<5x160xf32>
    %127 = arith.maximumf %123, %126 : vector<5x160xf32>
    %c0_105 = arith.constant 0 : index
    %c0_106 = arith.constant 0 : index
    %c0_107 = arith.constant 0 : index
    %128 = vector.load %arg9[%c0_105, %c0_106, %c0_107] : memref<2x160x80xf32, #tpu.memory_space<vmem>>, vector<1x160x80xf32>
    %129 = vector.shape_cast %128 : vector<1x160x80xf32> to vector<160x80xf32>
    %cst_108 = arith.constant dense<0.000000e+00> : vector<5x80xf32>
    %130 = tpu.matmul %127, %129, %cst_108 {dimension_numbers = #tpu.dot_dimension_numbers<[1], [0], [0], [1], [0, 0, 1, 1], [], []>} : vector<5x160xf32>, vector<160x80xf32>, vector<5x80xf32> -> vector<5x80xf32>
    %c1_109 = arith.constant 1 : index
    %c0_110 = arith.constant 0 : index
    %c0_111 = arith.constant 0 : index
    %131 = vector.load %arg9[%c1_109, %c0_110, %c0_111] : memref<2x160x80xf32, #tpu.memory_space<vmem>>, vector<1x160x80xf32>
    %132 = vector.shape_cast %131 : vector<1x160x80xf32> to vector<160x80xf32>
    %cst_112 = arith.constant dense<0.000000e+00> : vector<5x80xf32>
    %133 = tpu.matmul %127, %132, %cst_112 {dimension_numbers = #tpu.dot_dimension_numbers<[1], [0], [0], [1], [0, 0, 1, 1], [], []>} : vector<5x160xf32>, vector<160x80xf32>, vector<5x80xf32> -> vector<5x80xf32>
    %134 = arith.maximumf %130, %133 : vector<5x80xf32>
    %c0_113 = arith.constant 0 : index
    %c0_114 = arith.constant 0 : index
    %135 = vector.load %arg11[%c0_113, %c0_114] : memref<1x120xf32, #tpu.memory_space<vmem>>, vector<1x120xf32>
    %136 = vector.extract_strided_slice %134 {offsets = [0, 0], sizes = [1, 80], strides = [1, 1]} : vector<5x80xf32> to vector<1x80xf32>
    %c0_115 = arith.constant 0 : index
    %c0_116 = arith.constant 0 : index
    %137 = vector.load %arg10[%c0_115, %c0_116] : memref<400x120xf32, #tpu.memory_space<vmem>>, vector<80x120xf32>
    %cst_117 = arith.constant dense<0.000000e+00> : vector<1x120xf32>
    %138 = tpu.matmul %136, %137, %cst_117 {dimension_numbers = #tpu.dot_dimension_numbers<[1], [0], [0], [1], [0, 0, 1, 1], [], []>} : vector<1x80xf32>, vector<80x120xf32>, vector<1x120xf32> -> vector<1x120xf32>
    %139 = arith.addf %135, %138 : vector<1x120xf32>
    %140 = vector.extract_strided_slice %134 {offsets = [1, 0], sizes = [1, 80], strides = [1, 1]} : vector<5x80xf32> to vector<1x80xf32>
    %c80 = arith.constant 80 : index
    %c0_118 = arith.constant 0 : index
    %141 = vector.load %arg10[%c80, %c0_118] : memref<400x120xf32, #tpu.memory_space<vmem>>, vector<80x120xf32>
    %cst_119 = arith.constant dense<0.000000e+00> : vector<1x120xf32>
    %142 = tpu.matmul %140, %141, %cst_119 {dimension_numbers = #tpu.dot_dimension_numbers<[1], [0], [0], [1], [0, 0, 1, 1], [], []>} : vector<1x80xf32>, vector<80x120xf32>, vector<1x120xf32> -> vector<1x120xf32>
    %143 = arith.addf %139, %142 : vector<1x120xf32>
    %144 = vector.extract_strided_slice %134 {offsets = [2, 0], sizes = [1, 80], strides = [1, 1]} : vector<5x80xf32> to vector<1x80xf32>
    %c160_120 = arith.constant 160 : index
    %c0_121 = arith.constant 0 : index
    %145 = vector.load %arg10[%c160_120, %c0_121] : memref<400x120xf32, #tpu.memory_space<vmem>>, vector<80x120xf32>
    %cst_122 = arith.constant dense<0.000000e+00> : vector<1x120xf32>
    %146 = tpu.matmul %144, %145, %cst_122 {dimension_numbers = #tpu.dot_dimension_numbers<[1], [0], [0], [1], [0, 0, 1, 1], [], []>} : vector<1x80xf32>, vector<80x120xf32>, vector<1x120xf32> -> vector<1x120xf32>
    %147 = arith.addf %143, %146 : vector<1x120xf32>
    %148 = vector.extract_strided_slice %134 {offsets = [3, 0], sizes = [1, 80], strides = [1, 1]} : vector<5x80xf32> to vector<1x80xf32>
    %c240 = arith.constant 240 : index
    %c0_123 = arith.constant 0 : index
    %149 = vector.load %arg10[%c240, %c0_123] : memref<400x120xf32, #tpu.memory_space<vmem>>, vector<80x120xf32>
    %cst_124 = arith.constant dense<0.000000e+00> : vector<1x120xf32>
    %150 = tpu.matmul %148, %149, %cst_124 {dimension_numbers = #tpu.dot_dimension_numbers<[1], [0], [0], [1], [0, 0, 1, 1], [], []>} : vector<1x80xf32>, vector<80x120xf32>, vector<1x120xf32> -> vector<1x120xf32>
    %151 = arith.addf %147, %150 : vector<1x120xf32>
    %152 = vector.extract_strided_slice %134 {offsets = [4, 0], sizes = [1, 80], strides = [1, 1]} : vector<5x80xf32> to vector<1x80xf32>
    %c320_125 = arith.constant 320 : index
    %c0_126 = arith.constant 0 : index
    %153 = vector.load %arg10[%c320_125, %c0_126] : memref<400x120xf32, #tpu.memory_space<vmem>>, vector<80x120xf32>
    %cst_127 = arith.constant dense<0.000000e+00> : vector<1x120xf32>
    %154 = tpu.matmul %152, %153, %cst_127 {dimension_numbers = #tpu.dot_dimension_numbers<[1], [0], [0], [1], [0, 0, 1, 1], [], []>} : vector<1x80xf32>, vector<80x120xf32>, vector<1x120xf32> -> vector<1x120xf32>
    %155 = arith.addf %151, %154 : vector<1x120xf32>
    %cst_128 = arith.constant 0.000000e+00 : f32
    %156 = vector.broadcast %cst_128 : f32 to vector<1x120xf32>
    %157 = arith.maximumf %155, %156 : vector<1x120xf32>
    %c0_129 = arith.constant 0 : index
    %c0_130 = arith.constant 0 : index
    %158 = vector.load %arg12[%c0_129, %c0_130] : memref<120x84xf32, #tpu.memory_space<vmem>>, vector<120x84xf32>
    %cst_131 = arith.constant dense<0.000000e+00> : vector<1x84xf32>
    %159 = tpu.matmul %157, %158, %cst_131 {dimension_numbers = #tpu.dot_dimension_numbers<[1], [0], [0], [1], [0, 0, 1, 1], [], []>} : vector<1x120xf32>, vector<120x84xf32>, vector<1x84xf32> -> vector<1x84xf32>
    %c0_132 = arith.constant 0 : index
    %c0_133 = arith.constant 0 : index
    %160 = vector.load %arg13[%c0_132, %c0_133] : memref<1x84xf32, #tpu.memory_space<vmem>>, vector<1x84xf32>
    %161 = arith.addf %159, %160 : vector<1x84xf32>
    %cst_134 = arith.constant 0.000000e+00 : f32
    %162 = vector.broadcast %cst_134 : f32 to vector<1x84xf32>
    %163 = arith.maximumf %161, %162 : vector<1x84xf32>
    %c0_135 = arith.constant 0 : index
    %c0_136 = arith.constant 0 : index
    %164 = vector.load %arg14[%c0_135, %c0_136] : memref<84x10xf32, #tpu.memory_space<vmem>>, vector<84x10xf32>
    %cst_137 = arith.constant dense<0.000000e+00> : vector<1x10xf32>
    %165 = tpu.matmul %163, %164, %cst_137 {dimension_numbers = #tpu.dot_dimension_numbers<[1], [0], [0], [1], [0, 0, 1, 1], [], []>} : vector<1x84xf32>, vector<84x10xf32>, vector<1x10xf32> -> vector<1x10xf32>
    %c0_138 = arith.constant 0 : index
    %c0_139 = arith.constant 0 : index
    %166 = vector.load %arg15[%c0_138, %c0_139] : memref<1x10xf32, #tpu.memory_space<vmem>>, vector<1x10xf32>
    %167 = arith.addf %165, %166 : vector<1x10xf32>
    %c0_140 = arith.constant 0 : index
    %c0_141 = arith.constant 0 : index
    %c0_142 = arith.constant 0 : index
    %168 = vector.load %arg16[%c0_140, %c0_141, %c0_142] : memref<1x1x10xf32, #tpu.memory_space<vmem>>, vector<1x1x10xf32>
    %169 = vector.shape_cast %168 : vector<1x1x10xf32> to vector<1x10xf32>
    %170 = vector.shape_cast %167 : vector<1x10xf32> to vector<1x1x10xf32>
    tpu.vector_store %arg16[%c0_140, %c0_141, %c0_142], %170 {strides = array<i32>} : memref<1x1x10xf32, #tpu.memory_space<vmem>>, vector<1x1x10xf32>,
    return
  }
  func.func @transform_0(%arg0: i32) -> (i32, i32, i32) {
    %c0_i32 = arith.constant 0 : i32
    %c0_i32_0 = arith.constant 0 : i32
    %c0_i32_1 = arith.constant 0 : i32
    return %arg0, %c0_i32, %c0_i32_0 : i32, i32, i32
  }
  func.func @transform_1(%arg0: i32) -> (i32, i32) {
    %c0_i32 = arith.constant 0 : i32
    %c0_i32_0 = arith.constant 0 : i32
    %c0_i32_1 = arith.constant 0 : i32
    return %c0_i32, %c0_i32_0 : i32, i32
  }
  func.func @transform_2(%arg0: i32) -> (i32, i32) {
    %c0_i32 = arith.constant 0 : i32
    %c0_i32_0 = arith.constant 0 : i32
    %c0_i32_1 = arith.constant 0 : i32
    return %c0_i32, %c0_i32_0 : i32, i32
  }
  func.func @transform_3(%arg0: i32) -> (i32, i32, i32) {
    %c0_i32 = arith.constant 0 : i32
    %c0_i32_0 = arith.constant 0 : i32
    %c0_i32_1 = arith.constant 0 : i32
    %c0_i32_2 = arith.constant 0 : i32
    return %c0_i32, %c0_i32_0, %c0_i32_1 : i32, i32, i32
  }
  func.func @transform_4(%arg0: i32) -> (i32, i32, i32) {
    %c0_i32 = arith.constant 0 : i32
    %c0_i32_0 = arith.constant 0 : i32
    %c0_i32_1 = arith.constant 0 : i32
    %c0_i32_2 = arith.constant 0 : i32
    return %c0_i32, %c0_i32_0, %c0_i32_1 : i32, i32, i32
  }
  func.func @transform_5(%arg0: i32) -> (i32, i32) {
    %c0_i32 = arith.constant 0 : i32
    %c0_i32_0 = arith.constant 0 : i32
    %c0_i32_1 = arith.constant 0 : i32
    return %c0_i32, %c0_i32_0 : i32, i32
  }
  func.func @transform_6(%arg0: i32) -> (i32, i32) {
    %c0_i32 = arith.constant 0 : i32
    %c0_i32_0 = arith.constant 0 : i32
    %c0_i32_1 = arith.constant 0 : i32
    return %c0_i32, %c0_i32_0 : i32, i32
  }
  func.func @transform_7(%arg0: i32) -> (i32, i32, i32) {
    %c0_i32 = arith.constant 0 : i32
    %c0_i32_0 = arith.constant 0 : i32
    %c0_i32_1 = arith.constant 0 : i32
    %c0_i32_2 = arith.constant 0 : i32
    return %c0_i32, %c0_i32_0, %c0_i32_1 : i32, i32, i32
  }
  func.func @transform_8(%arg0: i32) -> (i32, i32, i32) {
    %c0_i32 = arith.constant 0 : i32
    %c0_i32_0 = arith.constant 0 : i32
    %c0_i32_1 = arith.constant 0 : i32
    %c0_i32_2 = arith.constant 0 : i32
    return %c0_i32, %c0_i32_0, %c0_i32_1 : i32, i32, i32
  }
  func.func @transform_9(%arg0: i32) -> (i32, i32) {
    %c0_i32 = arith.constant 0 : i32
    %c0_i32_0 = arith.constant 0 : i32
    %c0_i32_1 = arith.constant 0 : i32
    return %c0_i32, %c0_i32_0 : i32, i32
  }
  func.func @transform_10(%arg0: i32) -> (i32, i32) {
    %c0_i32 = arith.constant 0 : i32
    %c0_i32_0 = arith.constant 0 : i32
    %c0_i32_1 = arith.constant 0 : i32
    return %c0_i32, %c0_i32_0 : i32, i32
  }
  func.func @transform_11(%arg0: i32) -> (i32, i32) {
    %c0_i32 = arith.constant 0 : i32
    %c0_i32_0 = arith.constant 0 : i32
    %c0_i32_1 = arith.constant 0 : i32
    return %c0_i32, %c0_i32_0 : i32, i32
  }
  func.func @transform_12(%arg0: i32) -> (i32, i32) {
    %c0_i32 = arith.constant 0 : i32
    %c0_i32_0 = arith.constant 0 : i32
    %c0_i32_1 = arith.constant 0 : i32
    return %c0_i32, %c0_i32_0 : i32, i32
  }
  func.func @transform_13(%arg0: i32) -> (i32, i32) {
    %c0_i32 = arith.constant 0 : i32
    %c0_i32_0 = arith.constant 0 : i32
    %c0_i32_1 = arith.constant 0 : i32
    return %c0_i32, %c0_i32_0 : i32, i32
  }
  func.func @transform_14(%arg0: i32) -> (i32, i32) {
    %c0_i32 = arith.constant 0 : i32
    %c0_i32_0 = arith.constant 0 : i32
    %c0_i32_1 = arith.constant 0 : i32
    return %c0_i32, %c0_i32_0 : i32, i32
  }
  func.func @transform_15(%arg0: i32) -> (i32, i32, i32) {
    %c0_i32 = arith.constant 0 : i32
    %c0_i32_0 = arith.constant 0 : i32
    %c0_i32_1 = arith.constant 0 : i32
    return %arg0, %c0_i32, %c0_i32_0 : i32, i32, i32
  }
}

</mosaic_0001>

<llo_original>
// kernel: net_forward.1
$region0: #{net_forward.1}
  #allocation0 [shape = 'u32[]', space=smem, size = 0x4, offset = 0x4, fixed_abs, tag = 'smem constant byte address 0x4 - core index']
  #allocation1 [shape = 'u32[144,128]{1,0:T(1,128)}', space=vmem, size = 0x12000, scoped, tag = 'internal scratch']
  %s0 = inlined_call_operand.vmem [shape: f32[2,96,32], index: 0, kind: input, shape index: {}]
  %s1 = inlined_call_operand.vmem [shape: f32[480,168], index: 1, kind: input, shape index: {}]
  %s2 = inlined_call_operand.vmem [shape: f32[1,168], index: 2, kind: input, shape index: {}]
  %s3 = inlined_call_operand.vmem [shape: f32[2,14,28], index: 3, kind: input, shape index: {}]
  %s4 = inlined_call_operand.vmem [shape: f32[2,168,84], index: 4, kind: input, shape index: {}]
  %s5 = inlined_call_operand.vmem [shape: f32[420,160], index: 5, kind: input, shape index: {}]
  %s6 = inlined_call_operand.vmem [shape: f32[1,160], index: 6, kind: input, shape index: {}]
  %s7 = inlined_call_operand.vmem [shape: f32[2,5,10], index: 7, kind: input, shape index: {}]
  %s8 = inlined_call_operand.vmem [shape: f32[2,160,80], index: 8, kind: input, shape index: {}]
  %s9 = inlined_call_operand.vmem [shape: f32[400,120], index: 9, kind: input, shape index: {}]
  %s10 = inlined_call_operand.vmem [shape: f32[1,120], index: 10, kind: input, shape index: {}]
  %s11 = inlined_call_operand.vmem [shape: f32[120,84], index: 11, kind: input, shape index: {}]
  %s12 = inlined_call_operand.vmem [shape: f32[1,84], index: 12, kind: input, shape index: {}]
  %s13 = inlined_call_operand.vmem [shape: f32[84,10], index: 13, kind: input, shape index: {}]
  %s14 = inlined_call_operand.vmem [shape: f32[1,10], index: 14, kind: input, shape index: {}]
  %s15 = inlined_call_operand.hbm [shape: f32[2,1,10], index: 15, kind: output, shape index: {}]
  %s16 = sld [smem:[#allocation0]]
  $region93: #{net_forward.1} parent=0
    _
  %s18 = ssub.s32 1, %s16
  %s19 = scalar_select 0, %s18, %s16
  $region1: #{net_forward.1} parent=0
    #allocation2 [shape = 'u8[1024]{0}', space=vmem, size = 0x400, scoped, tag = 'output window, operand 0']
    #allocation3 [shape = 's32[2]{0}', space=sflag, size = 0x8, scoped, tag = 'scoped memory for net_forward.1']
    %20 = vsyncpa [#allocation3], 0
    %s21 = scalar_lea.sflag [#allocation3], 1
    %22 = vsyncpa %s21, 0
    loop: start=0, step=1, limit=4
    $region2: #{net_forward.1} parent=1 // loop_pre_header
      _
    $region3: #{net_forward.1} parent=1 // loop_header
      %s24 = sphi 0, %s28
      %p25 = scmp.ge.s32.totalorder %s24, 4
      %s34 = sphi 0, %s36
      %s37 = sphi 0, %s34
      %s38 = sphi 0, %s37
      %s54 = sphi 0, %s38
      %s58 = sphi 0, %s58
      %s60 = sphi 0, %s58
      %s61 = sphi 0, %s60
      %s75 = sphi 0, %s61
      %s79 = sphi 0, %s79
      %s81 = sphi 0, %s79
      %s82 = sphi 0, %s81
      %s96 = sphi 0, %s82
      %s100 = sphi 0, %s100
      %s102 = sphi 0, %s100
      %s103 = sphi 0, %s102
      %s117 = sphi 0, %s103
      %s121 = sphi 0, %s121
      %s123 = sphi 0, %s121
      %s124 = sphi 0, %s123
      %s138 = sphi 0, %s124
      %s142 = sphi 0, %s142
      %s144 = sphi 0, %s142
      %s145 = sphi 0, %s144
      %s159 = sphi 0, %s145
      %s163 = sphi 0, %s163
      %s165 = sphi 0, %s163
      %s166 = sphi 0, %s165
      %s180 = sphi 0, %s166
      %s184 = sphi 0, %s184
      %s186 = sphi 0, %s184
      %s187 = sphi 0, %s186
      %s201 = sphi 0, %s187
      %s205 = sphi 0, %s205
      %s207 = sphi 0, %s205
      %s208 = sphi 0, %s207
      %s222 = sphi 0, %s208
      %s226 = sphi 0, %s226
      %s228 = sphi 0, %s226
      %s229 = sphi 0, %s228
      %s243 = sphi 0, %s229
      %s247 = sphi 0, %s247
      %s249 = sphi 0, %s247
      %s250 = sphi 0, %s249
      %s264 = sphi 0, %s250
      %s268 = sphi 0, %s268
      %s270 = sphi 0, %s268
      %s271 = sphi 0, %s270
      %s285 = sphi 0, %s271
      %s289 = sphi 0, %s289
      %s291 = sphi 0, %s289
      %s292 = sphi 0, %s291
      %s306 = sphi 0, %s292
      %s310 = sphi 0, %s310
      %s312 = sphi 0, %s310
      %s313 = sphi 0, %s312
      %s327 = sphi 0, %s313
      %s331 = sphi 0, %s331
      %s333 = sphi 0, %s331
      %s334 = sphi 0, %s333
      %s348 = sphi 0, %s334
      %s354 = sphi 0, %s356
      %s357 = sphi 0, %s354
      %s358 = sphi 0, %s357
      %s374 = sphi 0, %s358
    $region4: #{net_forward.1} parent=1 // loop_header_branch
      %27 = sbr.rel (%p25) target = $region8
    $region5: #{net_forward.1} parent=1 // loop_body
      %s29 = ssub.s32 %s24, 1
      %s30 = ssub.s32 %s24, 2
      %s31 = sadd.s32 %s24, 1
      %s32 = ssub.s32 %s24, %s31
      %p33 = scmp.eq.s32.totalorder %s32, 0
      %s35 = sadd.s32 %s34, 1
      %s36 = scalar_select %p33, %s34, %s35
      %p39 = pneg %p33
      %p40 = scmp.eq.s32.totalorder %s24, 1
      %p41 = por %p39, %p40
      %p42 = scmp.ne.s32.totalorder %s34, %s37
      %p43 = scmp.eq.s32.totalorder %s24, 0
      %p44 = por %p42, %p43
      %p45 = scmp.ne.s32.totalorder %s34, %s37
      %p46 = scmp.eq.s32.totalorder %s29, 1
      %p47 = por %p45, %p46
      %p48 = scmp.ne.s32.totalorder %s37, %s38
      %p49 = scmp.eq.s32.totalorder %s29, 0
      %p50 = por %p48, %p49
      %p51 = scmp.ne.s32.totalorder %s37, %s38
      %p52 = scmp.eq.s32.totalorder %s30, 1
      %p53 = por %p51, %p52
      %p55 = scmp.ne.s32.totalorder %s38, %s54
      %p56 = scmp.eq.s32.totalorder %s30, 0
      %p57 = por %p55, %p56
      %s59 = sadd.s32 %s58, 1
      %p62 = scmp.eq.s32.totalorder %s24, 1
      %p63 = scmp.ne.s32.totalorder %s58, %s60
      %p64 = scmp.eq.s32.totalorder %s24, 0
      %p65 = por %p63, %p64
      %p66 = scmp.ne.s32.totalorder %s58, %s60
      %p67 = scmp.eq.s32.totalorder %s29, 1
      %p68 = por %p66, %p67
      %p69 = scmp.ne.s32.totalorder %s60, %s61
      %p70 = scmp.eq.s32.totalorder %s29, 0
      %p71 = por %p69, %p70
      %p72 = scmp.ne.s32.totalorder %s60, %s61
      %p73 = scmp.eq.s32.totalorder %s30, 1
      %p74 = por %p72, %p73
      %p76 = scmp.ne.s32.totalorder %s61, %s75
      %p77 = scmp.eq.s32.totalorder %s30, 0
      %p78 = por %p76, %p77
      %s80 = sadd.s32 %s79, 1
      %p83 = scmp.eq.s32.totalorder %s24, 1
      %p84 = scmp.ne.s32.totalorder %s79, %s81
      %p85 = scmp.eq.s32.totalorder %s24, 0
      %p86 = por %p84, %p85
      %p87 = scmp.ne.s32.totalorder %s79, %s81
      %p88 = scmp.eq.s32.totalorder %s29, 1
      %p89 = por %p87, %p88
      %p90 = scmp.ne.s32.totalorder %s81, %s82
      %p91 = scmp.eq.s32.totalorder %s29, 0
      %p92 = por %p90, %p91
      %p93 = scmp.ne.s32.totalorder %s81, %s82
      %p94 = scmp.eq.s32.totalorder %s30, 1
      %p95 = por %p93, %p94
      %p97 = scmp.ne.s32.totalorder %s82, %s96
      %p98 = scmp.eq.s32.totalorder %s30, 0
      %p99 = por %p97, %p98
      %s101 = sadd.s32 %s100, 1
      %p104 = scmp.eq.s32.totalorder %s24, 1
      %p105 = scmp.ne.s32.totalorder %s100, %s102
      %p106 = scmp.eq.s32.totalorder %s24, 0
      %p107 = por %p105, %p106
      %p108 = scmp.ne.s32.totalorder %s100, %s102
      %p109 = scmp.eq.s32.totalorder %s29, 1
      %p110 = por %p108, %p109
      %p111 = scmp.ne.s32.totalorder %s102, %s103
      %p112 = scmp.eq.s32.totalorder %s29, 0
      %p113 = por %p111, %p112
      %p114 = scmp.ne.s32.totalorder %s102, %s103
      %p115 = scmp.eq.s32.totalorder %s30, 1
      %p116 = por %p114, %p115
      %p118 = scmp.ne.s32.totalorder %s103, %s117
      %p119 = scmp.eq.s32.totalorder %s30, 0
      %p120 = por %p118, %p119
      %s122 = sadd.s32 %s121, 1
      %p125 = scmp.eq.s32.totalorder %s24, 1
      %p126 = scmp.ne.s32.totalorder %s121, %s123
      %p127 = scmp.eq.s32.totalorder %s24, 0
      %p128 = por %p126, %p127
      %p129 = scmp.ne.s32.totalorder %s121, %s123
      %p130 = scmp.eq.s32.totalorder %s29, 1
      %p131 = por %p129, %p130
      %p132 = scmp.ne.s32.totalorder %s123, %s124
      %p133 = scmp.eq.s32.totalorder %s29, 0
      %p134 = por %p132, %p133
      %p135 = scmp.ne.s32.totalorder %s123, %s124
      %p136 = scmp.eq.s32.totalorder %s30, 1
      %p137 = por %p135, %p136
      %p139 = scmp.ne.s32.totalorder %s124, %s138
      %p140 = scmp.eq.s32.totalorder %s30, 0
      %p141 = por %p139, %p140
      %s143 = sadd.s32 %s142, 1
      %p146 = scmp.eq.s32.totalorder %s24, 1
      %p147 = scmp.ne.s32.totalorder %s142, %s144
      %p148 = scmp.eq.s32.totalorder %s24, 0
      %p149 = por %p147, %p148
      %p150 = scmp.ne.s32.totalorder %s142, %s144
      %p151 = scmp.eq.s32.totalorder %s29, 1
      %p152 = por %p150, %p151
      %p153 = scmp.ne.s32.totalorder %s144, %s145
      %p154 = scmp.eq.s32.totalorder %s29, 0
      %p155 = por %p153, %p154
      %p156 = scmp.ne.s32.totalorder %s144, %s145
      %p157 = scmp.eq.s32.totalorder %s30, 1
      %p158 = por %p156, %p157
      %p160 = scmp.ne.s32.totalorder %s145, %s159
      %p161 = scmp.eq.s32.totalorder %s30, 0
      %p162 = por %p160, %p161
      %s164 = sadd.s32 %s163, 1
      %p167 = scmp.eq.s32.totalorder %s24, 1
      %p168 = scmp.ne.s32.totalorder %s163, %s165
      %p169 = scmp.eq.s32.totalorder %s24, 0
      %p170 = por %p168, %p169
      %p171 = scmp.ne.s32.totalorder %s163, %s165
      %p172 = scmp.eq.s32.totalorder %s29, 1
      %p173 = por %p171, %p172
      %p174 = scmp.ne.s32.totalorder %s165, %s166
      %p175 = scmp.eq.s32.totalorder %s29, 0
      %p176 = por %p174, %p175
      %p177 = scmp.ne.s32.totalorder %s165, %s166
      %p178 = scmp.eq.s32.totalorder %s30, 1
      %p179 = por %p177, %p178
      %p181 = scmp.ne.s32.totalorder %s166, %s180
      %p182 = scmp.eq.s32.totalorder %s30, 0
      %p183 = por %p181, %p182
      %s185 = sadd.s32 %s184, 1
      %p188 = scmp.eq.s32.totalorder %s24, 1
      %p189 = scmp.ne.s32.totalorder %s184, %s186
      %p190 = scmp.eq.s32.totalorder %s24, 0
      %p191 = por %p189, %p190
      %p192 = scmp.ne.s32.totalorder %s184, %s186
      %p193 = scmp.eq.s32.totalorder %s29, 1
      %p194 = por %p192, %p193
      %p195 = scmp.ne.s32.totalorder %s186, %s187
      %p196 = scmp.eq.s32.totalorder %s29, 0
      %p197 = por %p195, %p196
      %p198 = scmp.ne.s32.totalorder %s186, %s187
      %p199 = scmp.eq.s32.totalorder %s30, 1
      %p200 = por %p198, %p199
      %p202 = scmp.ne.s32.totalorder %s187, %s201
      %p203 = scmp.eq.s32.totalorder %s30, 0
      %p204 = por %p202, %p203
      %s206 = sadd.s32 %s205, 1
      %p209 = scmp.eq.s32.totalorder %s24, 1
      %p210 = scmp.ne.s32.totalorder %s205, %s207
      %p211 = scmp.eq.s32.totalorder %s24, 0
      %p212 = por %p210, %p211
      %p213 = scmp.ne.s32.totalorder %s205, %s207
      %p214 = scmp.eq.s32.totalorder %s29, 1
      %p215 = por %p213, %p214
      %p216 = scmp.ne.s32.totalorder %s207, %s208
      %p217 = scmp.eq.s32.totalorder %s29, 0
      %p218 = por %p216, %p217
      %p219 = scmp.ne.s32.totalorder %s207, %s208
      %p220 = scmp.eq.s32.totalorder %s30, 1
      %p221 = por %p219, %p220
      %p223 = scmp.ne.s32.totalorder %s208, %s222
      %p224 = scmp.eq.s32.totalorder %s30, 0
      %p225 = por %p223, %p224
      %s227 = sadd.s32 %s226, 1
      %p230 = scmp.eq.s32.totalorder %s24, 1
      %p231 = scmp.ne.s32.totalorder %s226, %s228
      %p232 = scmp.eq.s32.totalorder %s24, 0
      %p233 = por %p231, %p232
      %p234 = scmp.ne.s32.totalorder %s226, %s228
      %p235 = scmp.eq.s32.totalorder %s29, 1
      %p236 = por %p234, %p235
      %p237 = scmp.ne.s32.totalorder %s228, %s229
      %p238 = scmp.eq.s32.totalorder %s29, 0
      %p239 = por %p237, %p238
      %p240 = scmp.ne.s32.totalorder %s228, %s229
      %p241 = scmp.eq.s32.totalorder %s30, 1
      %p242 = por %p240, %p241
      %p244 = scmp.ne.s32.totalorder %s229, %s243
      %p245 = scmp.eq.s32.totalorder %s30, 0
      %p246 = por %p244, %p245
      %s248 = sadd.s32 %s247, 1
      %p251 = scmp.eq.s32.totalorder %s24, 1
      %p252 = scmp.ne.s32.totalorder %s247, %s249
      %p253 = scmp.eq.s32.totalorder %s24, 0
      %p254 = por %p252, %p253
      %p255 = scmp.ne.s32.totalorder %s247, %s249
      %p256 = scmp.eq.s32.totalorder %s29, 1
      %p257 = por %p255, %p256
      %p258 = scmp.ne.s32.totalorder %s249, %s250
      %p259 = scmp.eq.s32.totalorder %s29, 0
      %p260 = por %p258, %p259
      %p261 = scmp.ne.s32.totalorder %s249, %s250
      %p262 = scmp.eq.s32.totalorder %s30, 1
      %p263 = por %p261, %p262
      %p265 = scmp.ne.s32.totalorder %s250, %s264
      %p266 = scmp.eq.s32.totalorder %s30, 0
      %p267 = por %p265, %p266
      %s269 = sadd.s32 %s268, 1
      %p272 = scmp.eq.s32.totalorder %s24, 1
      %p273 = scmp.ne.s32.totalorder %s268, %s270
      %p274 = scmp.eq.s32.totalorder %s24, 0
      %p275 = por %p273, %p274
      %p276 = scmp.ne.s32.totalorder %s268, %s270
      %p277 = scmp.eq.s32.totalorder %s29, 1
      %p278 = por %p276, %p277
      %p279 = scmp.ne.s32.totalorder %s270, %s271
      %p280 = scmp.eq.s32.totalorder %s29, 0
      %p281 = por %p279, %p280
      %p282 = scmp.ne.s32.totalorder %s270, %s271
      %p283 = scmp.eq.s32.totalorder %s30, 1
      %p284 = por %p282, %p283
      %p286 = scmp.ne.s32.totalorder %s271, %s285
      %p287 = scmp.eq.s32.totalorder %s30, 0
      %p288 = por %p286, %p287
      %s290 = sadd.s32 %s289, 1
      %p293 = scmp.eq.s32.totalorder %s24, 1
      %p294 = scmp.ne.s32.totalorder %s289, %s291
      %p295 = scmp.eq.s32.totalorder %s24, 0
      %p296 = por %p294, %p295
      %p297 = scmp.ne.s32.totalorder %s289, %s291
      %p298 = scmp.eq.s32.totalorder %s29, 1
      %p299 = por %p297, %p298
      %p300 = scmp.ne.s32.totalorder %s291, %s292
      %p301 = scmp.eq.s32.totalorder %s29, 0
      %p302 = por %p300, %p301
      %p303 = scmp.ne.s32.totalorder %s291, %s292
      %p304 = scmp.eq.s32.totalorder %s30, 1
      %p305 = por %p303, %p304
      %p307 = scmp.ne.s32.totalorder %s292, %s306
      %p308 = scmp.eq.s32.totalorder %s30, 0
      %p309 = por %p307, %p308
      %s311 = sadd.s32 %s310, 1
      %p314 = scmp.eq.s32.totalorder %s24, 1
      %p315 = scmp.ne.s32.totalorder %s310, %s312
      %p316 = scmp.eq.s32.totalorder %s24, 0
      %p317 = por %p315, %p316
      %p318 = scmp.ne.s32.totalorder %s310, %s312
      %p319 = scmp.eq.s32.totalorder %s29, 1
      %p320 = por %p318, %p319
      %p321 = scmp.ne.s32.totalorder %s312, %s313
      %p322 = scmp.eq.s32.totalorder %s29, 0
      %p323 = por %p321, %p322
      %p324 = scmp.ne.s32.totalorder %s312, %s313
      %p325 = scmp.eq.s32.totalorder %s30, 1
      %p326 = por %p324, %p325
      %p328 = scmp.ne.s32.totalorder %s313, %s327
      %p329 = scmp.eq.s32.totalorder %s30, 0
      %p330 = por %p328, %p329
      %s332 = sadd.s32 %s331, 1
      %p335 = scmp.eq.s32.totalorder %s24, 1
      %p336 = scmp.ne.s32.totalorder %s331, %s333
      %p337 = scmp.eq.s32.totalorder %s24, 0
      %p338 = por %p336, %p337
      %p339 = scmp.ne.s32.totalorder %s331, %s333
      %p340 = scmp.eq.s32.totalorder %s29, 1
      %p341 = por %p339, %p340
      %p342 = scmp.ne.s32.totalorder %s333, %s334
      %p343 = scmp.eq.s32.totalorder %s29, 0
      %p344 = por %p342, %p343
      %p345 = scmp.ne.s32.totalorder %s333, %s334
      %p346 = scmp.eq.s32.totalorder %s30, 1
      %p347 = por %p345, %p346
      %p349 = scmp.ne.s32.totalorder %s334, %s348
      %p350 = scmp.eq.s32.totalorder %s30, 0
      %p351 = por %p349, %p350
      %s352 = ssub.s32 %s24, %s31
      %p353 = scmp.eq.s32.totalorder %s352, 0
      %s355 = sadd.s32 %s354, 1
      %s356 = scalar_select %p353, %s354, %s355
      %p359 = pneg %p353
      %p360 = scmp.eq.s32.totalorder %s24, 1
      %p361 = por %p359, %p360
      %p362 = scmp.ne.s32.totalorder %s354, %s357
      %p363 = scmp.eq.s32.totalorder %s24, 0
      %p364 = por %p362, %p363
      %p365 = scmp.ne.s32.totalorder %s354, %s357
      %p366 = scmp.eq.s32.totalorder %s29, 1
      %p367 = por %p365, %p366
      %p368 = scmp.ne.s32.totalorder %s357, %s358
      %p369 = scmp.eq.s32.totalorder %s29, 0
      %p370 = por %p368, %p369
      %p371 = scmp.ne.s32.totalorder %s357, %s358
      %p372 = scmp.eq.s32.totalorder %s30, 1
      %p373 = por %p371, %p372
      %p375 = scmp.ne.s32.totalorder %s358, %s374
      %p376 = scmp.eq.s32.totalorder %s30, 0
      %p377 = por %p375, %p376
      %p378 = scmp.le.s32.totalorder 1, %s24
      %p379 = scmp.lt.s32.totalorder %s24, 3
      %p380 = pnand %p378, %p379
      %p381 = pneg %p380
      // Predicated region
      $region9: #{net_forward.1} parent=5 // pred_check
        _
      $region10: #{net_forward.1} parent=5 // pred_check_branch
        %383 = sbr.rel (%p380) target = $region12
      $region11: #{net_forward.1} parent=5 // pred_region
        %s384 = ssub.s32 %s24, 1
        // Predicated region
        $region13: #{net_forward.1} parent=11 // pred_check
          %p385 = pneg %p71
        $region14: #{net_forward.1} parent=11 // pred_check_branch
          %387 = sbr.rel (%p385) target = $region16
        $region15: #{net_forward.1} parent=11 // pred_region
          _
        $region16: #{net_forward.1} parent=11 // pred_fallthru
          _
        // Predicated region
        $region17: #{net_forward.1} parent=11 // pred_check
          %p388 = pneg %p92
        $region18: #{net_forward.1} parent=11 // pred_check_branch
          %390 = sbr.rel (%p388) target = $region20
        $region19: #{net_forward.1} parent=11 // pred_region
          _
        $region20: #{net_forward.1} parent=11 // pred_fallthru
          _
        // Predicated region
        $region21: #{net_forward.1} parent=11 // pred_check
          %p391 = pneg %p113
        $region22: #{net_forward.1} parent=11 // pred_check_branch
          %393 = sbr.rel (%p391) target = $region24
        $region23: #{net_forward.1} parent=11 // pred_region
          _
        $region24: #{net_forward.1} parent=11 // pred_fallthru
          _
        // Predicated region
        $region25: #{net_forward.1} parent=11 // pred_check
          %p394 = pneg %p134
        $region26: #{net_forward.1} parent=11 // pred_check_branch
          %396 = sbr.rel (%p394) target = $region28
        $region27: #{net_forward.1} parent=11 // pred_region
          _
        $region28: #{net_forward.1} parent=11 // pred_fallthru
          _
        // Predicated region
        $region29: #{net_forward.1} parent=11 // pred_check
          %p397 = pneg %p155
        $region30: #{net_forward.1} parent=11 // pred_check_branch
          %399 = sbr.rel (%p397) target = $region32
        $region31: #{net_forward.1} parent=11 // pred_region
          _
        $region32: #{net_forward.1} parent=11 // pred_fallthru
          _
        // Predicated region
        $region33: #{net_forward.1} parent=11 // pred_check
          %p400 = pneg %p176
        $region34: #{net_forward.1} parent=11 // pred_check_branch
          %402 = sbr.rel (%p400) target = $region36
        $region35: #{net_forward.1} parent=11 // pred_region
          _
        $region36: #{net_forward.1} parent=11 // pred_fallthru
          _
        // Predicated region
        $region37: #{net_forward.1} parent=11 // pred_check
          %p403 = pneg %p197
        $region38: #{net_forward.1} parent=11 // pred_check_branch
          %405 = sbr.rel (%p403) target = $region40
        $region39: #{net_forward.1} parent=11 // pred_region
          _
        $region40: #{net_forward.1} parent=11 // pred_fallthru
          _
        // Predicated region
        $region41: #{net_forward.1} parent=11 // pred_check
          %p406 = pneg %p218
        $region42: #{net_forward.1} parent=11 // pred_check_branch
          %408 = sbr.rel (%p406) target = $region44
        $region43: #{net_forward.1} parent=11 // pred_region
          _
        $region44: #{net_forward.1} parent=11 // pred_fallthru
          _
        // Predicated region
        $region45: #{net_forward.1} parent=11 // pred_check
          %p409 = pneg %p239
        $region46: #{net_forward.1} parent=11 // pred_check_branch
          %411 = sbr.rel (%p409) target = $region48
        $region47: #{net_forward.1} parent=11 // pred_region
          _
        $region48: #{net_forward.1} parent=11 // pred_fallthru
          _
        // Predicated region
        $region49: #{net_forward.1} parent=11 // pred_check
          %p412 = pneg %p260
        $region50: #{net_forward.1} parent=11 // pred_check_branch
          %414 = sbr.rel (%p412) target = $region52
        $region51: #{net_forward.1} parent=11 // pred_region
          _
        $region52: #{net_forward.1} parent=11 // pred_fallthru
          _
        // Predicated region
        $region53: #{net_forward.1} parent=11 // pred_check
          %p415 = pneg %p281
        $region54: #{net_forward.1} parent=11 // pred_check_branch
          %417 = sbr.rel (%p415) target = $region56
        $region55: #{net_forward.1} parent=11 // pred_region
          _
        $region56: #{net_forward.1} parent=11 // pred_fallthru
          _
        // Predicated region
        $region57: #{net_forward.1} parent=11 // pred_check
          %p418 = pneg %p302
        $region58: #{net_forward.1} parent=11 // pred_check_branch
          %420 = sbr.rel (%p418) target = $region60
        $region59: #{net_forward.1} parent=11 // pred_region
          _
        $region60: #{net_forward.1} parent=11 // pred_fallthru
          _
        // Predicated region
        $region61: #{net_forward.1} parent=11 // pred_check
          %p421 = pneg %p323
        $region62: #{net_forward.1} parent=11 // pred_check_branch
          %423 = sbr.rel (%p421) target = $region64
        $region63: #{net_forward.1} parent=11 // pred_region
          _
        $region64: #{net_forward.1} parent=11 // pred_fallthru
          _
        // Predicated region
        $region65: #{net_forward.1} parent=11 // pred_check
          %p424 = pneg %p344
        $region66: #{net_forward.1} parent=11 // pred_check_branch
          %426 = sbr.rel (%p424) target = $region68
        $region67: #{net_forward.1} parent=11 // pred_region
          _
        $region68: #{net_forward.1} parent=11 // pred_fallthru
          _
      $region12: #{net_forward.1} parent=5 // pred_fallthru
        _
      %p427 = scmp.lt.s32.totalorder %s24, 2
      // Predicated region
      $region69: #{net_forward.1} parent=5 // pred_check
        %p428 = pneg %p427
      $region70: #{net_forward.1} parent=5 // pred_check_branch
        %430 = sbr.rel (%p428) target = $region72
      $region71: #{net_forward.1} parent=5 // pred_region
        // Predicated region
        $region73: #{net_forward.1} parent=71 // pred_check
          %p431 = pneg %p44
        $region74: #{net_forward.1} parent=71 // pred_check_branch
          %433 = sbr.rel (%p431) target = $region76
        $region75: #{net_forward.1} parent=71 // pred_region
          %p434 = scmp.lt.s32.totalorder %s24, 1
          %s435 = scalar_select %p434, %s24, 1
          %s436 = smul.addr %s435, 12
          %s437 = smul.addr %s436, 8
          %s438 = scalar_lea.vmem %s0, %s437
        $region76: #{net_forward.1} parent=71 // pred_fallthru
          _
      $region72: #{net_forward.1} parent=5 // pred_fallthru
        _
      %p439 = scmp.le.s32.totalorder 1, %s24
      %p440 = scmp.lt.s32.totalorder %s24, 3
      %p441 = pnand %p439, %p440
      %p442 = pneg %p441
      // Predicated region
      $region77: #{net_forward.1} parent=5 // pred_check
        _
      $region78: #{net_forward.1} parent=5 // pred_check_branch
        %444 = sbr.rel (%p441) target = $region80
      $region79: #{net_forward.1} parent=5 // pred_region
        %s445 = ssub.s32 %s24, 1
        %p446 = scmp.lt.s32.totalorder %s29, 1
        %s447 = scalar_select %p446, %s29, 1
        %s448 = smul.addr %s447, 12
        %s449 = smul.addr %s448, 8
        %s450 = scalar_lea.vmem %s0, %s449
        %p451 = pneg %p50
        %p452 = pneg %p47
        %p453 = pneg %p71
        %p454 = pneg %p68
        %p455 = pneg %p92
        %p456 = pneg %p89
        %p457 = pneg %p113
        %p458 = pneg %p110
        %p459 = pneg %p134
        %p460 = pneg %p131
        %p461 = pneg %p155
        %p462 = pneg %p152
        %p463 = pneg %p176
        %p464 = pneg %p173
        %p465 = pneg %p197
        %p466 = pneg %p194
        %p467 = pneg %p218
        %p468 = pneg %p215
        %p469 = pneg %p239
        %p470 = pneg %p236
        %p471 = pneg %p260
        %p472 = pneg %p257
        %p473 = pneg %p281
        %p474 = pneg %p278
        %p475 = pneg %p302
        %p476 = pneg %p299
        %p477 = pneg %p323
        %p478 = pneg %p320
        %p479 = pneg %p344
        %p480 = pneg %p341
        %p481 = pneg %p370
        %p482 = pneg %p367
        %s483 = sand.u32 %s357, 1
        %s484 = scalar_lea.sflag [#allocation3], %s483
        %s485 = sand.u32 %s357, 1
        %s486 = scalar_lea.vmem [#allocation2], %s485
        %p487 = scmp.lt.s32.totalorder %s29, 1
        %s488 = scalar_select %p487, %s29, 1
        %s489 = smul.addr %s488, 12
        %s490 = smul.addr %s489, 8
        %s491 = scalar_lea.vmem %s0, %s490
        %v492 = vld [vmem:[%s491] sm:$0xff]
        %v493 = vld [vmem:[%s491 + $0x8] sm:$0xff]
        %v494 = vld [vmem:[%s491 + $0x10] sm:$0xff]
        %v495 = vld [vmem:[%s491 + $0x18] sm:$0xf]
        %v496 = vld [vmem:[%s1] sm:$0xff]
        %v497 = vld [vmem:[%s1 + $0x8] sm:$0xff]
        %v498 = vld [vmem:[%s1 + $0x10] sm:$0xff]
        %v499 = vld [vmem:[%s1 + $0x18] sm:$0xff]
        %v500 = vld [vmem:[%s1 + $0x20] sm:$0xff]
        %v501 = vld [vmem:[%s1 + $0x28] sm:$0xff]
        %v502 = vld [vmem:[%s1 + $0x30] sm:$0xff]
        %v503 = vld [vmem:[%s1 + $0x38] sm:$0xff]
        %v504 = vld [vmem:[%s491 + $0x1] sm:$0xff]
        %v505 = vld [vmem:[%s491 + $0x9] sm:$0xff]
        %v506 = vld [vmem:[%s491 + $0x11] sm:$0xff]
        %v507 = vld [vmem:[%s491 + $0x19] sm:$0xf]
        %v508 = vld [vmem:[%s1 + $0x40] sm:$0xff]
        %v509 = vld [vmem:[%s1 + $0x48] sm:$0xff]
        %v510 = vld [vmem:[%s1 + $0x50] sm:$0xff]
        %v511 = vld [vmem:[%s1 + $0x58] sm:$0xff]
        %v512 = vld [vmem:[%s1 + $0x60] sm:$0xff]
        %v513 = vld [vmem:[%s1 + $0x68] sm:$0xff]
        %v514 = vld [vmem:[%s1 + $0x70] sm:$0xff]
        %v515 = vld [vmem:[%s1 + $0x78] sm:$0xff]
        %vm516 = vcmask 261120
        %v518 = vsel %vm516, %v504, 0
        %v521 = vsel %vm516, %v505, 0
        %v524 = vsel %vm516, %v506, 0
        %v527 = vsel %vm516, %v507, 0
        %529 = vmatprep.subr.mxu0 %v509
        %530 = vmatpush1.msra.mxu0 %v508
        %531 = vmatprep.subr.mxu0 %v511
        %532 = vmatpush1.msra.mxu0 %v510
        %533 = vmatprep.subr.mxu0 %v513
        %534 = vmatpush1.msra.mxu0 %v512
        %535 = vmatprep.subr.mxu0 %v515
        %536 = vmatpush1.msra.mxu0 %v514
        %537 = vmatprep.subr.mxu0 0.0
        %538 = vmatpush1.msra.mxu0 0.0
        %539 = vmatprep.subr.mxu0 0.0
        %540 = vmatpush1.msra.mxu0 0.0
        %541 = vmatprep.subr.mxu0 0.0
        %542 = vmatpush1.msra.mxu0 0.0
        %543 = vmatprep.subr.mxu0 0.0
        %544 = vmatpush1.msra.mxu0 0.0
        %545 = vmatprep.subr.mxu0 0.0
        %546 = vmatpush1.msra.mxu0 0.0
        %547 = vmatprep.subr.mxu0 0.0
        %548 = vmatpush1.msra.mxu0 0.0
        %549 = vmatprep.subr.mxu0 0.0
        %550 = vmatpush1.msra.mxu0 0.0
        %551 = vmatprep.subr.mxu0 0.0
        %552 = vmatpush1.msra.mxu0 0.0
        %553 = vmatprep.subr.mxu0 0.0
        %554 = vmatpush1.msra.mxu0 0.0
        %555 = vmatprep.subr.mxu0 0.0
        %556 = vmatpush1.msra.mxu0 0.0
        %557 = vmatprep.subr.mxu0 0.0
        %558 = vmatpush1.msra.mxu0 0.0
        %559 = vmatprep.subr.mxu0 0.0
        %560 = vmatpush1.msra.mxu0 0.0
        %561 = vmatprep.subr.mxu0 0.0
        %562 = vmatpush1.msra.mxu0 0.0
        %563 = vmatprep.subr.mxu0 0.0
        %564 = vmatpush1.msra.mxu0 0.0
        %565 = vmatprep.subr.mxu0 0.0
        %566 = vmatpush1.msra.mxu0 0.0
        %567 = vmatprep.subr.mxu0 0.0
        %568 = vmatpush1.msra.mxu0 0.0
        %569 = vmatprep.subr.mxu0 0.0
        %570 = vmatpush1.msra.mxu0 0.0
        %571 = vmatprep.subr.mxu0 0.0
        %572 = vmatpush1.msra.mxu0 0.0
        %573 = vmatprep.subr.mxu0 0.0
        %574 = vmatpush1.msra.mxu0 0.0
        %575 = vmatprep.subr.mxu0 0.0
        %576 = vmatpush1.msra.mxu0 0.0
        %577 = vmatprep.subr.mxu0 0.0
        %578 = vmatpush1.msra.mxu0 0.0
        %579 = vmatprep.subr.mxu0 0.0
        %580 = vmatpush1.msra.mxu0 0.0
        %581 = vmatprep.subr.mxu0 0.0
        %582 = vmatpush1.msra.mxu0 0.0
        %583 = vmatprep.subr.mxu0 0.0
        %584 = vmatpush1.msra.mxu0 0.0
        %585 = vmatprep.subr.mxu0 0.0
        %586 = vmatpush1.msra.mxu0 0.0
        %587 = vmatprep.subr.mxu0 0.0
        %588 = vmatpush1.msra.mxu0 0.0
        %589 = vmatprep.subr.mxu0 0.0
        %590 = vmatpush1.msra.mxu0 0.0
        %591 = vmatprep.subr.mxu0 0.0
        %592 = vmatpush1.msra.mxu0 0.0
        %593 = vmatprep.mubr.f32.mxu0 0.0
        %594 = vmatmul.mubr.f32.gmra.mrb[0].mxu0 %v518
        %v595 = vpop.f32.mrb[0].mxu0
        %v596 = vadd.f32 0.0, %v595
        %v597 = vpop.f32.mrb[0].mxu0
        %v598 = vadd.f32 0.0, %v597
        %599 = vmatprep.mubr.f32.mxu0 0.0
        %600 = vmatmul.mubr.f32.gmra.mrb[0].mxu0 %v521
        %v601 = vpop.f32.mrb[0].mxu0
        %v602 = vadd.f32 0.0, %v601
        %v603 = vpop.f32.mrb[0].mxu0
        %v604 = vadd.f32 0.0, %v603
        %605 = vmatprep.mubr.f32.mxu0 0.0
        %606 = vmatmul.mubr.f32.gmra.mrb[0].mxu0 %v524
        %v607 = vpop.f32.mrb[0].mxu0
        %v608 = vadd.f32 0.0, %v607
        %v609 = vpop.f32.mrb[0].mxu0
        %v610 = vadd.f32 0.0, %v609
        %611 = vmatprep.mubr.f32.mxu0 0.0
        %612 = vmatmul.mubr.f32.gmra.mrb[0].mxu0 %v527
        %v613 = vpop.f32.mrb[0].mxu0
        %v614 = vadd.f32 0.0, %v613
        %v615 = vpop.f32.mrb[0].mxu0
        %v616 = vadd.f32 0.0, %v615
        %617 = vdwg.mxu0
        %v619 = vsel %vm516, %v492, 0
        %v622 = vsel %vm516, %v493, 0
        %v625 = vsel %vm516, %v494, 0
        %v628 = vsel %vm516, %v495, 0
        %630 = vmatprep.subr.mxu0 %v497
        %631 = vmatpush1.msra.mxu0 %v496
        %632 = vmatprep.subr.mxu0 %v499
        %633 = vmatpush1.msra.mxu0 %v498
        %634 = vmatprep.subr.mxu0 %v501
        %635 = vmatpush1.msra.mxu0 %v500
        %636 = vmatprep.subr.mxu0 %v503
        %637 = vmatpush1.msra.mxu0 %v502
        %638 = vmatprep.subr.mxu0 0.0
        %639 = vmatpush1.msra.mxu0 0.0
        %640 = vmatprep.subr.mxu0 0.0
        %641 = vmatpush1.msra.mxu0 0.0
        %642 = vmatprep.subr.mxu0 0.0
        %643 = vmatpush1.msra.mxu0 0.0
        %644 = vmatprep.subr.mxu0 0.0
        %645 = vmatpush1.msra.mxu0 0.0
        %646 = vmatprep.subr.mxu0 0.0
        %647 = vmatpush1.msra.mxu0 0.0
        %648 = vmatprep.subr.mxu0 0.0
        %649 = vmatpush1.msra.mxu0 0.0
        %650 = vmatprep.subr.mxu0 0.0
        %651 = vmatpush1.msra.mxu0 0.0
        %652 = vmatprep.subr.mxu0 0.0
        %653 = vmatpush1.msra.mxu0 0.0
        %654 = vmatprep.subr.mxu0 0.0
        %655 = vmatpush1.msra.mxu0 0.0
        %656 = vmatprep.subr.mxu0 0.0
        %657 = vmatpush1.msra.mxu0 0.0
        %658 = vmatprep.subr.mxu0 0.0
        %659 = vmatpush1.msra.mxu0 0.0
        %660 = vmatprep.subr.mxu0 0.0
        %661 = vmatpush1.msra.mxu0 0.0
        %662 = vmatprep.subr.mxu0 0.0
        %663 = vmatpush1.msra.mxu0 0.0
        %664 = vmatprep.subr.mxu0 0.0
        %665 = vmatpush1.msra.mxu0 0.0
        %666 = vmatprep.subr.mxu0 0.0
        %667 = vmatpush1.msra.mxu0 0.0
        %668 = vmatprep.subr.mxu0 0.0
        %669 = vmatpush1.msra.mxu0 0.0
        %670 = vmatprep.subr.mxu0 0.0
        %671 = vmatpush1.msra.mxu0 0.0
        %672 = vmatprep.subr.mxu0 0.0
        %673 = vmatpush1.msra.mxu0 0.0
        %674 = vmatprep.subr.mxu0 0.0
        %675 = vmatpush1.msra.mxu0 0.0
        %676 = vmatprep.subr.mxu0 0.0
        %677 = vmatpush1.msra.mxu0 0.0
        %678 = vmatprep.subr.mxu0 0.0
        %679 = vmatpush1.msra.mxu0 0.0
        %680 = vmatprep.subr.mxu0 0.0
        %681 = vmatpush1.msra.mxu0 0.0
        %682 = vmatprep.subr.mxu0 0.0
        %683 = vmatpush1.msra.mxu0 0.0
        %684 = vmatprep.subr.mxu0 0.0
        %685 = vmatpush1.msra.mxu0 0.0
        %686 = vmatprep.subr.mxu0 0.0
        %687 = vmatpush1.msra.mxu0 0.0
        %688 = vmatprep.subr.mxu0 0.0
        %689 = vmatpush1.msra.mxu0 0.0
        %690 = vmatprep.subr.mxu0 0.0
        %691 = vmatpush1.msra.mxu0 0.0
        %692 = vmatprep.subr.mxu0 0.0
        %693 = vmatpush1.msra.mxu0 0.0
        %694 = vmatprep.mubr.f32.mxu0 0.0
        %695 = vmatmul.mubr.f32.gmra.mrb[0].mxu0 %v619
        %v696 = vpop.f32.mrb[0].mxu0
        %v697 = vadd.f32 %v596, %v696
        %v698 = vpop.f32.mrb[0].mxu0
        %v699 = vadd.f32 %v598, %v698
        %700 = vmatprep.mubr.f32.mxu0 0.0
        %701 = vmatmul.mubr.f32.gmra.mrb[0].mxu0 %v622
        %v702 = vpop.f32.mrb[0].mxu0
        %v703 = vadd.f32 %v602, %v702
        %v704 = vpop.f32.mrb[0].mxu0
        %v705 = vadd.f32 %v604, %v704
        %706 = vmatprep.mubr.f32.mxu0 0.0
        %707 = vmatmul.mubr.f32.gmra.mrb[0].mxu0 %v625
        %v708 = vpop.f32.mrb[0].mxu0
        %v709 = vadd.f32 %v608, %v708
        %v710 = vpop.f32.mrb[0].mxu0
        %v711 = vadd.f32 %v610, %v710
        %712 = vmatprep.mubr.f32.mxu0 0.0
        %713 = vmatmul.mubr.f32.gmra.mrb[0].mxu0 %v628
        %v714 = vpop.f32.mrb[0].mxu0
        %v715 = vadd.f32 %v614, %v714
        %v716 = vpop.f32.mrb[0].mxu0
        %v717 = vadd.f32 %v616, %v716
        %718 = vdwg.mxu0
        %v719 = vld [vmem:[%s491 + $0x2] sm:$0xff]
        %v720 = vld [vmem:[%s491 + $0xa] sm:$0xff]
        %v721 = vld [vmem:[%s491 + $0x12] sm:$0xff]
        %v722 = vld [vmem:[%s491 + $0x1a] sm:$0xf]
        %v723 = vld [vmem:[%s1 + $0x80] sm:$0xff]
        %v724 = vld [vmem:[%s1 + $0x88] sm:$0xff]
        %v725 = vld [vmem:[%s1 + $0x90] sm:$0xff]
        %v726 = vld [vmem:[%s1 + $0x98] sm:$0xff]
        %v727 = vld [vmem:[%s1 + $0xa0] sm:$0xff]
        %v728 = vld [vmem:[%s1 + $0xa8] sm:$0xff]
        %v729 = vld [vmem:[%s1 + $0xb0] sm:$0xff]
        %v730 = vld [vmem:[%s1 + $0xb8] sm:$0xff]
        %v732 = vsel %vm516, %v719, 0
        %v735 = vsel %vm516, %v720, 0
        %v738 = vsel %vm516, %v721, 0
        %v741 = vsel %vm516, %v722, 0
        %743 = vmatprep.subr.mxu0 %v724
        %744 = vmatpush1.msra.mxu0 %v723
        %745 = vmatprep.subr.mxu0 %v726
        %746 = vmatpush1.msra.mxu0 %v725
        %747 = vmatprep.subr.mxu0 %v728
        %748 = vmatpush1.msra.mxu0 %v727
        %749 = vmatprep.subr.mxu0 %v730
        %750 = vmatpush1.msra.mxu0 %v729
        %751 = vmatprep.subr.mxu0 0.0
        %752 = vmatpush1.msra.mxu0 0.0
        %753 = vmatprep.subr.mxu0 0.0
        %754 = vmatpush1.msra.mxu0 0.0
        %755 = vmatprep.subr.mxu0 0.0
        %756 = vmatpush1.msra.mxu0 0.0
        %757 = vmatprep.subr.mxu0 0.0
        %758 = vmatpush1.msra.mxu0 0.0
        %759 = vmatprep.subr.mxu0 0.0
        %760 = vmatpush1.msra.mxu0 0.0
        %761 = vmatprep.subr.mxu0 0.0
        %762 = vmatpush1.msra.mxu0 0.0
        %763 = vmatprep.subr.mxu0 0.0
        %764 = vmatpush1.msra.mxu0 0.0
        %765 = vmatprep.subr.mxu0 0.0
        %766 = vmatpush1.msra.mxu0 0.0
        %767 = vmatprep.subr.mxu0 0.0
        %768 = vmatpush1.msra.mxu0 0.0
        %769 = vmatprep.subr.mxu0 0.0
        %770 = vmatpush1.msra.mxu0 0.0
        %771 = vmatprep.subr.mxu0 0.0
        %772 = vmatpush1.msra.mxu0 0.0
        %773 = vmatprep.subr.mxu0 0.0
        %774 = vmatpush1.msra.mxu0 0.0
        %775 = vmatprep.subr.mxu0 0.0
        %776 = vmatpush1.msra.mxu0 0.0
        %777 = vmatprep.subr.mxu0 0.0
        %778 = vmatpush1.msra.mxu0 0.0
        %779 = vmatprep.subr.mxu0 0.0
        %780 = vmatpush1.msra.mxu0 0.0
        %781 = vmatprep.subr.mxu0 0.0
        %782 = vmatpush1.msra.mxu0 0.0
        %783 = vmatprep.subr.mxu0 0.0
        %784 = vmatpush1.msra.mxu0 0.0
        %785 = vmatprep.subr.mxu0 0.0
        %786 = vmatpush1.msra.mxu0 0.0
        %787 = vmatprep.subr.mxu0 0.0
        %788 = vmatpush1.msra.mxu0 0.0
        %789 = vmatprep.subr.mxu0 0.0
        %790 = vmatpush1.msra.mxu0 0.0
        %791 = vmatprep.subr.mxu0 0.0
        %792 = vmatpush1.msra.mxu0 0.0
        %793 = vmatprep.subr.mxu0 0.0
        %794 = vmatpush1.msra.mxu0 0.0
        %795 = vmatprep.subr.mxu0 0.0
        %796 = vmatpush1.msra.mxu0 0.0
        %797 = vmatprep.subr.mxu0 0.0
        %798 = vmatpush1.msra.mxu0 0.0
        %799 = vmatprep.subr.mxu0 0.0
        %800 = vmatpush1.msra.mxu0 0.0
        %801 = vmatprep.subr.mxu0 0.0
        %802 = vmatpush1.msra.mxu0 0.0
        %803 = vmatprep.subr.mxu0 0.0
        %804 = vmatpush1.msra.mxu0 0.0
        %805 = vmatprep.subr.mxu0 0.0
        %806 = vmatpush1.msra.mxu0 0.0
        %807 = vmatprep.mubr.f32.mxu0 0.0
        %808 = vmatmul.mubr.f32.gmra.mrb[0].mxu0 %v732
        %v809 = vpop.f32.mrb[0].mxu0
        %v810 = vadd.f32 0.0, %v809
        %v811 = vpop.f32.mrb[0].mxu0
        %v812 = vadd.f32 0.0, %v811
        %813 = vmatprep.mubr.f32.mxu0 0.0
        %814 = vmatmul.mubr.f32.gmra.mrb[0].mxu0 %v735
        %v815 = vpop.f32.mrb[0].mxu0
        %v816 = vadd.f32 0.0, %v815
        %v817 = vpop.f32.mrb[0].mxu0
        %v818 = vadd.f32 0.0, %v817
        %819 = vmatprep.mubr.f32.mxu0 0.0
        %820 = vmatmul.mubr.f32.gmra.mrb[0].mxu0 %v738
        %v821 = vpop.f32.mrb[0].mxu0
        %v822 = vadd.f32 0.0, %v821
        %v823 = vpop.f32.mrb[0].mxu0
        %v824 = vadd.f32 0.0, %v823
        %825 = vmatprep.mubr.f32.mxu0 0.0
        %826 = vmatmul.mubr.f32.gmra.mrb[0].mxu0 %v741
        %v827 = vpop.f32.mrb[0].mxu0
        %v828 = vadd.f32 0.0, %v827
        %v829 = vpop.f32.mrb[0].mxu0
        %v830 = vadd.f32 0.0, %v829
        %831 = vdwg.mxu0
        %v832 = vadd.f32 %v697, %v810
        %v833 = vadd.f32 %v699, %v812
        %v834 = vadd.f32 %v703, %v816
        %v835 = vadd.f32 %v705, %v818
        %v836 = vadd.f32 %v709, %v822
        %v837 = vadd.f32 %v711, %v824
        %v838 = vadd.f32 %v715, %v828
        %v839 = vadd.f32 %v717, %v830
        %v840 = vld [vmem:[%s491 + $0x3] sm:$0xff]
        %v841 = vld [vmem:[%s491 + $0xb] sm:$0xff]
        %v842 = vld [vmem:[%s491 + $0x13] sm:$0xff]
        %v843 = vld [vmem:[%s491 + $0x1b] sm:$0xf]
        %v844 = vld [vmem:[%s1 + $0xc0] sm:$0xff]
        %v845 = vld [vmem:[%s1 + $0xc8] sm:$0xff]
        %v846 = vld [vmem:[%s1 + $0xd0] sm:$0xff]
        %v847 = vld [vmem:[%s1 + $0xd8] sm:$0xff]
        %v848 = vld [vmem:[%s1 + $0xe0] sm:$0xff]
        %v849 = vld [vmem:[%s1 + $0xe8] sm:$0xff]
        %v850 = vld [vmem:[%s1 + $0xf0] sm:$0xff]
        %v851 = vld [vmem:[%s1 + $0xf8] sm:$0xff]
        %v853 = vsel %vm516, %v840, 0
        %v856 = vsel %vm516, %v841, 0
        %v859 = vsel %vm516, %v842, 0
        %v862 = vsel %vm516, %v843, 0
        %864 = vmatprep.subr.mxu0 %v845
        %865 = vmatpush1.msra.mxu0 %v844
        %866 = vmatprep.subr.mxu0 %v847
        %867 = vmatpush1.msra.mxu0 %v846
        %868 = vmatprep.subr.mxu0 %v849
        %869 = vmatpush1.msra.mxu0 %v848
        %870 = vmatprep.subr.mxu0 %v851
        %871 = vmatpush1.msra.mxu0 %v850
        %872 = vmatprep.subr.mxu0 0.0
        %873 = vmatpush1.msra.mxu0 0.0
        %874 = vmatprep.subr.mxu0 0.0
        %875 = vmatpush1.msra.mxu0 0.0
        %876 = vmatprep.subr.mxu0 0.0
        %877 = vmatpush1.msra.mxu0 0.0
        %878 = vmatprep.subr.mxu0 0.0
        %879 = vmatpush1.msra.mxu0 0.0
        %880 = vmatprep.subr.mxu0 0.0
        %881 = vmatpush1.msra.mxu0 0.0
        %882 = vmatprep.subr.mxu0 0.0
        %883 = vmatpush1.msra.mxu0 0.0
        %884 = vmatprep.subr.mxu0 0.0
        %885 = vmatpush1.msra.mxu0 0.0
        %886 = vmatprep.subr.mxu0 0.0
        %887 = vmatpush1.msra.mxu0 0.0
        %888 = vmatprep.subr.mxu0 0.0
        %889 = vmatpush1.msra.mxu0 0.0
        %890 = vmatprep.subr.mxu0 0.0
        %891 = vmatpush1.msra.mxu0 0.0
        %892 = vmatprep.subr.mxu0 0.0
        %893 = vmatpush1.msra.mxu0 0.0
        %894 = vmatprep.subr.mxu0 0.0
        %895 = vmatpush1.msra.mxu0 0.0
        %896 = vmatprep.subr.mxu0 0.0
        %897 = vmatpush1.msra.mxu0 0.0
        %898 = vmatprep.subr.mxu0 0.0
        %899 = vmatpush1.msra.mxu0 0.0
        %900 = vmatprep.subr.mxu0 0.0
        %901 = vmatpush1.msra.mxu0 0.0
        %902 = vmatprep.subr.mxu0 0.0
        %903 = vmatpush1.msra.mxu0 0.0
        %904 = vmatprep.subr.mxu0 0.0
        %905 = vmatpush1.msra.mxu0 0.0
        %906 = vmatprep.subr.mxu0 0.0
        %907 = vmatpush1.msra.mxu0 0.0
        %908 = vmatprep.subr.mxu0 0.0
        %909 = vmatpush1.msra.mxu0 0.0
        %910 = vmatprep.subr.mxu0 0.0
        %911 = vmatpush1.msra.mxu0 0.0
        %912 = vmatprep.subr.mxu0 0.0
        %913 = vmatpush1.msra.mxu0 0.0
        %914 = vmatprep.subr.mxu0 0.0
        %915 = vmatpush1.msra.mxu0 0.0
        %916 = vmatprep.subr.mxu0 0.0
        %917 = vmatpush1.msra.mxu0 0.0
        %918 = vmatprep.subr.mxu0 0.0
        %919 = vmatpush1.msra.mxu0 0.0
        %920 = vmatprep.subr.mxu0 0.0
        %921 = vmatpush1.msra.mxu0 0.0
        %922 = vmatprep.subr.mxu0 0.0
        %923 = vmatpush1.msra.mxu0 0.0
        %924 = vmatprep.subr.mxu0 0.0
        %925 = vmatpush1.msra.mxu0 0.0
        %926 = vmatprep.subr.mxu0 0.0
        %927 = vmatpush1.msra.mxu0 0.0
        %928 = vmatprep.mubr.f32.mxu0 0.0
        %929 = vmatmul.mubr.f32.gmra.mrb[0].mxu0 %v853
        %v930 = vpop.f32.mrb[0].mxu0
        %v931 = vadd.f32 0.0, %v930
        %v932 = vpop.f32.mrb[0].mxu0
        %v933 = vadd.f32 0.0, %v932
        %934 = vmatprep.mubr.f32.mxu0 0.0
        %935 = vmatmul.mubr.f32.gmra.mrb[0].mxu0 %v856
        %v936 = vpop.f32.mrb[0].mxu0
        %v937 = vadd.f32 0.0, %v936
        %v938 = vpop.f32.mrb[0].mxu0
        %v939 = vadd.f32 0.0, %v938
        %940 = vmatprep.mubr.f32.mxu0 0.0
        %941 = vmatmul.mubr.f32.gmra.mrb[0].mxu0 %v859
        %v942 = vpop.f32.mrb[0].mxu0
        %v943 = vadd.f32 0.0, %v942
        %v944 = vpop.f32.mrb[0].mxu0
        %v945 = vadd.f32 0.0, %v944
        %946 = vmatprep.mubr.f32.mxu0 0.0
        %947 = vmatmul.mubr.f32.gmra.mrb[0].mxu0 %v862
        %v948 = vpop.f32.mrb[0].mxu0
        %v949 = vadd.f32 0.0, %v948
        %v950 = vpop.f32.mrb[0].mxu0
        %v951 = vadd.f32 0.0, %v950
        %952 = vdwg.mxu0
        %v953 = vadd.f32 %v832, %v931
        %v954 = vadd.f32 %v833, %v933
        %v955 = vadd.f32 %v834, %v937
        %v956 = vadd.f32 %v835, %v939
        %v957 = vadd.f32 %v836, %v943
        %v958 = vadd.f32 %v837, %v945
        %v959 = vadd.f32 %v838, %v949
        %v960 = vadd.f32 %v839, %v951
        %v961 = vld [vmem:[%s491 + $0x4] sm:$0xff]
        %v962 = vld [vmem:[%s491 + $0xc] sm:$0xff]
        %v963 = vld [vmem:[%s491 + $0x14] sm:$0xff]
        %v964 = vld [vmem:[%s491 + $0x1c] sm:$0xf]
        %v965 = vld [vmem:[%s1 + $0x100] sm:$0xff]
        %v966 = vld [vmem:[%s1 + $0x108] sm:$0xff]
        %v967 = vld [vmem:[%s1 + $0x110] sm:$0xff]
        %v968 = vld [vmem:[%s1 + $0x118] sm:$0xff]
        %v969 = vld [vmem:[%s1 + $0x120] sm:$0xff]
        %v970 = vld [vmem:[%s1 + $0x128] sm:$0xff]
        %v971 = vld [vmem:[%s1 + $0x130] sm:$0xff]
        %v972 = vld [vmem:[%s1 + $0x138] sm:$0xff]
        %v974 = vsel %vm516, %v961, 0
        %v977 = vsel %vm516, %v962, 0
        %v980 = vsel %vm516, %v963, 0
        %v983 = vsel %vm516, %v964, 0
        %985 = vmatprep.subr.mxu0 %v966
        %986 = vmatpush1.msra.mxu0 %v965
        %987 = vmatprep.subr.mxu0 %v968
        %988 = vmatpush1.msra.mxu0 %v967
        %989 = vmatprep.subr.mxu0 %v970
        %990 = vmatpush1.msra.mxu0 %v969
        %991 = vmatprep.subr.mxu0 %v972
        %992 = vmatpush1.msra.mxu0 %v971
        %993 = vmatprep.subr.mxu0 0.0
        %994 = vmatpush1.msra.mxu0 0.0
        %995 = vmatprep.subr.mxu0 0.0
        %996 = vmatpush1.msra.mxu0 0.0
        %997 = vmatprep.subr.mxu0 0.0
        %998 = vmatpush1.msra.mxu0 0.0
        %999 = vmatprep.subr.mxu0 0.0
        %1000 = vmatpush1.msra.mxu0 0.0
        %1001 = vmatprep.subr.mxu0 0.0
        %1002 = vmatpush1.msra.mxu0 0.0
        %1003 = vmatprep.subr.mxu0 0.0
        %1004 = vmatpush1.msra.mxu0 0.0
        %1005 = vmatprep.subr.mxu0 0.0
        %1006 = vmatpush1.msra.mxu0 0.0
        %1007 = vmatprep.subr.mxu0 0.0
        %1008 = vmatpush1.msra.mxu0 0.0
        %1009 = vmatprep.subr.mxu0 0.0
        %1010 = vmatpush1.msra.mxu0 0.0
        %1011 = vmatprep.subr.mxu0 0.0
        %1012 = vmatpush1.msra.mxu0 0.0
        %1013 = vmatprep.subr.mxu0 0.0
        %1014 = vmatpush1.msra.mxu0 0.0
        %1015 = vmatprep.subr.mxu0 0.0
        %1016 = vmatpush1.msra.mxu0 0.0
        %1017 = vmatprep.subr.mxu0 0.0
        %1018 = vmatpush1.msra.mxu0 0.0
        %1019 = vmatprep.subr.mxu0 0.0
        %1020 = vmatpush1.msra.mxu0 0.0
        %1021 = vmatprep.subr.mxu0 0.0
        %1022 = vmatpush1.msra.mxu0 0.0
        %1023 = vmatprep.subr.mxu0 0.0
        %1024 = vmatpush1.msra.mxu0 0.0
        %1025 = vmatprep.subr.mxu0 0.0
        %1026 = vmatpush1.msra.mxu0 0.0
        %1027 = vmatprep.subr.mxu0 0.0
        %1028 = vmatpush1.msra.mxu0 0.0
        %1029 = vmatprep.subr.mxu0 0.0
        %1030 = vmatpush1.msra.mxu0 0.0
        %1031 = vmatprep.subr.mxu0 0.0
        %1032 = vmatpush1.msra.mxu0 0.0
        %1033 = vmatprep.subr.mxu0 0.0
        %1034 = vmatpush1.msra.mxu0 0.0
        %1035 = vmatprep.subr.mxu0 0.0
        %1036 = vmatpush1.msra.mxu0 0.0
        %1037 = vmatprep.subr.mxu0 0.0
        %1038 = vmatpush1.msra.mxu0 0.0
        %1039 = vmatprep.subr.mxu0 0.0
        %1040 = vmatpush1.msra.mxu0 0.0
        %1041 = vmatprep.subr.mxu0 0.0
        %1042 = vmatpush1.msra.mxu0 0.0
        %1043 = vmatprep.subr.mxu0 0.0
        %1044 = vmatpush1.msra.mxu0 0.0
        %1045 = vmatprep.subr.mxu0 0.0
        %1046 = vmatpush1.msra.mxu0 0.0
        %1047 = vmatprep.subr.mxu0 0.0
        %1048 = vmatpush1.msra.mxu0 0.0
        %1049 = vmatprep.mubr.f32.mxu0 0.0
        %1050 = vmatmul.mubr.f32.gmra.mrb[0].mxu0 %v974
        %v1051 = vpop.f32.mrb[0].mxu0
        %v1052 = vadd.f32 0.0, %v1051
        %v1053 = vpop.f32.mrb[0].mxu0
        %v1054 = vadd.f32 0.0, %v1053
        %1055 = vmatprep.mubr.f32.mxu0 0.0
        %1056 = vmatmul.mubr.f32.gmra.mrb[0].mxu0 %v977
        %v1057 = vpop.f32.mrb[0].mxu0
        %v1058 = vadd.f32 0.0, %v1057
        %v1059 = vpop.f32.mrb[0].mxu0
        %v1060 = vadd.f32 0.0, %v1059
        %1061 = vmatprep.mubr.f32.mxu0 0.0
        %1062 = vmatmul.mubr.f32.gmra.mrb[0].mxu0 %v980
        %v1063 = vpop.f32.mrb[0].mxu0
        %v1064 = vadd.f32 0.0, %v1063
        %v1065 = vpop.f32.mrb[0].mxu0
        %v1066 = vadd.f32 0.0, %v1065
        %1067 = vmatprep.mubr.f32.mxu0 0.0
        %1068 = vmatmul.mubr.f32.gmra.mrb[0].mxu0 %v983
        %v1069 = vpop.f32.mrb[0].mxu0
        %v1070 = vadd.f32 0.0, %v1069
        %v1071 = vpop.f32.mrb[0].mxu0
        %v1072 = vadd.f32 0.0, %v1071
        %1073 = vdwg.mxu0
        %v1074 = vadd.f32 %v953, %v1052
        %v1075 = vadd.f32 %v954, %v1054
        %v1076 = vadd.f32 %v955, %v1058
        %v1077 = vadd.f32 %v956, %v1060
        %v1078 = vadd.f32 %v957, %v1064
        %v1079 = vadd.f32 %v958, %v1066
        %v1080 = vadd.f32 %v959, %v1070
        %v1081 = vadd.f32 %v960, %v1072
        %v1082 = vld [vmem:[%s491 + $0x20] sm:$0xff]
        %v1083 = vld [vmem:[%s491 + $0x28] sm:$0xff]
        %v1084 = vld [vmem:[%s491 + $0x30] sm:$0xff]
        %v1085 = vld [vmem:[%s491 + $0x38] sm:$0xf]
        %v1086 = vld [vmem:[%s1 + $0x140] sm:$0xff]
        %v1087 = vld [vmem:[%s1 + $0x148] sm:$0xff]
        %v1088 = vld [vmem:[%s1 + $0x150] sm:$0xff]
        %v1089 = vld [vmem:[%s1 + $0x158] sm:$0xff]
        %v1090 = vld [vmem:[%s1 + $0x160] sm:$0xff]
        %v1091 = vld [vmem:[%s1 + $0x168] sm:$0xff]
        %v1092 = vld [vmem:[%s1 + $0x170] sm:$0xff]
        %v1093 = vld [vmem:[%s1 + $0x178] sm:$0xff]
        %v1095 = vsel %vm516, %v1082, 0
        %v1098 = vsel %vm516, %v1083, 0
        %v1101 = vsel %vm516, %v1084, 0
        %v1104 = vsel %vm516, %v1085, 0
        %1106 = vmatprep.subr.mxu0 %v1087
        %1107 = vmatpush1.msra.mxu0 %v1086
        %1108 = vmatprep.subr.mxu0 %v1089
        %1109 = vmatpush1.msra.mxu0 %v1088
        %1110 = vmatprep.subr.mxu0 %v1091
        %1111 = vmatpush1.msra.mxu0 %v1090
        %1112 = vmatprep.subr.mxu0 %v1093
        %1113 = vmatpush1.msra.mxu0 %v1092
        %1114 = vmatprep.subr.mxu0 0.0
        %1115 = vmatpush1.msra.mxu0 0.0
        %1116 = vmatprep.subr.mxu0 0.0
        %1117 = vmatpush1.msra.mxu0 0.0
        %1118 = vmatprep.subr.mxu0 0.0
        %1119 = vmatpush1.msra.mxu0 0.0
        %1120 = vmatprep.subr.mxu0 0.0
        %1121 = vmatpush1.msra.mxu0 0.0
        %1122 = vmatprep.subr.mxu0 0.0
        %1123 = vmatpush1.msra.mxu0 0.0
        %1124 = vmatprep.subr.mxu0 0.0
        %1125 = vmatpush1.msra.mxu0 0.0
        %1126 = vmatprep.subr.mxu0 0.0
        %1127 = vmatpush1.msra.mxu0 0.0
        %1128 = vmatprep.subr.mxu0 0.0
        %1129 = vmatpush1.msra.mxu0 0.0
        %1130 = vmatprep.subr.mxu0 0.0
        %1131 = vmatpush1.msra.mxu0 0.0
        %1132 = vmatprep.subr.mxu0 0.0
        %1133 = vmatpush1.msra.mxu0 0.0
        %1134 = vmatprep.subr.mxu0 0.0
        %1135 = vmatpush1.msra.mxu0 0.0
        %1136 = vmatprep.subr.mxu0 0.0
        %1137 = vmatpush1.msra.mxu0 0.0
        %1138 = vmatprep.subr.mxu0 0.0
        %1139 = vmatpush1.msra.mxu0 0.0
        %1140 = vmatprep.subr.mxu0 0.0
        %1141 = vmatpush1.msra.mxu0 0.0
        %1142 = vmatprep.subr.mxu0 0.0
        %1143 = vmatpush1.msra.mxu0 0.0
        %1144 = vmatprep.subr.mxu0 0.0
        %1145 = vmatpush1.msra.mxu0 0.0
        %1146 = vmatprep.subr.mxu0 0.0
        %1147 = vmatpush1.msra.mxu0 0.0
        %1148 = vmatprep.subr.mxu0 0.0
        %1149 = vmatpush1.msra.mxu0 0.0
        %1150 = vmatprep.subr.mxu0 0.0
        %1151 = vmatpush1.msra.mxu0 0.0
        %1152 = vmatprep.subr.mxu0 0.0
        %1153 = vmatpush1.msra.mxu0 0.0
        %1154 = vmatprep.subr.mxu0 0.0
        %1155 = vmatpush1.msra.mxu0 0.0
        %1156 = vmatprep.subr.mxu0 0.0
        %1157 = vmatpush1.msra.mxu0 0.0
        %1158 = vmatprep.subr.mxu0 0.0
        %1159 = vmatpush1.msra.mxu0 0.0
        %1160 = vmatprep.subr.mxu0 0.0
        %1161 = vmatpush1.msra.mxu0 0.0
        %1162 = vmatprep.subr.mxu0 0.0
        %1163 = vmatpush1.msra.mxu0 0.0
        %1164 = vmatprep.subr.mxu0 0.0
        %1165 = vmatpush1.msra.mxu0 0.0
        %1166 = vmatprep.subr.mxu0 0.0
        %1167 = vmatpush1.msra.mxu0 0.0
        %1168 = vmatprep.subr.mxu0 0.0
        %1169 = vmatpush1.msra.mxu0 0.0
        %1170 = vmatprep.mubr.f32.mxu0 0.0
        %1171 = vmatmul.mubr.f32.gmra.mrb[0].mxu0 %v1095
        %v1172 = vpop.f32.mrb[0].mxu0
        %v1173 = vadd.f32 0.0, %v1172
        %v1174 = vpop.f32.mrb[0].mxu0
        %v1175 = vadd.f32 0.0, %v1174
        %1176 = vmatprep.mubr.f32.mxu0 0.0
        %1177 = vmatmul.mubr.f32.gmra.mrb[0].mxu0 %v1098
        %v1178 = vpop.f32.mrb[0].mxu0
        %v1179 = vadd.f32 0.0, %v1178
        %v1180 = vpop.f32.mrb[0].mxu0
        %v1181 = vadd.f32 0.0, %v1180
        %1182 = vmatprep.mubr.f32.mxu0 0.0
        %1183 = vmatmul.mubr.f32.gmra.mrb[0].mxu0 %v1101
        %v1184 = vpop.f32.mrb[0].mxu0
        %v1185 = vadd.f32 0.0, %v1184
        %v1186 = vpop.f32.mrb[0].mxu0
        %v1187 = vadd.f32 0.0, %v1186
        %1188 = vmatprep.mubr.f32.mxu0 0.0
        %1189 = vmatmul.mubr.f32.gmra.mrb[0].mxu0 %v1104
        %v1190 = vpop.f32.mrb[0].mxu0
        %v1191 = vadd.f32 0.0, %v1190
        %v1192 = vpop.f32.mrb[0].mxu0
        %v1193 = vadd.f32 0.0, %v1192
        %1194 = vdwg.mxu0
        %v1195 = vadd.f32 %v1074, %v1173
        %v1196 = vadd.f32 %v1075, %v1175
        %v1197 = vadd.f32 %v1076, %v1179
        %v1198 = vadd.f32 %v1077, %v1181
        %v1199 = vadd.f32 %v1078, %v1185
        %v1200 = vadd.f32 %v1079, %v1187
        %v1201 = vadd.f32 %v1080, %v1191
        %v1202 = vadd.f32 %v1081, %v1193
        %v1203 = vld [vmem:[%s491 + $0x21] sm:$0xff]
        %v1204 = vld [vmem:[%s491 + $0x29] sm:$0xff]
        %v1205 = vld [vmem:[%s491 + $0x31] sm:$0xff]
        %v1206 = vld [vmem:[%s491 + $0x39] sm:$0xf]
        %v1207 = vld [vmem:[%s1 + $0x180] sm:$0xff]
        %v1208 = vld [vmem:[%s1 + $0x188] sm:$0xff]
        %v1209 = vld [vmem:[%s1 + $0x190] sm:$0xff]
        %v1210 = vld [vmem:[%s1 + $0x198] sm:$0xff]
        %v1211 = vld [vmem:[%s1 + $0x1a0] sm:$0xff]
        %v1212 = vld [vmem:[%s1 + $0x1a8] sm:$0xff]
        %v1213 = vld [vmem:[%s1 + $0x1b0] sm:$0xff]
        %v1214 = vld [vmem:[%s1 + $0x1b8] sm:$0xff]
        %v1216 = vsel %vm516, %v1203, 0
        %v1219 = vsel %vm516, %v1204, 0
        %v1222 = vsel %vm516, %v1205, 0
        %v1225 = vsel %vm516, %v1206, 0
        %1227 = vmatprep.subr.mxu0 %v1208
        %1228 = vmatpush1.msra.mxu0 %v1207
        %1229 = vmatprep.subr.mxu0 %v1210
        %1230 = vmatpush1.msra.mxu0 %v1209
        %1231 = vmatprep.subr.mxu0 %v1212
        %1232 = vmatpush1.msra.mxu0 %v1211
        %1233 = vmatprep.subr.mxu0 %v1214
        %1234 = vmatpush1.msra.mxu0 %v1213
        %1235 = vmatprep.subr.mxu0 0.0
        %1236 = vmatpush1.msra.mxu0 0.0
        %1237 = vmatprep.subr.mxu0 0.0
        %1238 = vmatpush1.msra.mxu0 0.0
        %1239 = vmatprep.subr.mxu0 0.0
        %1240 = vmatpush1.msra.mxu0 0.0
        %1241 = vmatprep.subr.mxu0 0.0
        %1242 = vmatpush1.msra.mxu0 0.0
        %1243 = vmatprep.subr.mxu0 0.0
        %1244 = vmatpush1.msra.mxu0 0.0
        %1245 = vmatprep.subr.mxu0 0.0
        %1246 = vmatpush1.msra.mxu0 0.0
        %1247 = vmatprep.subr.mxu0 0.0
        %1248 = vmatpush1.msra.mxu0 0.0
        %1249 = vmatprep.subr.mxu0 0.0
        %1250 = vmatpush1.msra.mxu0 0.0
        %1251 = vmatprep.subr.mxu0 0.0
        %1252 = vmatpush1.msra.mxu0 0.0
        %1253 = vmatprep.subr.mxu0 0.0
        %1254 = vmatpush1.msra.mxu0 0.0
        %1255 = vmatprep.subr.mxu0 0.0
        %1256 = vmatpush1.msra.mxu0 0.0
        %1257 = vmatprep.subr.mxu0 0.0
        %1258 = vmatpush1.msra.mxu0 0.0
        %1259 = vmatprep.subr.mxu0 0.0
        %1260 = vmatpush1.msra.mxu0 0.0
        %1261 = vmatprep.subr.mxu0 0.0
        %1262 = vmatpush1.msra.mxu0 0.0
        %1263 = vmatprep.subr.mxu0 0.0
        %1264 = vmatpush1.msra.mxu0 0.0
        %1265 = vmatprep.subr.mxu0 0.0
        %1266 = vmatpush1.msra.mxu0 0.0
        %1267 = vmatprep.subr.mxu0 0.0
        %1268 = vmatpush1.msra.mxu0 0.0
        %1269 = vmatprep.subr.mxu0 0.0
        %1270 = vmatpush1.msra.mxu0 0.0
        %1271 = vmatprep.subr.mxu0 0.0
        %1272 = vmatpush1.msra.mxu0 0.0
        %1273 = vmatprep.subr.mxu0 0.0
        %1274 = vmatpush1.msra.mxu0 0.0
        %1275 = vmatprep.subr.mxu0 0.0
        %1276 = vmatpush1.msra.mxu0 0.0
        %1277 = vmatprep.subr.mxu0 0.0
        %1278 = vmatpush1.msra.mxu0 0.0
        %1279 = vmatprep.subr.mxu0 0.0
        %1280 = vmatpush1.msra.mxu0 0.0
        %1281 = vmatprep.subr.mxu0 0.0
        %1282 = vmatpush1.msra.mxu0 0.0
        %1283 = vmatprep.subr.mxu0 0.0
        %1284 = vmatpush1.msra.mxu0 0.0
        %1285 = vmatprep.subr.mxu0 0.0
        %1286 = vmatpush1.msra.mxu0 0.0
        %1287 = vmatprep.subr.mxu0 0.0
        %1288 = vmatpush1.msra.mxu0 0.0
        %1289 = vmatprep.subr.mxu0 0.0
        %1290 = vmatpush1.msra.mxu0 0.0
        %1291 = vmatprep.mubr.f32.mxu0 0.0
        %1292 = vmatmul.mubr.f32.gmra.mrb[0].mxu0 %v1216
        %v1293 = vpop.f32.mrb[0].mxu0
        %v1294 = vadd.f32 0.0, %v1293
        %v1295 = vpop.f32.mrb[0].mxu0
        %v1296 = vadd.f32 0.0, %v1295
        %1297 = vmatprep.mubr.f32.mxu0 0.0
        %1298 = vmatmul.mubr.f32.gmra.mrb[0].mxu0 %v1219
        %v1299 = vpop.f32.mrb[0].mxu0
        %v1300 = vadd.f32 0.0, %v1299
        %v1301 = vpop.f32.mrb[0].mxu0
        %v1302 = vadd.f32 0.0, %v1301
        %1303 = vmatprep.mubr.f32.mxu0 0.0
        %1304 = vmatmul.mubr.f32.gmra.mrb[0].mxu0 %v1222
        %v1305 = vpop.f32.mrb[0].mxu0
        %v1306 = vadd.f32 0.0, %v1305
        %v1307 = vpop.f32.mrb[0].mxu0
        %v1308 = vadd.f32 0.0, %v1307
        %1309 = vmatprep.mubr.f32.mxu0 0.0
        %1310 = vmatmul.mubr.f32.gmra.mrb[0].mxu0 %v1225
        %v1311 = vpop.f32.mrb[0].mxu0
        %v1312 = vadd.f32 0.0, %v1311
        %v1313 = vpop.f32.mrb[0].mxu0
        %v1314 = vadd.f32 0.0, %v1313
        %1315 = vdwg.mxu0
        %v1316 = vadd.f32 %v1195, %v1294
        %v1317 = vadd.f32 %v1196, %v1296
        %v1318 = vadd.f32 %v1197, %v1300
        %v1319 = vadd.f32 %v1198, %v1302
        %v1320 = vadd.f32 %v1199, %v1306
        %v1321 = vadd.f32 %v1200, %v1308
        %v1322 = vadd.f32 %v1201, %v1312
        %v1323 = vadd.f32 %v1202, %v1314
        %v1324 = vld [vmem:[%s491 + $0x22] sm:$0xff]
        %v1325 = vld [vmem:[%s491 + $0x2a] sm:$0xff]
        %v1326 = vld [vmem:[%s491 + $0x32] sm:$0xff]
        %v1327 = vld [vmem:[%s491 + $0x3a] sm:$0xf]
        %v1328 = vld [vmem:[%s1 + $0x1c0] sm:$0xff]
        %v1329 = vld [vmem:[%s1 + $0x1c8] sm:$0xff]
        %v1330 = vld [vmem:[%s1 + $0x1d0] sm:$0xff]
        %v1331 = vld [vmem:[%s1 + $0x1d8] sm:$0xff]
        %v1332 = vld [vmem:[%s1 + $0x1e0] sm:$0xff]
        %v1333 = vld [vmem:[%s1 + $0x1e8] sm:$0xff]
        %v1334 = vld [vmem:[%s1 + $0x1f0] sm:$0xff]
        %v1335 = vld [vmem:[%s1 + $0x1f8] sm:$0xff]
        %v1337 = vsel %vm516, %v1324, 0
        %v1340 = vsel %vm516, %v1325, 0
        %v1343 = vsel %vm516, %v1326, 0
        %v1346 = vsel %vm516, %v1327, 0
        %1348 = vmatprep.subr.mxu0 %v1329
        %1349 = vmatpush1.msra.mxu0 %v1328
        %1350 = vmatprep.subr.mxu0 %v1331
        %1351 = vmatpush1.msra.mxu0 %v1330
        %1352 = vmatprep.subr.mxu0 %v1333
        %1353 = vmatpush1.msra.mxu0 %v1332
        %1354 = vmatprep.subr.mxu0 %v1335
        %1355 = vmatpush1.msra.mxu0 %v1334
        %1356 = vmatprep.subr.mxu0 0.0
        %1357 = vmatpush1.msra.mxu0 0.0
        %1358 = vmatprep.subr.mxu0 0.0
        %1359 = vmatpush1.msra.mxu0 0.0
        %1360 = vmatprep.subr.mxu0 0.0
        %1361 = vmatpush1.msra.mxu0 0.0
        %1362 = vmatprep.subr.mxu0 0.0
        %1363 = vmatpush1.msra.mxu0 0.0
        %1364 = vmatprep.subr.mxu0 0.0
        %1365 = vmatpush1.msra.mxu0 0.0
        %1366 = vmatprep.subr.mxu0 0.0
        %1367 = vmatpush1.msra.mxu0 0.0
        %1368 = vmatprep.subr.mxu0 0.0
        %1369 = vmatpush1.msra.mxu0 0.0
        %1370 = vmatprep.subr.mxu0 0.0
        %1371 = vmatpush1.msra.mxu0 0.0
        %1372 = vmatprep.subr.mxu0 0.0
        %1373 = vmatpush1.msra.mxu0 0.0
        %1374 = vmatprep.subr.mxu0 0.0
        %1375 = vmatpush1.msra.mxu0 0.0
        %1376 = vmatprep.subr.mxu0 0.0
        %1377 = vmatpush1.msra.mxu0 0.0
        %1378 = vmatprep.subr.mxu0 0.0
        %1379 = vmatpush1.msra.mxu0 0.0
        %1380 = vmatprep.subr.mxu0 0.0
        %1381 = vmatpush1.msra.mxu0 0.0
        %1382 = vmatprep.subr.mxu0 0.0
        %1383 = vmatpush1.msra.mxu0 0.0
        %1384 = vmatprep.subr.mxu0 0.0
        %1385 = vmatpush1.msra.mxu0 0.0
        %1386 = vmatprep.subr.mxu0 0.0
        %1387 = vmatpush1.msra.mxu0 0.0
        %1388 = vmatprep.subr.mxu0 0.0
        %1389 = vmatpush1.msra.mxu0 0.0
        %1390 = vmatprep.subr.mxu0 0.0
        %1391 = vmatpush1.msra.mxu0 0.0
        %1392 = vmatprep.subr.mxu0 0.0
        %1393 = vmatpush1.msra.mxu0 0.0
        %1394 = vmatprep.subr.mxu0 0.0
        %1395 = vmatpush1.msra.mxu0 0.0
        %1396 = vmatprep.subr.mxu0 0.0
        %1397 = vmatpush1.msra.mxu0 0.0
        %1398 = vmatprep.subr.mxu0 0.0
        %1399 = vmatpush1.msra.mxu0 0.0
        %1400 = vmatprep.subr.mxu0 0.0
        %1401 = vmatpush1.msra.mxu0 0.0
        %1402 = vmatprep.subr.mxu0 0.0
        %1403 = vmatpush1.msra.mxu0 0.0
        %1404 = vmatprep.subr.mxu0 0.0
        %1405 = vmatpush1.msra.mxu0 0.0
        %1406 = vmatprep.subr.mxu0 0.0
        %1407 = vmatpush1.msra.mxu0 0.0
        %1408 = vmatprep.subr.mxu0 0.0
        %1409 = vmatpush1.msra.mxu0 0.0
        %1410 = vmatprep.subr.mxu0 0.0
        %1411 = vmatpush1.msra.mxu0 0.0
        %1412 = vmatprep.mubr.f32.mxu0 0.0
        %1413 = vmatmul.mubr.f32.gmra.mrb[0].mxu0 %v1337
        %v1414 = vpop.f32.mrb[0].mxu0
        %v1415 = vadd.f32 0.0, %v1414
        %v1416 = vpop.f32.mrb[0].mxu0
        %v1417 = vadd.f32 0.0, %v1416
        %1418 = vmatprep.mubr.f32.mxu0 0.0
        %1419 = vmatmul.mubr.f32.gmra.mrb[0].mxu0 %v1340
        %v1420 = vpop.f32.mrb[0].mxu0
        %v1421 = vadd.f32 0.0, %v1420
        %v1422 = vpop.f32.mrb[0].mxu0
        %v1423 = vadd.f32 0.0, %v1422
        %1424 = vmatprep.mubr.f32.mxu0 0.0
        %1425 = vmatmul.mubr.f32.gmra.mrb[0].mxu0 %v1343
        %v1426 = vpop.f32.mrb[0].mxu0
        %v1427 = vadd.f32 0.0, %v1426
        %v1428 = vpop.f32.mrb[0].mxu0
        %v1429 = vadd.f32 0.0, %v1428
        %1430 = vmatprep.mubr.f32.mxu0 0.0
        %1431 = vmatmul.mubr.f32.gmra.mrb[0].mxu0 %v1346
        %v1432 = vpop.f32.mrb[0].mxu0
        %v1433 = vadd.f32 0.0, %v1432
        %v1434 = vpop.f32.mrb[0].mxu0
        %v1435 = vadd.f32 0.0, %v1434
        %1436 = vdwg.mxu0
        %v1437 = vadd.f32 %v1316, %v1415
        %v1438 = vadd.f32 %v1317, %v1417
        %v1439 = vadd.f32 %v1318, %v1421
        %v1440 = vadd.f32 %v1319, %v1423
        %v1441 = vadd.f32 %v1320, %v1427
        %v1442 = vadd.f32 %v1321, %v1429
        %v1443 = vadd.f32 %v1322, %v1433
        %v1444 = vadd.f32 %v1323, %v1435
        %v1445 = vld [vmem:[%s491 + $0x23] sm:$0xff]
        %v1446 = vld [vmem:[%s491 + $0x2b] sm:$0xff]
        %v1447 = vld [vmem:[%s491 + $0x33] sm:$0xff]
        %v1448 = vld [vmem:[%s491 + $0x3b] sm:$0xf]
        %v1449 = vld [vmem:[%s1 + $0x200] sm:$0xff]
        %v1450 = vld [vmem:[%s1 + $0x208] sm:$0xff]
        %v1451 = vld [vmem:[%s1 + $0x210] sm:$0xff]
        %v1452 = vld [vmem:[%s1 + $0x218] sm:$0xff]
        %v1453 = vld [vmem:[%s1 + $0x220] sm:$0xff]
        %v1454 = vld [vmem:[%s1 + $0x228] sm:$0xff]
        %v1455 = vld [vmem:[%s1 + $0x230] sm:$0xff]
        %v1456 = vld [vmem:[%s1 + $0x238] sm:$0xff]
        %v1458 = vsel %vm516, %v1445, 0
        %v1461 = vsel %vm516, %v1446, 0
        %v1464 = vsel %vm516, %v1447, 0
        %v1467 = vsel %vm516, %v1448, 0
        %1469 = vmatprep.subr.mxu0 %v1450
        %1470 = vmatpush1.msra.mxu0 %v1449
        %1471 = vmatprep.subr.mxu0 %v1452
        %1472 = vmatpush1.msra.mxu0 %v1451
        %1473 = vmatprep.subr.mxu0 %v1454
        %1474 = vmatpush1.msra.mxu0 %v1453
        %1475 = vmatprep.subr.mxu0 %v1456
        %1476 = vmatpush1.msra.mxu0 %v1455
        %1477 = vmatprep.subr.mxu0 0.0
        %1478 = vmatpush1.msra.mxu0 0.0
        %1479 = vmatprep.subr.mxu0 0.0
        %1480 = vmatpush1.msra.mxu0 0.0
        %1481 = vmatprep.subr.mxu0 0.0
        %1482 = vmatpush1.msra.mxu0 0.0
        %1483 = vmatprep.subr.mxu0 0.0
        %1484 = vmatpush1.msra.mxu0 0.0
        %1485 = vmatprep.subr.mxu0 0.0
        %1486 = vmatpush1.msra.mxu0 0.0
        %1487 = vmatprep.subr.mxu0 0.0
        %1488 = vmatpush1.msra.mxu0 0.0
        %1489 = vmatprep.subr.mxu0 0.0
        %1490 = vmatpush1.msra.mxu0 0.0
        %1491 = vmatprep.subr.mxu0 0.0
        %1492 = vmatpush1.msra.mxu0 0.0
        %1493 = vmatprep.subr.mxu0 0.0
        %1494 = vmatpush1.msra.mxu0 0.0
        %1495 = vmatprep.subr.mxu0 0.0
        %1496 = vmatpush1.msra.mxu0 0.0
        %1497 = vmatprep.subr.mxu0 0.0
        %1498 = vmatpush1.msra.mxu0 0.0
        %1499 = vmatprep.subr.mxu0 0.0
        %1500 = vmatpush1.msra.mxu0 0.0
        %1501 = vmatprep.subr.mxu0 0.0
        %1502 = vmatpush1.msra.mxu0 0.0
        %1503 = vmatprep.subr.mxu0 0.0
        %1504 = vmatpush1.msra.mxu0 0.0
        %1505 = vmatprep.subr.mxu0 0.0
        %1506 = vmatpush1.msra.mxu0 0.0
        %1507 = vmatprep.subr.mxu0 0.0
        %1508 = vmatpush1.msra.mxu0 0.0
        %1509 = vmatprep.subr.mxu0 0.0
        %1510 = vmatpush1.msra.mxu0 0.0
        %1511 = vmatprep.subr.mxu0 0.0
        %1512 = vmatpush1.msra.mxu0 0.0
        %1513 = vmatprep.subr.mxu0 0.0
        %1514 = vmatpush1.msra.mxu0 0.0
        %1515 = vmatprep.subr.mxu0 0.0
        %1516 = vmatpush1.msra.mxu0 0.0
        %1517 = vmatprep.subr.mxu0 0.0
        %1518 = vmatpush1.msra.mxu0 0.0
        %1519 = vmatprep.subr.mxu0 0.0
        %1520 = vmatpush1.msra.mxu0 0.0
        %1521 = vmatprep.subr.mxu0 0.0
        %1522 = vmatpush1.msra.mxu0 0.0
        %1523 = vmatprep.subr.mxu0 0.0
        %1524 = vmatpush1.msra.mxu0 0.0
        %1525 = vmatprep.subr.mxu0 0.0
        %1526 = vmatpush1.msra.mxu0 0.0
        %1527 = vmatprep.subr.mxu0 0.0
        %1528 = vmatpush1.msra.mxu0 0.0
        %1529 = vmatprep.subr.mxu0 0.0
        %1530 = vmatpush1.msra.mxu0 0.0
        %1531 = vmatprep.subr.mxu0 0.0
        %1532 = vmatpush1.msra.mxu0 0.0
        %1533 = vmatprep.mubr.f32.mxu0 0.0
        %1534 = vmatmul.mubr.f32.gmra.mrb[0].mxu0 %v1458
        %v1535 = vpop.f32.mrb[0].mxu0
        %v1536 = vadd.f32 0.0, %v1535
        %v1537 = vpop.f32.mrb[0].mxu0
        %v1538 = vadd.f32 0.0, %v1537
        %1539 = vmatprep.mubr.f32.mxu0 0.0
        %1540 = vmatmul.mubr.f32.gmra.mrb[0].mxu0 %v1461
        %v1541 = vpop.f32.mrb[0].mxu0
        %v1542 = vadd.f32 0.0, %v1541
        %v1543 = vpop.f32.mrb[0].mxu0
        %v1544 = vadd.f32 0.0, %v1543
        %1545 = vmatprep.mubr.f32.mxu0 0.0
        %1546 = vmatmul.mubr.f32.gmra.mrb[0].mxu0 %v1464
        %v1547 = vpop.f32.mrb[0].mxu0
        %v1548 = vadd.f32 0.0, %v1547
        %v1549 = vpop.f32.mrb[0].mxu0
        %v1550 = vadd.f32 0.0, %v1549
        %1551 = vmatprep.mubr.f32.mxu0 0.0
        %1552 = vmatmul.mubr.f32.gmra.mrb[0].mxu0 %v1467
        %v1553 = vpop.f32.mrb[0].mxu0
        %v1554 = vadd.f32 0.0, %v1553
        %v1555 = vpop.f32.mrb[0].mxu0
        %v1556 = vadd.f32 0.0, %v1555
        %1557 = vdwg.mxu0
        %v1558 = vadd.f32 %v1437, %v1536
        %v1559 = vadd.f32 %v1438, %v1538
        %v1560 = vadd.f32 %v1439, %v1542
        %v1561 = vadd.f32 %v1440, %v1544
        %v1562 = vadd.f32 %v1441, %v1548
        %v1563 = vadd.f32 %v1442, %v1550
        %v1564 = vadd.f32 %v1443, %v1554
        %v1565 = vadd.f32 %v1444, %v1556
        %v1566 = vld [vmem:[%s491 + $0x24] sm:$0xff]
        %v1567 = vld [vmem:[%s491 + $0x2c] sm:$0xff]
        %v1568 = vld [vmem:[%s491 + $0x34] sm:$0xff]
        %v1569 = vld [vmem:[%s491 + $0x3c] sm:$0xf]
        %v1570 = vld [vmem:[%s1 + $0x240] sm:$0xff]
        %v1571 = vld [vmem:[%s1 + $0x248] sm:$0xff]
        %v1572 = vld [vmem:[%s1 + $0x250] sm:$0xff]
        %v1573 = vld [vmem:[%s1 + $0x258] sm:$0xff]
        %v1574 = vld [vmem:[%s1 + $0x260] sm:$0xff]
        %v1575 = vld [vmem:[%s1 + $0x268] sm:$0xff]
        %v1576 = vld [vmem:[%s1 + $0x270] sm:$0xff]
        %v1577 = vld [vmem:[%s1 + $0x278] sm:$0xff]
        %v1579 = vsel %vm516, %v1566, 0
        %v1582 = vsel %vm516, %v1567, 0
        %v1585 = vsel %vm516, %v1568, 0
        %v1588 = vsel %vm516, %v1569, 0
        %1590 = vmatprep.subr.mxu0 %v1571
        %1591 = vmatpush1.msra.mxu0 %v1570
        %1592 = vmatprep.subr.mxu0 %v1573
        %1593 = vmatpush1.msra.mxu0 %v1572
        %1594 = vmatprep.subr.mxu0 %v1575
        %1595 = vmatpush1.msra.mxu0 %v1574
        %1596 = vmatprep.subr.mxu0 %v1577
        %1597 = vmatpush1.msra.mxu0 %v1576
        %1598 = vmatprep.subr.mxu0 0.0
        %1599 = vmatpush1.msra.mxu0 0.0
        %1600 = vmatprep.subr.mxu0 0.0
        %1601 = vmatpush1.msra.mxu0 0.0
        %1602 = vmatprep.subr.mxu0 0.0
        %1603 = vmatpush1.msra.mxu0 0.0
        %1604 = vmatprep.subr.mxu0 0.0
        %1605 = vmatpush1.msra.mxu0 0.0
        %1606 = vmatprep.subr.mxu0 0.0
        %1607 = vmatpush1.msra.mxu0 0.0
        %1608 = vmatprep.subr.mxu0 0.0
        %1609 = vmatpush1.msra.mxu0 0.0
        %1610 = vmatprep.subr.mxu0 0.0
        %1611 = vmatpush1.msra.mxu0 0.0
        %1612 = vmatprep.subr.mxu0 0.0
        %1613 = vmatpush1.msra.mxu0 0.0
        %1614 = vmatprep.subr.mxu0 0.0
        %1615 = vmatpush1.msra.mxu0 0.0
        %1616 = vmatprep.subr.mxu0 0.0
        %1617 = vmatpush1.msra.mxu0 0.0
        %1618 = vmatprep.subr.mxu0 0.0
        %1619 = vmatpush1.msra.mxu0 0.0
        %1620 = vmatprep.subr.mxu0 0.0
        %1621 = vmatpush1.msra.mxu0 0.0
        %1622 = vmatprep.subr.mxu0 0.0
        %1623 = vmatpush1.msra.mxu0 0.0
        %1624 = vmatprep.subr.mxu0 0.0
        %1625 = vmatpush1.msra.mxu0 0.0
        %1626 = vmatprep.subr.mxu0 0.0
        %1627 = vmatpush1.msra.mxu0 0.0
        %1628 = vmatprep.subr.mxu0 0.0
        %1629 = vmatpush1.msra.mxu0 0.0
        %1630 = vmatprep.subr.mxu0 0.0
        %1631 = vmatpush1.msra.mxu0 0.0
        %1632 = vmatprep.subr.mxu0 0.0
        %1633 = vmatpush1.msra.mxu0 0.0
        %1634 = vmatprep.subr.mxu0 0.0
        %1635 = vmatpush1.msra.mxu0 0.0
        %1636 = vmatprep.subr.mxu0 0.0
        %1637 = vmatpush1.msra.mxu0 0.0
        %1638 = vmatprep.subr.mxu0 0.0
        %1639 = vmatpush1.msra.mxu0 0.0
        %1640 = vmatprep.subr.mxu0 0.0
        %1641 = vmatpush1.msra.mxu0 0.0
        %1642 = vmatprep.subr.mxu0 0.0
        %1643 = vmatpush1.msra.mxu0 0.0
        %1644 = vmatprep.subr.mxu0 0.0
        %1645 = vmatpush1.msra.mxu0 0.0
        %1646 = vmatprep.subr.mxu0 0.0
        %1647 = vmatpush1.msra.mxu0 0.0
        %1648 = vmatprep.subr.mxu0 0.0
        %1649 = vmatpush1.msra.mxu0 0.0
        %1650 = vmatprep.subr.mxu0 0.0
        %1651 = vmatpush1.msra.mxu0 0.0
        %1652 = vmatprep.subr.mxu0 0.0
        %1653 = vmatpush1.msra.mxu0 0.0
        %1654 = vmatprep.mubr.f32.mxu0 0.0
        %1655 = vmatmul.mubr.f32.gmra.mrb[0].mxu0 %v1579
        %v1656 = vpop.f32.mrb[0].mxu0
        %v1657 = vadd.f32 0.0, %v1656
        %v1658 = vpop.f32.mrb[0].mxu0
        %v1659 = vadd.f32 0.0, %v1658
        %1660 = vmatprep.mubr.f32.mxu0 0.0
        %1661 = vmatmul.mubr.f32.gmra.mrb[0].mxu0 %v1582
        %v1662 = vpop.f32.mrb[0].mxu0
        %v1663 = vadd.f32 0.0, %v1662
        %v1664 = vpop.f32.mrb[0].mxu0
        %v1665 = vadd.f32 0.0, %v1664
        %1666 = vmatprep.mubr.f32.mxu0 0.0
        %1667 = vmatmul.mubr.f32.gmra.mrb[0].mxu0 %v1585
        %v1668 = vpop.f32.mrb[0].mxu0
        %v1669 = vadd.f32 0.0, %v1668
        %v1670 = vpop.f32.mrb[0].mxu0
        %v1671 = vadd.f32 0.0, %v1670
        %1672 = vmatprep.mubr.f32.mxu0 0.0
        %1673 = vmatmul.mubr.f32.gmra.mrb[0].mxu0 %v1588
        %v1674 = vpop.f32.mrb[0].mxu0
        %v1675 = vadd.f32 0.0, %v1674
        %v1676 = vpop.f32.mrb[0].mxu0
        %v1677 = vadd.f32 0.0, %v1676
        %1678 = vdwg.mxu0
        %v1679 = vadd.f32 %v1558, %v1657
        %v1680 = vadd.f32 %v1559, %v1659
        %v1681 = vadd.f32 %v1560, %v1663
        %v1682 = vadd.f32 %v1561, %v1665
        %v1683 = vadd.f32 %v1562, %v1669
        %v1684 = vadd.f32 %v1563, %v1671
        %v1685 = vadd.f32 %v1564, %v1675
        %v1686 = vadd.f32 %v1565, %v1677
        %v1687 = vld [vmem:[%s491 + $0x40] sm:$0xff]
        %v1688 = vld [vmem:[%s491 + $0x48] sm:$0xff]
        %v1689 = vld [vmem:[%s491 + $0x50] sm:$0xff]
        %v1690 = vld [vmem:[%s491 + $0x58] sm:$0xf]
        %v1691 = vld [vmem:[%s1 + $0x280] sm:$0xff]
        %v1692 = vld [vmem:[%s1 + $0x288] sm:$0xff]
        %v1693 = vld [vmem:[%s1 + $0x290] sm:$0xff]
        %v1694 = vld [vmem:[%s1 + $0x298] sm:$0xff]
        %v1695 = vld [vmem:[%s1 + $0x2a0] sm:$0xff]
        %v1696 = vld [vmem:[%s1 + $0x2a8] sm:$0xff]
        %v1697 = vld [vmem:[%s1 + $0x2b0] sm:$0xff]
        %v1698 = vld [vmem:[%s1 + $0x2b8] sm:$0xff]
        %v1700 = vsel %vm516, %v1687, 0
        %v1703 = vsel %vm516, %v1688, 0
        %v1706 = vsel %vm516, %v1689, 0
        %v1709 = vsel %vm516, %v1690, 0
        %1711 = vmatprep.subr.mxu0 %v1692
        %1712 = vmatpush1.msra.mxu0 %v1691
        %1713 = vmatprep.subr.mxu0 %v1694
        %1714 = vmatpush1.msra.mxu0 %v1693
        %1715 = vmatprep.subr.mxu0 %v1696
        %1716 = vmatpush1.msra.mxu0 %v1695
        %1717 = vmatprep.subr.mxu0 %v1698
        %1718 = vmatpush1.msra.mxu0 %v1697
        %1719 = vmatprep.subr.mxu0 0.0
        %1720 = vmatpush1.msra.mxu0 0.0
        %1721 = vmatprep.subr.mxu0 0.0
        %1722 = vmatpush1.msra.mxu0 0.0
        %1723 = vmatprep.subr.mxu0 0.0
        %1724 = vmatpush1.msra.mxu0 0.0
        %1725 = vmatprep.subr.mxu0 0.0
        %1726 = vmatpush1.msra.mxu0 0.0
        %1727 = vmatprep.subr.mxu0 0.0
        %1728 = vmatpush1.msra.mxu0 0.0
        %1729 = vmatprep.subr.mxu0 0.0
        %1730 = vmatpush1.msra.mxu0 0.0
        %1731 = vmatprep.subr.mxu0 0.0
        %1732 = vmatpush1.msra.mxu0 0.0
        %1733 = vmatprep.subr.mxu0 0.0
        %1734 = vmatpush1.msra.mxu0 0.0
        %1735 = vmatprep.subr.mxu0 0.0
        %1736 = vmatpush1.msra.mxu0 0.0
        %1737 = vmatprep.subr.mxu0 0.0
        %1738 = vmatpush1.msra.mxu0 0.0
        %1739 = vmatprep.subr.mxu0 0.0
        %1740 = vmatpush1.msra.mxu0 0.0
        %1741 = vmatprep.subr.mxu0 0.0
        %1742 = vmatpush1.msra.mxu0 0.0
        %1743 = vmatprep.subr.mxu0 0.0
        %1744 = vmatpush1.msra.mxu0 0.0
        %1745 = vmatprep.subr.mxu0 0.0
        %1746 = vmatpush1.msra.mxu0 0.0
        %1747 = vmatprep.subr.mxu0 0.0
        %1748 = vmatpush1.msra.mxu0 0.0
        %1749 = vmatprep.subr.mxu0 0.0
        %1750 = vmatpush1.msra.mxu0 0.0
        %1751 = vmatprep.subr.mxu0 0.0
        %1752 = vmatpush1.msra.mxu0 0.0
        %1753 = vmatprep.subr.mxu0 0.0
        %1754 = vmatpush1.msra.mxu0 0.0
        %1755 = vmatprep.subr.mxu0 0.0
        %1756 = vmatpush1.msra.mxu0 0.0
        %1757 = vmatprep.subr.mxu0 0.0
        %1758 = vmatpush1.msra.mxu0 0.0
        %1759 = vmatprep.subr.mxu0 0.0
        %1760 = vmatpush1.msra.mxu0 0.0
        %1761 = vmatprep.subr.mxu0 0.0
        %1762 = vmatpush1.msra.mxu0 0.0
        %1763 = vmatprep.subr.mxu0 0.0
        %1764 = vmatpush1.msra.mxu0 0.0
        %1765 = vmatprep.subr.mxu0 0.0
        %1766 = vmatpush1.msra.mxu0 0.0
        %1767 = vmatprep.subr.mxu0 0.0
        %1768 = vmatpush1.msra.mxu0 0.0
        %1769 = vmatprep.subr.mxu0 0.0
        %1770 = vmatpush1.msra.mxu0 0.0
        %1771 = vmatprep.subr.mxu0 0.0
        %1772 = vmatpush1.msra.mxu0 0.0
        %1773 = vmatprep.subr.mxu0 0.0
        %1774 = vmatpush1.msra.mxu0 0.0
        %1775 = vmatprep.mubr.f32.mxu0 0.0
        %1776 = vmatmul.mubr.f32.gmra.mrb[0].mxu0 %v1700
        %v1777 = vpop.f32.mrb[0].mxu0
        %v1778 = vadd.f32 0.0, %v1777
        %v1779 = vpop.f32.mrb[0].mxu0
        %v1780 = vadd.f32 0.0, %v1779
        %1781 = vmatprep.mubr.f32.mxu0 0.0
        %1782 = vmatmul.mubr.f32.gmra.mrb[0].mxu0 %v1703
        %v1783 = vpop.f32.mrb[0].mxu0
        %v1784 = vadd.f32 0.0, %v1783
        %v1785 = vpop.f32.mrb[0].mxu0
        %v1786 = vadd.f32 0.0, %v1785
        %1787 = vmatprep.mubr.f32.mxu0 0.0
        %1788 = vmatmul.mubr.f32.gmra.mrb[0].mxu0 %v1706
        %v1789 = vpop.f32.mrb[0].mxu0
        %v1790 = vadd.f32 0.0, %v1789
        %v1791 = vpop.f32.mrb[0].mxu0
        %v1792 = vadd.f32 0.0, %v1791
        %1793 = vmatprep.mubr.f32.mxu0 0.0
        %1794 = vmatmul.mubr.f32.gmra.mrb[0].mxu0 %v1709
        %v1795 = vpop.f32.mrb[0].mxu0
        %v1796 = vadd.f32 0.0, %v1795
        %v1797 = vpop.f32.mrb[0].mxu0
        %v1798 = vadd.f32 0.0, %v1797
        %1799 = vdwg.mxu0
        %v1800 = vadd.f32 %v1679, %v1778
        %v1801 = vadd.f32 %v1680, %v1780
        %v1802 = vadd.f32 %v1681, %v1784
        %v1803 = vadd.f32 %v1682, %v1786
        %v1804 = vadd.f32 %v1683, %v1790
        %v1805 = vadd.f32 %v1684, %v1792
        %v1806 = vadd.f32 %v1685, %v1796
        %v1807 = vadd.f32 %v1686, %v1798
        %v1808 = vld [vmem:[%s491 + $0x41] sm:$0xff]
        %v1809 = vld [vmem:[%s491 + $0x49] sm:$0xff]
        %v1810 = vld [vmem:[%s491 + $0x51] sm:$0xff]
        %v1811 = vld [vmem:[%s491 + $0x59] sm:$0xf]
        %v1812 = vld [vmem:[%s1 + $0x2c0] sm:$0xff]
        %v1813 = vld [vmem:[%s1 + $0x2c8] sm:$0xff]
        %v1814 = vld [vmem:[%s1 + $0x2d0] sm:$0xff]
        %v1815 = vld [vmem:[%s1 + $0x2d8] sm:$0xff]
        %v1816 = vld [vmem:[%s1 + $0x2e0] sm:$0xff]
        %v1817 = vld [vmem:[%s1 + $0x2e8] sm:$0xff]
        %v1818 = vld [vmem:[%s1 + $0x2f0] sm:$0xff]
        %v1819 = vld [vmem:[%s1 + $0x2f8] sm:$0xff]
        %v1821 = vsel %vm516, %v1808, 0
        %v1824 = vsel %vm516, %v1809, 0
        %v1827 = vsel %vm516, %v1810, 0
        %v1830 = vsel %vm516, %v1811, 0
        %1832 = vmatprep.subr.mxu0 %v1813
        %1833 = vmatpush1.msra.mxu0 %v1812
        %1834 = vmatprep.subr.mxu0 %v1815
        %1835 = vmatpush1.msra.mxu0 %v1814
        %1836 = vmatprep.subr.mxu0 %v1817
        %1837 = vmatpush1.msra.mxu0 %v1816
        %1838 = vmatprep.subr.mxu0 %v1819
        %1839 = vmatpush1.msra.mxu0 %v1818
        %1840 = vmatprep.subr.mxu0 0.0
        %1841 = vmatpush1.msra.mxu0 0.0
        %1842 = vmatprep.subr.mxu0 0.0
        %1843 = vmatpush1.msra.mxu0 0.0
        %1844 = vmatprep.subr.mxu0 0.0
        %1845 = vmatpush1.msra.mxu0 0.0
        %1846 = vmatprep.subr.mxu0 0.0
        %1847 = vmatpush1.msra.mxu0 0.0
        %1848 = vmatprep.subr.mxu0 0.0
        %1849 = vmatpush1.msra.mxu0 0.0
        %1850 = vmatprep.subr.mxu0 0.0
        %1851 = vmatpush1.msra.mxu0 0.0
        %1852 = vmatprep.subr.mxu0 0.0
        %1853 = vmatpush1.msra.mxu0 0.0
        %1854 = vmatprep.subr.mxu0 0.0
        %1855 = vmatpush1.msra.mxu0 0.0
        %1856 = vmatprep.subr.mxu0 0.0
        %1857 = vmatpush1.msra.mxu0 0.0
        %1858 = vmatprep.subr.mxu0 0.0
        %1859 = vmatpush1.msra.mxu0 0.0
        %1860 = vmatprep.subr.mxu0 0.0
        %1861 = vmatpush1.msra.mxu0 0.0
        %1862 = vmatprep.subr.mxu0 0.0
        %1863 = vmatpush1.msra.mxu0 0.0
        %1864 = vmatprep.subr.mxu0 0.0
        %1865 = vmatpush1.msra.mxu0 0.0
        %1866 = vmatprep.subr.mxu0 0.0
        %1867 = vmatpush1.msra.mxu0 0.0
        %1868 = vmatprep.subr.mxu0 0.0
        %1869 = vmatpush1.msra.mxu0 0.0
        %1870 = vmatprep.subr.mxu0 0.0
        %1871 = vmatpush1.msra.mxu0 0.0
        %1872 = vmatprep.subr.mxu0 0.0
        %1873 = vmatpush1.msra.mxu0 0.0
        %1874 = vmatprep.subr.mxu0 0.0
        %1875 = vmatpush1.msra.mxu0 0.0
        %1876 = vmatprep.subr.mxu0 0.0
        %1877 = vmatpush1.msra.mxu0 0.0
        %1878 = vmatprep.subr.mxu0 0.0
        %1879 = vmatpush1.msra.mxu0 0.0
        %1880 = vmatprep.subr.mxu0 0.0
        %1881 = vmatpush1.msra.mxu0 0.0
        %1882 = vmatprep.subr.mxu0 0.0
        %1883 = vmatpush1.msra.mxu0 0.0
        %1884 = vmatprep.subr.mxu0 0.0
        %1885 = vmatpush1.msra.mxu0 0.0
        %1886 = vmatprep.subr.mxu0 0.0
        %1887 = vmatpush1.msra.mxu0 0.0
        %1888 = vmatprep.subr.mxu0 0.0
        %1889 = vmatpush1.msra.mxu0 0.0
        %1890 = vmatprep.subr.mxu0 0.0
        %1891 = vmatpush1.msra.mxu0 0.0
        %1892 = vmatprep.subr.mxu0 0.0
        %1893 = vmatpush1.msra.mxu0 0.0
        %1894 = vmatprep.subr.mxu0 0.0
        %1895 = vmatpush1.msra.mxu0 0.0
        %1896 = vmatprep.mubr.f32.mxu0 0.0
        %1897 = vmatmul.mubr.f32.gmra.mrb[0].mxu0 %v1821
        %v1898 = vpop.f32.mrb[0].mxu0
        %v1899 = vadd.f32 0.0, %v1898
        %v1900 = vpop.f32.mrb[0].mxu0
        %v1901 = vadd.f32 0.0, %v1900
        %1902 = vmatprep.mubr.f32.mxu0 0.0
        %1903 = vmatmul.mubr.f32.gmra.mrb[0].mxu0 %v1824
        %v1904 = vpop.f32.mrb[0].mxu0
        %v1905 = vadd.f32 0.0, %v1904
        %v1906 = vpop.f32.mrb[0].mxu0
        %v1907 = vadd.f32 0.0, %v1906
        %1908 = vmatprep.mubr.f32.mxu0 0.0
        %1909 = vmatmul.mubr.f32.gmra.mrb[0].mxu0 %v1827
        %v1910 = vpop.f32.mrb[0].mxu0
        %v1911 = vadd.f32 0.0, %v1910
        %v1912 = vpop.f32.mrb[0].mxu0
        %v1913 = vadd.f32 0.0, %v1912
        %1914 = vmatprep.mubr.f32.mxu0 0.0
        %1915 = vmatmul.mubr.f32.gmra.mrb[0].mxu0 %v1830
        %v1916 = vpop.f32.mrb[0].mxu0
        %v1917 = vadd.f32 0.0, %v1916
        %v1918 = vpop.f32.mrb[0].mxu0
        %v1919 = vadd.f32 0.0, %v1918
        %1920 = vdwg.mxu0
        %v1921 = vadd.f32 %v1800, %v1899
        %v1922 = vadd.f32 %v1801, %v1901
        %v1923 = vadd.f32 %v1802, %v1905
        %v1924 = vadd.f32 %v1803, %v1907
        %v1925 = vadd.f32 %v1804, %v1911
        %v1926 = vadd.f32 %v1805, %v1913
        %v1927 = vadd.f32 %v1806, %v1917
        %v1928 = vadd.f32 %v1807, %v1919
        %v1929 = vld [vmem:[%s491 + $0x42] sm:$0xff]
        %v1930 = vld [vmem:[%s491 + $0x4a] sm:$0xff]
        %v1931 = vld [vmem:[%s491 + $0x52] sm:$0xff]
        %v1932 = vld [vmem:[%s491 + $0x5a] sm:$0xf]
        %v1933 = vld [vmem:[%s1 + $0x300] sm:$0xff]
        %v1934 = vld [vmem:[%s1 + $0x308] sm:$0xff]
        %v1935 = vld [vmem:[%s1 + $0x310] sm:$0xff]
        %v1936 = vld [vmem:[%s1 + $0x318] sm:$0xff]
        %v1937 = vld [vmem:[%s1 + $0x320] sm:$0xff]
        %v1938 = vld [vmem:[%s1 + $0x328] sm:$0xff]
        %v1939 = vld [vmem:[%s1 + $0x330] sm:$0xff]
        %v1940 = vld [vmem:[%s1 + $0x338] sm:$0xff]
        %v1942 = vsel %vm516, %v1929, 0
        %v1945 = vsel %vm516, %v1930, 0
        %v1948 = vsel %vm516, %v1931, 0
        %v1951 = vsel %vm516, %v1932, 0
        %1953 = vmatprep.subr.mxu0 %v1934
        %1954 = vmatpush1.msra.mxu0 %v1933
        %1955 = vmatprep.subr.mxu0 %v1936
        %1956 = vmatpush1.msra.mxu0 %v1935
        %1957 = vmatprep.subr.mxu0 %v1938
        %1958 = vmatpush1.msra.mxu0 %v1937
        %1959 = vmatprep.subr.mxu0 %v1940
        %1960 = vmatpush1.msra.mxu0 %v1939
        %1961 = vmatprep.subr.mxu0 0.0
        %1962 = vmatpush1.msra.mxu0 0.0
        %1963 = vmatprep.subr.mxu0 0.0
        %1964 = vmatpush1.msra.mxu0 0.0
        %1965 = vmatprep.subr.mxu0 0.0
        %1966 = vmatpush1.msra.mxu0 0.0
        %1967 = vmatprep.subr.mxu0 0.0
        %1968 = vmatpush1.msra.mxu0 0.0
        %1969 = vmatprep.subr.mxu0 0.0
        %1970 = vmatpush1.msra.mxu0 0.0
        %1971 = vmatprep.subr.mxu0 0.0
        %1972 = vmatpush1.msra.mxu0 0.0
        %1973 = vmatprep.subr.mxu0 0.0
        %1974 = vmatpush1.msra.mxu0 0.0
        %1975 = vmatprep.subr.mxu0 0.0
        %1976 = vmatpush1.msra.mxu0 0.0
        %1977 = vmatprep.subr.mxu0 0.0
        %1978 = vmatpush1.msra.mxu0 0.0
        %1979 = vmatprep.subr.mxu0 0.0
        %1980 = vmatpush1.msra.mxu0 0.0
        %1981 = vmatprep.subr.mxu0 0.0
        %1982 = vmatpush1.msra.mxu0 0.0
        %1983 = vmatprep.subr.mxu0 0.0
        %1984 = vmatpush1.msra.mxu0 0.0
        %1985 = vmatprep.subr.mxu0 0.0
        %1986 = vmatpush1.msra.mxu0 0.0
        %1987 = vmatprep.subr.mxu0 0.0
        %1988 = vmatpush1.msra.mxu0 0.0
        %1989 = vmatprep.subr.mxu0 0.0
        %1990 = vmatpush1.msra.mxu0 0.0
        %1991 = vmatprep.subr.mxu0 0.0
        %1992 = vmatpush1.msra.mxu0 0.0
        %1993 = vmatprep.subr.mxu0 0.0
        %1994 = vmatpush1.msra.mxu0 0.0
        %1995 = vmatprep.subr.mxu0 0.0
        %1996 = vmatpush1.msra.mxu0 0.0
        %1997 = vmatprep.subr.mxu0 0.0
        %1998 = vmatpush1.msra.mxu0 0.0
        %1999 = vmatprep.subr.mxu0 0.0
        %2000 = vmatpush1.msra.mxu0 0.0
        %2001 = vmatprep.subr.mxu0 0.0
        %2002 = vmatpush1.msra.mxu0 0.0
        %2003 = vmatprep.subr.mxu0 0.0
        %2004 = vmatpush1.msra.mxu0 0.0
        %2005 = vmatprep.subr.mxu0 0.0
        %2006 = vmatpush1.msra.mxu0 0.0
        %2007 = vmatprep.subr.mxu0 0.0
        %2008 = vmatpush1.msra.mxu0 0.0
        %2009 = vmatprep.subr.mxu0 0.0
        %2010 = vmatpush1.msra.mxu0 0.0
        %2011 = vmatprep.subr.mxu0 0.0
        %2012 = vmatpush1.msra.mxu0 0.0
        %2013 = vmatprep.subr.mxu0 0.0
        %2014 = vmatpush1.msra.mxu0 0.0
        %2015 = vmatprep.subr.mxu0 0.0
        %2016 = vmatpush1.msra.mxu0 0.0
        %2017 = vmatprep.mubr.f32.mxu0 0.0
        %2018 = vmatmul.mubr.f32.gmra.mrb[0].mxu0 %v1942
        %v2019 = vpop.f32.mrb[0].mxu0
        %v2020 = vadd.f32 0.0, %v2019
        %v2021 = vpop.f32.mrb[0].mxu0
        %v2022 = vadd.f32 0.0, %v2021
        %2023 = vmatprep.mubr.f32.mxu0 0.0
        %2024 = vmatmul.mubr.f32.gmra.mrb[0].mxu0 %v1945
        %v2025 = vpop.f32.mrb[0].mxu0
        %v2026 = vadd.f32 0.0, %v2025
        %v2027 = vpop.f32.mrb[0].mxu0
        %v2028 = vadd.f32 0.0, %v2027
        %2029 = vmatprep.mubr.f32.mxu0 0.0
        %2030 = vmatmul.mubr.f32.gmra.mrb[0].mxu0 %v1948
        %v2031 = vpop.f32.mrb[0].mxu0
        %v2032 = vadd.f32 0.0, %v2031
        %v2033 = vpop.f32.mrb[0].mxu0
        %v2034 = vadd.f32 0.0, %v2033
        %2035 = vmatprep.mubr.f32.mxu0 0.0
        %2036 = vmatmul.mubr.f32.gmra.mrb[0].mxu0 %v1951
        %v2037 = vpop.f32.mrb[0].mxu0
        %v2038 = vadd.f32 0.0, %v2037
        %v2039 = vpop.f32.mrb[0].mxu0
        %v2040 = vadd.f32 0.0, %v2039
        %2041 = vdwg.mxu0
        %v2042 = vadd.f32 %v1921, %v2020
        %v2043 = vadd.f32 %v1922, %v2022
        %v2044 = vadd.f32 %v1923, %v2026
        %v2045 = vadd.f32 %v1924, %v2028
        %v2046 = vadd.f32 %v1925, %v2032
        %v2047 = vadd.f32 %v1926, %v2034
        %v2048 = vadd.f32 %v1927, %v2038
        %v2049 = vadd.f32 %v1928, %v2040
        %v2050 = vld [vmem:[%s491 + $0x43] sm:$0xff]
        %v2051 = vld [vmem:[%s491 + $0x4b] sm:$0xff]
        %v2052 = vld [vmem:[%s491 + $0x53] sm:$0xff]
        %v2053 = vld [vmem:[%s491 + $0x5b] sm:$0xf]
        %v2054 = vld [vmem:[%s1 + $0x340] sm:$0xff]
        %v2055 = vld [vmem:[%s1 + $0x348] sm:$0xff]
        %v2056 = vld [vmem:[%s1 + $0x350] sm:$0xff]
        %v2057 = vld [vmem:[%s1 + $0x358] sm:$0xff]
        %v2058 = vld [vmem:[%s1 + $0x360] sm:$0xff]
        %v2059 = vld [vmem:[%s1 + $0x368] sm:$0xff]
        %v2060 = vld [vmem:[%s1 + $0x370] sm:$0xff]
        %v2061 = vld [vmem:[%s1 + $0x378] sm:$0xff]
        %v2063 = vsel %vm516, %v2050, 0
        %v2066 = vsel %vm516, %v2051, 0
        %v2069 = vsel %vm516, %v2052, 0
        %v2072 = vsel %vm516, %v2053, 0
        %2074 = vmatprep.subr.mxu0 %v2055
        %2075 = vmatpush1.msra.mxu0 %v2054
        %2076 = vmatprep.subr.mxu0 %v2057
        %2077 = vmatpush1.msra.mxu0 %v2056
        %2078 = vmatprep.subr.mxu0 %v2059
        %2079 = vmatpush1.msra.mxu0 %v2058
        %2080 = vmatprep.subr.mxu0 %v2061
        %2081 = vmatpush1.msra.mxu0 %v2060
        %2082 = vmatprep.subr.mxu0 0.0
        %2083 = vmatpush1.msra.mxu0 0.0
        %2084 = vmatprep.subr.mxu0 0.0
        %2085 = vmatpush1.msra.mxu0 0.0
        %2086 = vmatprep.subr.mxu0 0.0
        %2087 = vmatpush1.msra.mxu0 0.0
        %2088 = vmatprep.subr.mxu0 0.0
        %2089 = vmatpush1.msra.mxu0 0.0
        %2090 = vmatprep.subr.mxu0 0.0
        %2091 = vmatpush1.msra.mxu0 0.0
        %2092 = vmatprep.subr.mxu0 0.0
        %2093 = vmatpush1.msra.mxu0 0.0
        %2094 = vmatprep.subr.mxu0 0.0
        %2095 = vmatpush1.msra.mxu0 0.0
        %2096 = vmatprep.subr.mxu0 0.0
        %2097 = vmatpush1.msra.mxu0 0.0
        %2098 = vmatprep.subr.mxu0 0.0
        %2099 = vmatpush1.msra.mxu0 0.0
        %2100 = vmatprep.subr.mxu0 0.0
        %2101 = vmatpush1.msra.mxu0 0.0
        %2102 = vmatprep.subr.mxu0 0.0
        %2103 = vmatpush1.msra.mxu0 0.0
        %2104 = vmatprep.subr.mxu0 0.0
        %2105 = vmatpush1.msra.mxu0 0.0
        %2106 = vmatprep.subr.mxu0 0.0
        %2107 = vmatpush1.msra.mxu0 0.0
        %2108 = vmatprep.subr.mxu0 0.0
        %2109 = vmatpush1.msra.mxu0 0.0
        %2110 = vmatprep.subr.mxu0 0.0
        %2111 = vmatpush1.msra.mxu0 0.0
        %2112 = vmatprep.subr.mxu0 0.0
        %2113 = vmatpush1.msra.mxu0 0.0
        %2114 = vmatprep.subr.mxu0 0.0
        %2115 = vmatpush1.msra.mxu0 0.0
        %2116 = vmatprep.subr.mxu0 0.0
        %2117 = vmatpush1.msra.mxu0 0.0
        %2118 = vmatprep.subr.mxu0 0.0
        %2119 = vmatpush1.msra.mxu0 0.0
        %2120 = vmatprep.subr.mxu0 0.0
        %2121 = vmatpush1.msra.mxu0 0.0
        %2122 = vmatprep.subr.mxu0 0.0
        %2123 = vmatpush1.msra.mxu0 0.0
        %2124 = vmatprep.subr.mxu0 0.0
        %2125 = vmatpush1.msra.mxu0 0.0
        %2126 = vmatprep.subr.mxu0 0.0
        %2127 = vmatpush1.msra.mxu0 0.0
        %2128 = vmatprep.subr.mxu0 0.0
        %2129 = vmatpush1.msra.mxu0 0.0
        %2130 = vmatprep.subr.mxu0 0.0
        %2131 = vmatpush1.msra.mxu0 0.0
        %2132 = vmatprep.subr.mxu0 0.0
        %2133 = vmatpush1.msra.mxu0 0.0
        %2134 = vmatprep.subr.mxu0 0.0
        %2135 = vmatpush1.msra.mxu0 0.0
        %2136 = vmatprep.subr.mxu0 0.0
        %2137 = vmatpush1.msra.mxu0 0.0
        %2138 = vmatprep.mubr.f32.mxu0 0.0
        %2139 = vmatmul.mubr.f32.gmra.mrb[0].mxu0 %v2063
        %v2140 = vpop.f32.mrb[0].mxu0
        %v2141 = vadd.f32 0.0, %v2140
        %v2142 = vpop.f32.mrb[0].mxu0
        %v2143 = vadd.f32 0.0, %v2142
        %2144 = vmatprep.mubr.f32.mxu0 0.0
        %2145 = vmatmul.mubr.f32.gmra.mrb[0].mxu0 %v2066
        %v2146 = vpop.f32.mrb[0].mxu0
        %v2147 = vadd.f32 0.0, %v2146
        %v2148 = vpop.f32.mrb[0].mxu0
        %v2149 = vadd.f32 0.0, %v2148
        %2150 = vmatprep.mubr.f32.mxu0 0.0
        %2151 = vmatmul.mubr.f32.gmra.mrb[0].mxu0 %v2069
        %v2152 = vpop.f32.mrb[0].mxu0
        %v2153 = vadd.f32 0.0, %v2152
        %v2154 = vpop.f32.mrb[0].mxu0
        %v2155 = vadd.f32 0.0, %v2154
        %2156 = vmatprep.mubr.f32.mxu0 0.0
        %2157 = vmatmul.mubr.f32.gmra.mrb[0].mxu0 %v2072
        %v2158 = vpop.f32.mrb[0].mxu0
        %v2159 = vadd.f32 0.0, %v2158
        %v2160 = vpop.f32.mrb[0].mxu0
        %v2161 = vadd.f32 0.0, %v2160
        %2162 = vdwg.mxu0
        %v2163 = vadd.f32 %v2042, %v2141
        %v2164 = vadd.f32 %v2043, %v2143
        %v2165 = vadd.f32 %v2044, %v2147
        %v2166 = vadd.f32 %v2045, %v2149
        %v2167 = vadd.f32 %v2046, %v2153
        %v2168 = vadd.f32 %v2047, %v2155
        %v2169 = vadd.f32 %v2048, %v2159
        %v2170 = vadd.f32 %v2049, %v2161
        %v2171 = vld [vmem:[%s491 + $0x44] sm:$0xff]
        %v2172 = vld [vmem:[%s491 + $0x4c] sm:$0xff]
        %v2173 = vld [vmem:[%s491 + $0x54] sm:$0xff]
        %v2174 = vld [vmem:[%s491 + $0x5c] sm:$0xf]
        %v2175 = vld [vmem:[%s1 + $0x380] sm:$0xff]
        %v2176 = vld [vmem:[%s1 + $0x388] sm:$0xff]
        %v2177 = vld [vmem:[%s1 + $0x390] sm:$0xff]
        %v2178 = vld [vmem:[%s1 + $0x398] sm:$0xff]
        %v2179 = vld [vmem:[%s1 + $0x3a0] sm:$0xff]
        %v2180 = vld [vmem:[%s1 + $0x3a8] sm:$0xff]
        %v2181 = vld [vmem:[%s1 + $0x3b0] sm:$0xff]
        %v2182 = vld [vmem:[%s1 + $0x3b8] sm:$0xff]
        %v2184 = vsel %vm516, %v2171, 0
        %v2187 = vsel %vm516, %v2172, 0
        %v2190 = vsel %vm516, %v2173, 0
        %v2193 = vsel %vm516, %v2174, 0
        %2195 = vmatprep.subr.mxu0 %v2176
        %2196 = vmatpush1.msra.mxu0 %v2175
        %2197 = vmatprep.subr.mxu0 %v2178
        %2198 = vmatpush1.msra.mxu0 %v2177
        %2199 = vmatprep.subr.mxu0 %v2180
        %2200 = vmatpush1.msra.mxu0 %v2179
        %2201 = vmatprep.subr.mxu0 %v2182
        %2202 = vmatpush1.msra.mxu0 %v2181
        %2203 = vmatprep.subr.mxu0 0.0
        %2204 = vmatpush1.msra.mxu0 0.0
        %2205 = vmatprep.subr.mxu0 0.0
        %2206 = vmatpush1.msra.mxu0 0.0
        %2207 = vmatprep.subr.mxu0 0.0
        %2208 = vmatpush1.msra.mxu0 0.0
        %2209 = vmatprep.subr.mxu0 0.0
        %2210 = vmatpush1.msra.mxu0 0.0
        %2211 = vmatprep.subr.mxu0 0.0
        %2212 = vmatpush1.msra.mxu0 0.0
        %2213 = vmatprep.subr.mxu0 0.0
        %2214 = vmatpush1.msra.mxu0 0.0
        %2215 = vmatprep.subr.mxu0 0.0
        %2216 = vmatpush1.msra.mxu0 0.0
        %2217 = vmatprep.subr.mxu0 0.0
        %2218 = vmatpush1.msra.mxu0 0.0
        %2219 = vmatprep.subr.mxu0 0.0
        %2220 = vmatpush1.msra.mxu0 0.0
        %2221 = vmatprep.subr.mxu0 0.0
        %2222 = vmatpush1.msra.mxu0 0.0
        %2223 = vmatprep.subr.mxu0 0.0
        %2224 = vmatpush1.msra.mxu0 0.0
        %2225 = vmatprep.subr.mxu0 0.0
        %2226 = vmatpush1.msra.mxu0 0.0
        %2227 = vmatprep.subr.mxu0 0.0
        %2228 = vmatpush1.msra.mxu0 0.0
        %2229 = vmatprep.subr.mxu0 0.0
        %2230 = vmatpush1.msra.mxu0 0.0
        %2231 = vmatprep.subr.mxu0 0.0
        %2232 = vmatpush1.msra.mxu0 0.0
        %2233 = vmatprep.subr.mxu0 0.0
        %2234 = vmatpush1.msra.mxu0 0.0
        %2235 = vmatprep.subr.mxu0 0.0
        %2236 = vmatpush1.msra.mxu0 0.0
        %2237 = vmatprep.subr.mxu0 0.0
        %2238 = vmatpush1.msra.mxu0 0.0
        %2239 = vmatprep.subr.mxu0 0.0
        %2240 = vmatpush1.msra.mxu0 0.0
        %2241 = vmatprep.subr.mxu0 0.0
        %2242 = vmatpush1.msra.mxu0 0.0
        %2243 = vmatprep.subr.mxu0 0.0
        %2244 = vmatpush1.msra.mxu0 0.0
        %2245 = vmatprep.subr.mxu0 0.0
        %2246 = vmatpush1.msra.mxu0 0.0
        %2247 = vmatprep.subr.mxu0 0.0
        %2248 = vmatpush1.msra.mxu0 0.0
        %2249 = vmatprep.subr.mxu0 0.0
        %2250 = vmatpush1.msra.mxu0 0.0
        %2251 = vmatprep.subr.mxu0 0.0
        %2252 = vmatpush1.msra.mxu0 0.0
        %2253 = vmatprep.subr.mxu0 0.0
        %2254 = vmatpush1.msra.mxu0 0.0
        %2255 = vmatprep.subr.mxu0 0.0
        %2256 = vmatpush1.msra.mxu0 0.0
        %2257 = vmatprep.subr.mxu0 0.0
        %2258 = vmatpush1.msra.mxu0 0.0
        %2259 = vmatprep.mubr.f32.mxu0 0.0
        %2260 = vmatmul.mubr.f32.gmra.mrb[0].mxu0 %v2184
        %v2261 = vpop.f32.mrb[0].mxu0
        %v2262 = vadd.f32 0.0, %v2261
        %v2263 = vpop.f32.mrb[0].mxu0
        %v2264 = vadd.f32 0.0, %v2263
        %2265 = vmatprep.mubr.f32.mxu0 0.0
        %2266 = vmatmul.mubr.f32.gmra.mrb[0].mxu0 %v2187
        %v2267 = vpop.f32.mrb[0].mxu0
        %v2268 = vadd.f32 0.0, %v2267
        %v2269 = vpop.f32.mrb[0].mxu0
        %v2270 = vadd.f32 0.0, %v2269
        %2271 = vmatprep.mubr.f32.mxu0 0.0
        %2272 = vmatmul.mubr.f32.gmra.mrb[0].mxu0 %v2190
        %v2273 = vpop.f32.mrb[0].mxu0
        %v2274 = vadd.f32 0.0, %v2273
        %v2275 = vpop.f32.mrb[0].mxu0
        %v2276 = vadd.f32 0.0, %v2275
        %2277 = vmatprep.mubr.f32.mxu0 0.0
        %2278 = vmatmul.mubr.f32.gmra.mrb[0].mxu0 %v2193
        %v2279 = vpop.f32.mrb[0].mxu0
        %v2280 = vadd.f32 0.0, %v2279
        %v2281 = vpop.f32.mrb[0].mxu0
        %v2282 = vadd.f32 0.0, %v2281
        %2283 = vdwg.mxu0
        %v2284 = vadd.f32 %v2163, %v2262
        %v2285 = vadd.f32 %v2164, %v2264
        %v2286 = vadd.f32 %v2165, %v2268
        %v2287 = vadd.f32 %v2166, %v2270
        %v2288 = vadd.f32 %v2167, %v2274
        %v2289 = vadd.f32 %v2168, %v2276
        %v2290 = vadd.f32 %v2169, %v2280
        %v2291 = vadd.f32 %v2170, %v2282
        %v2292 = vld [vmem:[%s2] sm:$0x3]
        %v2294 = vlaneseq
        %v2295 = vshrl.u32 %v2294, 7
        %v2296 = vsub.s32 0, %v2295
        %v2297 = vrot.slane %v2292, %v2296
        %v2298 = vlaneseq
        %v2299 = vshrl.u32 %v2298, 7
        %v2300 = vsub.s32 1, %v2299
        %v2301 = vrot.slane %v2292, %v2300
        %v2304 = vadd.f32 %v2284, %v2297
        %v2305 = vadd.f32 %v2285, %v2301
        %v2306 = vadd.f32 %v2286, %v2297
        %v2307 = vadd.f32 %v2287, %v2301
        %v2308 = vadd.f32 %v2288, %v2297
        %v2309 = vadd.f32 %v2289, %v2301
        %v2310 = vadd.f32 %v2290, %v2297
        %v2311 = vadd.f32 %v2291, %v2301
        %v2312 = vmax.f32 %v2304, 0.0
        %v2313 = vmax.f32 %v2305, 0.0
        %v2314 = vmax.f32 %v2306, 0.0
        %v2315 = vmax.f32 %v2307, 0.0
        %v2316 = vmax.f32 %v2308, 0.0
        %v2317 = vmax.f32 %v2309, 0.0
        %v2318 = vmax.f32 %v2310, 0.0
        %v2319 = vmax.f32 %v2311, 0.0
        %v2320 = vld [vmem:[%s3] sm:$0xff]
        %v2321 = vld [vmem:[%s3 + $0x8] sm:$0x3f]
        %vm2322 = vcmask 228352
        %v2324 = vsel %vm2322, %v2320, 0
        %v2327 = vsel %vm2322, %v2321, 0
        %vm2329 = vcmask 1043456
        %v2331 = vsel %vm2329, %v2318, 0
        %v2334 = vsel %vm2329, %v2319, 0
        %2336 = vmatprep.subr.mxu0 %v2313
        %2337 = vmatpush1.msra.mxu0 %v2312
        %2338 = vmatprep.subr.mxu0 %v2315
        %2339 = vmatpush1.msra.mxu0 %v2314
        %2340 = vmatprep.subr.mxu0 %v2317
        %2341 = vmatpush1.msra.mxu0 %v2316
        %2342 = vmatprep.subr.mxu0 %v2334
        %2343 = vmatpush1.msra.mxu0 %v2331
        %2344 = vmatprep.subr.mxu0 0.0
        %2345 = vmatpush1.msra.mxu0 0.0
        %2346 = vmatprep.subr.mxu0 0.0
        %2347 = vmatpush1.msra.mxu0 0.0
        %2348 = vmatprep.subr.mxu0 0.0
        %2349 = vmatpush1.msra.mxu0 0.0
        %2350 = vmatprep.subr.mxu0 0.0
        %2351 = vmatpush1.msra.mxu0 0.0
        %2352 = vmatprep.subr.mxu0 0.0
        %2353 = vmatpush1.msra.mxu0 0.0
        %2354 = vmatprep.subr.mxu0 0.0
        %2355 = vmatpush1.msra.mxu0 0.0
        %2356 = vmatprep.subr.mxu0 0.0
        %2357 = vmatpush1.msra.mxu0 0.0
        %2358 = vmatprep.subr.mxu0 0.0
        %2359 = vmatpush1.msra.mxu0 0.0
        %2360 = vmatprep.subr.mxu0 0.0
        %2361 = vmatpush1.msra.mxu0 0.0
        %2362 = vmatprep.subr.mxu0 0.0
        %2363 = vmatpush1.msra.mxu0 0.0
        %2364 = vmatprep.subr.mxu0 0.0
        %2365 = vmatpush1.msra.mxu0 0.0
        %2366 = vmatprep.subr.mxu0 0.0
        %2367 = vmatpush1.msra.mxu0 0.0
        %2368 = vmatprep.subr.mxu0 0.0
        %2369 = vmatpush1.msra.mxu0 0.0
        %2370 = vmatprep.subr.mxu0 0.0
        %2371 = vmatpush1.msra.mxu0 0.0
        %2372 = vmatprep.subr.mxu0 0.0
        %2373 = vmatpush1.msra.mxu0 0.0
        %2374 = vmatprep.subr.mxu0 0.0
        %2375 = vmatpush1.msra.mxu0 0.0
        %2376 = vmatprep.subr.mxu0 0.0
        %2377 = vmatpush1.msra.mxu0 0.0
        %2378 = vmatprep.subr.mxu0 0.0
        %2379 = vmatpush1.msra.mxu0 0.0
        %2380 = vmatprep.subr.mxu0 0.0
        %2381 = vmatpush1.msra.mxu0 0.0
        %2382 = vmatprep.subr.mxu0 0.0
        %2383 = vmatpush1.msra.mxu0 0.0
        %2384 = vmatprep.subr.mxu0 0.0
        %2385 = vmatpush1.msra.mxu0 0.0
        %2386 = vmatprep.subr.mxu0 0.0
        %2387 = vmatpush1.msra.mxu0 0.0
        %2388 = vmatprep.subr.mxu0 0.0
        %2389 = vmatpush1.msra.mxu0 0.0
        %2390 = vmatprep.subr.mxu0 0.0
        %2391 = vmatpush1.msra.mxu0 0.0
        %2392 = vmatprep.subr.mxu0 0.0
        %2393 = vmatpush1.msra.mxu0 0.0
        %2394 = vmatprep.subr.mxu0 0.0
        %2395 = vmatpush1.msra.mxu0 0.0
        %2396 = vmatprep.subr.mxu0 0.0
        %2397 = vmatpush1.msra.mxu0 0.0
        %2398 = vmatprep.subr.mxu0 0.0
        %2399 = vmatpush1.msra.mxu0 0.0
        %2400 = vmatprep.mubr.f32.mxu0 0.0
        %2401 = vmatmul.mubr.f32.gmra.mrb[0].mxu0 %v2324
        %v2402 = vpop.f32.mrb[0].mxu0
        %v2403 = vadd.f32 0.0, %v2402
        %v2404 = vpop.f32.mrb[0].mxu0
        %v2405 = vadd.f32 0.0, %v2404
        %2406 = vmatprep.mubr.f32.mxu0 0.0
        %2407 = vmatmul.mubr.f32.gmra.mrb[0].mxu0 %v2327
        %v2408 = vpop.f32.mrb[0].mxu0
        %v2409 = vadd.f32 0.0, %v2408
        %v2410 = vpop.f32.mrb[0].mxu0
        %v2411 = vadd.f32 0.0, %v2410
        %2412 = vdwg.mxu0
        %s2413 = scalar_lea.vmem %s3, 16
        %v2414 = vld [vmem:[%s2413] sm:$0xff]
        %v2415 = vld [vmem:[%s2413 + $0x8] sm:$0x3f]
        %v2417 = vsel %vm2322, %v2414, 0
        %v2420 = vsel %vm2322, %v2415, 0
        %2422 = vmatprep.subr.mxu0 %v2313
        %2423 = vmatpush1.msra.mxu0 %v2312
        %2424 = vmatprep.subr.mxu0 %v2315
        %2425 = vmatpush1.msra.mxu0 %v2314
        %2426 = vmatprep.subr.mxu0 %v2317
        %2427 = vmatpush1.msra.mxu0 %v2316
        %2428 = vmatprep.subr.mxu0 %v2334
        %2429 = vmatpush1.msra.mxu0 %v2331
        %2430 = vmatprep.subr.mxu0 0.0
        %2431 = vmatpush1.msra.mxu0 0.0
        %2432 = vmatprep.subr.mxu0 0.0
        %2433 = vmatpush1.msra.mxu0 0.0
        %2434 = vmatprep.subr.mxu0 0.0
        %2435 = vmatpush1.msra.mxu0 0.0
        %2436 = vmatprep.subr.mxu0 0.0
        %2437 = vmatpush1.msra.mxu0 0.0
        %2438 = vmatprep.subr.mxu0 0.0
        %2439 = vmatpush1.msra.mxu0 0.0
        %2440 = vmatprep.subr.mxu0 0.0
        %2441 = vmatpush1.msra.mxu0 0.0
        %2442 = vmatprep.subr.mxu0 0.0
        %2443 = vmatpush1.msra.mxu0 0.0
        %2444 = vmatprep.subr.mxu0 0.0
        %2445 = vmatpush1.msra.mxu0 0.0
        %2446 = vmatprep.subr.mxu0 0.0
        %2447 = vmatpush1.msra.mxu0 0.0
        %2448 = vmatprep.subr.mxu0 0.0
        %2449 = vmatpush1.msra.mxu0 0.0
        %2450 = vmatprep.subr.mxu0 0.0
        %2451 = vmatpush1.msra.mxu0 0.0
        %2452 = vmatprep.subr.mxu0 0.0
        %2453 = vmatpush1.msra.mxu0 0.0
        %2454 = vmatprep.subr.mxu0 0.0
        %2455 = vmatpush1.msra.mxu0 0.0
        %2456 = vmatprep.subr.mxu0 0.0
        %2457 = vmatpush1.msra.mxu0 0.0
        %2458 = vmatprep.subr.mxu0 0.0
        %2459 = vmatpush1.msra.mxu0 0.0
        %2460 = vmatprep.subr.mxu0 0.0
        %2461 = vmatpush1.msra.mxu0 0.0
        %2462 = vmatprep.subr.mxu0 0.0
        %2463 = vmatpush1.msra.mxu0 0.0
        %2464 = vmatprep.subr.mxu0 0.0
        %2465 = vmatpush1.msra.mxu0 0.0
        %2466 = vmatprep.subr.mxu0 0.0
        %2467 = vmatpush1.msra.mxu0 0.0
        %2468 = vmatprep.subr.mxu0 0.0
        %2469 = vmatpush1.msra.mxu0 0.0
        %2470 = vmatprep.subr.mxu0 0.0
        %2471 = vmatpush1.msra.mxu0 0.0
        %2472 = vmatprep.subr.mxu0 0.0
        %2473 = vmatpush1.msra.mxu0 0.0
        %2474 = vmatprep.subr.mxu0 0.0
        %2475 = vmatpush1.msra.mxu0 0.0
        %2476 = vmatprep.subr.mxu0 0.0
        %2477 = vmatpush1.msra.mxu0 0.0
        %2478 = vmatprep.subr.mxu0 0.0
        %2479 = vmatpush1.msra.mxu0 0.0
        %2480 = vmatprep.subr.mxu0 0.0
        %2481 = vmatpush1.msra.mxu0 0.0
        %2482 = vmatprep.subr.mxu0 0.0
        %2483 = vmatpush1.msra.mxu0 0.0
        %2484 = vmatprep.subr.mxu0 0.0
        %2485 = vmatpush1.msra.mxu0 0.0
        %2486 = vmatprep.mubr.f32.mxu0 0.0
        %2487 = vmatmul.mubr.f32.gmra.mrb[0].mxu0 %v2417
        %v2488 = vpop.f32.mrb[0].mxu0
        %v2489 = vadd.f32 0.0, %v2488
        %v2490 = vpop.f32.mrb[0].mxu0
        %v2491 = vadd.f32 0.0, %v2490
        %2492 = vmatprep.mubr.f32.mxu0 0.0
        %2493 = vmatmul.mubr.f32.gmra.mrb[0].mxu0 %v2420
        %v2494 = vpop.f32.mrb[0].mxu0
        %v2495 = vadd.f32 0.0, %v2494
        %v2496 = vpop.f32.mrb[0].mxu0
        %v2497 = vadd.f32 0.0, %v2496
        %2498 = vdwg.mxu0
        %v2499 = vmax.f32 %v2403, %v2489
        %v2500 = vmax.f32 %v2405, %v2491
        %v2501 = vmax.f32 %v2409, %v2495
        %v2502 = vmax.f32 %v2411, %v2497
        %v2503 = vld [vmem:[%s4] sm:$0xff]
        %v2504 = vld [vmem:[%s4 + $0x8] sm:$0xff]
        %v2505 = vld [vmem:[%s4 + $0x10] sm:$0xff]
        %v2506 = vld [vmem:[%s4 + $0x18] sm:$0xff]
        %v2507 = vld [vmem:[%s4 + $0x20] sm:$0xff]
        %v2508 = vld [vmem:[%s4 + $0x28] sm:$0xff]
        %v2509 = vld [vmem:[%s4 + $0x30] sm:$0xff]
        %v2510 = vld [vmem:[%s4 + $0x38] sm:$0xff]
        %v2511 = vld [vmem:[%s4 + $0x40] sm:$0xff]
        %v2512 = vld [vmem:[%s4 + $0x48] sm:$0xff]
        %v2513 = vld [vmem:[%s4 + $0x50] sm:$0xff]
        %v2514 = vld [vmem:[%s4 + $0x58] sm:$0xff]
        %v2515 = vld [vmem:[%s4 + $0x60] sm:$0xff]
        %v2516 = vld [vmem:[%s4 + $0x68] sm:$0xff]
        %v2517 = vld [vmem:[%s4 + $0x70] sm:$0xff]
        %v2518 = vld [vmem:[%s4 + $0x78] sm:$0xff]
        %v2519 = vld [vmem:[%s4 + $0x80] sm:$0xff]
        %v2520 = vld [vmem:[%s4 + $0x88] sm:$0xff]
        %v2521 = vld [vmem:[%s4 + $0x90] sm:$0xff]
        %v2522 = vld [vmem:[%s4 + $0x98] sm:$0xff]
        %v2523 = vld [vmem:[%s4 + $0xa0] sm:$0xff]
        %vm2524 = vcmask 326656
        %v2526 = vsel %vm2524, %v2500, 0
        %v2529 = vsel %vm2524, %v2502, 0
        %2531 = vmatprep.subr.mxu0 0.0
        %2532 = vmatpush1.msra.mxu0 %v2503
        %2533 = vmatprep.subr.mxu0 0.0
        %2534 = vmatpush1.msra.mxu0 %v2504
        %2535 = vmatprep.subr.mxu0 0.0
        %2536 = vmatpush1.msra.mxu0 %v2505
        %2537 = vmatprep.subr.mxu0 0.0
        %2538 = vmatpush1.msra.mxu0 %v2506
        %2539 = vmatprep.subr.mxu0 0.0
        %2540 = vmatpush1.msra.mxu0 %v2507
        %2541 = vmatprep.subr.mxu0 0.0
        %2542 = vmatpush1.msra.mxu0 %v2508
        %2543 = vmatprep.subr.mxu0 0.0
        %2544 = vmatpush1.msra.mxu0 %v2509
        %2545 = vmatprep.subr.mxu0 0.0
        %2546 = vmatpush1.msra.mxu0 %v2510
        %2547 = vmatprep.subr.mxu0 0.0
        %2548 = vmatpush1.msra.mxu0 %v2511
        %2549 = vmatprep.subr.mxu0 0.0
        %2550 = vmatpush1.msra.mxu0 %v2512
        %2551 = vmatprep.subr.mxu0 0.0
        %2552 = vmatpush1.msra.mxu0 %v2513
        %2553 = vmatprep.subr.mxu0 0.0
        %2554 = vmatpush1.msra.mxu0 %v2514
        %2555 = vmatprep.subr.mxu0 0.0
        %2556 = vmatpush1.msra.mxu0 %v2515
        %2557 = vmatprep.subr.mxu0 0.0
        %2558 = vmatpush1.msra.mxu0 %v2516
        %2559 = vmatprep.subr.mxu0 0.0
        %2560 = vmatpush1.msra.mxu0 %v2517
        %2561 = vmatprep.subr.mxu0 0.0
        %2562 = vmatpush1.msra.mxu0 %v2518
        %2563 = vmatprep.subr.mxu0 0.0
        %2564 = vmatpush1.msra.mxu0 %v2519
        %2565 = vmatprep.subr.mxu0 0.0
        %2566 = vmatpush1.msra.mxu0 %v2520
        %2567 = vmatprep.subr.mxu0 0.0
        %2568 = vmatpush1.msra.mxu0 %v2521
        %2569 = vmatprep.subr.mxu0 0.0
        %2570 = vmatpush1.msra.mxu0 %v2522
        %2571 = vmatprep.subr.mxu0 0.0
        %2572 = vmatpush1.msra.mxu0 %v2523
        %2573 = vmatprep.subr.mxu0 0.0
        %2574 = vmatpush1.msra.mxu0 0.0
        %2575 = vmatprep.subr.mxu0 0.0
        %2576 = vmatpush1.msra.mxu0 0.0
        %2577 = vmatprep.subr.mxu0 0.0
        %2578 = vmatpush1.msra.mxu0 0.0
        %2579 = vmatprep.subr.mxu0 0.0
        %2580 = vmatpush1.msra.mxu0 0.0
        %2581 = vmatprep.subr.mxu0 0.0
        %2582 = vmatpush1.msra.mxu0 0.0
        %2583 = vmatprep.subr.mxu0 0.0
        %2584 = vmatpush1.msra.mxu0 0.0
        %2585 = vmatprep.subr.mxu0 0.0
        %2586 = vmatpush1.msra.mxu0 0.0
        %2587 = vmatprep.subr.mxu0 0.0
        %2588 = vmatpush1.msra.mxu0 0.0
        %2589 = vmatprep.subr.mxu0 0.0
        %2590 = vmatpush1.msra.mxu0 0.0
        %2591 = vmatprep.subr.mxu0 0.0
        %2592 = vmatpush1.msra.mxu0 0.0
        %2593 = vmatprep.subr.mxu0 0.0
        %2594 = vmatpush1.msra.mxu0 0.0
        %2595 = vmatprep.mubr.f32.mxu0 %v2526
        %2596 = vmatmul.mubr.f32.gmra.mrb[0].mxu0 %v2499
        %v2597 = vpop.f32.mrb[0].mxu0
        %v2598 = vadd.f32 0.0, %v2597
        %v2599 = vpop.f32.mrb[0].mxu0
        %2600 = vmatprep.mubr.f32.mxu0 %v2529
        %2601 = vmatmul.mubr.f32.gmra.mrb[0].mxu0 %v2501
        %v2602 = vpop.f32.mrb[0].mxu0
        %v2603 = vadd.f32 0.0, %v2602
        %v2604 = vpop.f32.mrb[0].mxu0
        %2605 = vdwg.mxu0
        %s2606 = scalar_lea.vmem %s4, 168
        %v2607 = vld [vmem:[%s2606] sm:$0xff]
        %v2608 = vld [vmem:[%s2606 + $0x8] sm:$0xff]
        %v2609 = vld [vmem:[%s2606 + $0x10] sm:$0xff]
        %v2610 = vld [vmem:[%s2606 + $0x18] sm:$0xff]
        %v2611 = vld [vmem:[%s2606 + $0x20] sm:$0xff]
        %v2612 = vld [vmem:[%s2606 + $0x28] sm:$0xff]
        %v2613 = vld [vmem:[%s2606 + $0x30] sm:$0xff]
        %v2614 = vld [vmem:[%s2606 + $0x38] sm:$0xff]
        %v2615 = vld [vmem:[%s2606 + $0x40] sm:$0xff]
        %v2616 = vld [vmem:[%s2606 + $0x48] sm:$0xff]
        %v2617 = vld [vmem:[%s2606 + $0x50] sm:$0xff]
        %v2618 = vld [vmem:[%s2606 + $0x58] sm:$0xff]
        %v2619 = vld [vmem:[%s2606 + $0x60] sm:$0xff]
        %v2620 = vld [vmem:[%s2606 + $0x68] sm:$0xff]
        %v2621 = vld [vmem:[%s2606 + $0x70] sm:$0xff]
        %v2622 = vld [vmem:[%s2606 + $0x78] sm:$0xff]
        %v2623 = vld [vmem:[%s2606 + $0x80] sm:$0xff]
        %v2624 = vld [vmem:[%s2606 + $0x88] sm:$0xff]
        %v2625 = vld [vmem:[%s2606 + $0x90] sm:$0xff]
        %v2626 = vld [vmem:[%s2606 + $0x98] sm:$0xff]
        %v2627 = vld [vmem:[%s2606 + $0xa0] sm:$0xff]
        %2628 = vmatprep.subr.mxu0 0.0
        %2629 = vmatpush1.msra.mxu0 %v2607
        %2630 = vmatprep.subr.mxu0 0.0
        %2631 = vmatpush1.msra.mxu0 %v2608
        %2632 = vmatprep.subr.mxu0 0.0
        %2633 = vmatpush1.msra.mxu0 %v2609
        %2634 = vmatprep.subr.mxu0 0.0
        %2635 = vmatpush1.msra.mxu0 %v2610
        %2636 = vmatprep.subr.mxu0 0.0
        %2637 = vmatpush1.msra.mxu0 %v2611
        %2638 = vmatprep.subr.mxu0 0.0
        %2639 = vmatpush1.msra.mxu0 %v2612
        %2640 = vmatprep.subr.mxu0 0.0
        %2641 = vmatpush1.msra.mxu0 %v2613
        %2642 = vmatprep.subr.mxu0 0.0
        %2643 = vmatpush1.msra.mxu0 %v2614
        %2644 = vmatprep.subr.mxu0 0.0
        %2645 = vmatpush1.msra.mxu0 %v2615
        %2646 = vmatprep.subr.mxu0 0.0
        %2647 = vmatpush1.msra.mxu0 %v2616
        %2648 = vmatprep.subr.mxu0 0.0
        %2649 = vmatpush1.msra.mxu0 %v2617
        %2650 = vmatprep.subr.mxu0 0.0
        %2651 = vmatpush1.msra.mxu0 %v2618
        %2652 = vmatprep.subr.mxu0 0.0
        %2653 = vmatpush1.msra.mxu0 %v2619
        %2654 = vmatprep.subr.mxu0 0.0
        %2655 = vmatpush1.msra.mxu0 %v2620
        %2656 = vmatprep.subr.mxu0 0.0
        %2657 = vmatpush1.msra.mxu0 %v2621
        %2658 = vmatprep.subr.mxu0 0.0
        %2659 = vmatpush1.msra.mxu0 %v2622
        %2660 = vmatprep.subr.mxu0 0.0
        %2661 = vmatpush1.msra.mxu0 %v2623
        %2662 = vmatprep.subr.mxu0 0.0
        %2663 = vmatpush1.msra.mxu0 %v2624
        %2664 = vmatprep.subr.mxu0 0.0
        %2665 = vmatpush1.msra.mxu0 %v2625
        %2666 = vmatprep.subr.mxu0 0.0
        %2667 = vmatpush1.msra.mxu0 %v2626
        %2668 = vmatprep.subr.mxu0 0.0
        %2669 = vmatpush1.msra.mxu0 %v2627
        %2670 = vmatprep.subr.mxu0 0.0
        %2671 = vmatpush1.msra.mxu0 0.0
        %2672 = vmatprep.subr.mxu0 0.0
        %2673 = vmatpush1.msra.mxu0 0.0
        %2674 = vmatprep.subr.mxu0 0.0
        %2675 = vmatpush1.msra.mxu0 0.0
        %2676 = vmatprep.subr.mxu0 0.0
        %2677 = vmatpush1.msra.mxu0 0.0
        %2678 = vmatprep.subr.mxu0 0.0
        %2679 = vmatpush1.msra.mxu0 0.0
        %2680 = vmatprep.subr.mxu0 0.0
        %2681 = vmatpush1.msra.mxu0 0.0
        %2682 = vmatprep.subr.mxu0 0.0
        %2683 = vmatpush1.msra.mxu0 0.0
        %2684 = vmatprep.subr.mxu0 0.0
        %2685 = vmatpush1.msra.mxu0 0.0
        %2686 = vmatprep.subr.mxu0 0.0
        %2687 = vmatpush1.msra.mxu0 0.0
        %2688 = vmatprep.subr.mxu0 0.0
        %2689 = vmatpush1.msra.mxu0 0.0
        %2690 = vmatprep.subr.mxu0 0.0
        %2691 = vmatpush1.msra.mxu0 0.0
        %2692 = vmatprep.mubr.f32.mxu0 %v2526
        %2693 = vmatmul.mubr.f32.gmra.mrb[0].mxu0 %v2499
        %v2694 = vpop.f32.mrb[0].mxu0
        %v2695 = vadd.f32 0.0, %v2694
        %v2696 = vpop.f32.mrb[0].mxu0
        %2697 = vmatprep.mubr.f32.mxu0 %v2529
        %2698 = vmatmul.mubr.f32.gmra.mrb[0].mxu0 %v2501
        %v2699 = vpop.f32.mrb[0].mxu0
        %v2700 = vadd.f32 0.0, %v2699
        %v2701 = vpop.f32.mrb[0].mxu0
        %2702 = vdwg.mxu0
        %v2703 = vmax.f32 %v2598, %v2695
        %v2704 = vmax.f32 %v2603, %v2700
        %v2705 = vld [vmem:[%s5] sm:$0xff]
        %v2706 = vld [vmem:[%s5 + $0x8] sm:$0xff]
        %v2707 = vld [vmem:[%s5 + $0x10] sm:$0xff]
        %v2708 = vld [vmem:[%s5 + $0x18] sm:$0xff]
        %v2709 = vld [vmem:[%s5 + $0x20] sm:$0xff]
        %v2710 = vld [vmem:[%s5 + $0x28] sm:$0xff]
        %v2711 = vld [vmem:[%s5 + $0x30] sm:$0xff]
        %v2712 = vld [vmem:[%s5 + $0x38] sm:$0xff]
        %v2713 = vld [vmem:[%s5 + $0x40] sm:$0xff]
        %v2714 = vld [vmem:[%s5 + $0x48] sm:$0xff]
        %v2715 = vld [vmem:[%s5 + $0x50] sm:$0xff]
        %v2716 = vld [vmem:[%s5 + $0x58] sm:$0xff]
        %v2717 = vld [vmem:[%s5 + $0x60] sm:$0xff]
        %v2718 = vld [vmem:[%s5 + $0x68] sm:$0xff]
        %v2719 = vld [vmem:[%s5 + $0x70] sm:$0xff]
        %v2720 = vld [vmem:[%s5 + $0x78] sm:$0xff]
        %v2721 = vld [vmem:[%s5 + $0x80] sm:$0xff]
        %v2722 = vld [vmem:[%s5 + $0x88] sm:$0xff]
        %v2723 = vld [vmem:[%s5 + $0x90] sm:$0xff]
        %v2724 = vld [vmem:[%s5 + $0x98] sm:$0xff]
        %v2725 = vld [vmem:[%s5 + $0xa0] sm:$0xf]
        %v2726 = vld [vmem:[%s5 + $0xa8] sm:$0xf]
        %v2727 = vld [vmem:[%s5 + $0xa0] sm:$0xf0]
        %v2728 = vld [vmem:[%s5 + $0xa8] sm:$0xf0]
        %v2729 = vld [vmem:[%s5 + $0xb0] sm:$0xff]
        %v2730 = vld [vmem:[%s5 + $0xb8] sm:$0xff]
        %v2731 = vld [vmem:[%s5 + $0xc0] sm:$0xff]
        %v2732 = vld [vmem:[%s5 + $0xc8] sm:$0xff]
        %v2733 = vld [vmem:[%s5 + $0xd0] sm:$0xff]
        %v2734 = vld [vmem:[%s5 + $0xd8] sm:$0xff]
        %v2735 = vld [vmem:[%s5 + $0xe0] sm:$0xff]
        %v2736 = vld [vmem:[%s5 + $0xe8] sm:$0xff]
        %v2737 = vld [vmem:[%s5 + $0xf0] sm:$0xff]
        %v2738 = vld [vmem:[%s5 + $0xf8] sm:$0xff]
        %v2739 = vld [vmem:[%s5 + $0x100] sm:$0xff]
        %v2740 = vld [vmem:[%s5 + $0x108] sm:$0xff]
        %v2741 = vld [vmem:[%s5 + $0x110] sm:$0xff]
        %v2742 = vld [vmem:[%s5 + $0x118] sm:$0xff]
        %v2743 = vld [vmem:[%s5 + $0x120] sm:$0xff]
        %v2744 = vld [vmem:[%s5 + $0x128] sm:$0xff]
        %v2745 = vld [vmem:[%s5 + $0x130] sm:$0xff]
        %v2746 = vld [vmem:[%s5 + $0x138] sm:$0xff]
        %v2747 = vld [vmem:[%s5 + $0x140] sm:$0xff]
        %v2748 = vld [vmem:[%s5 + $0x148] sm:$0xff]
        %vm2751 = vcmask 1046528
        %v2752 = vrot.slane %v2703, 1
        %v2753 = vrot.slane %v2704, 1
        %v2754 = vsel %vm2751, %v2752, %v2753
        %v2777 = vrot.slane %v2727, 4
        %v2778 = vrot.slane %v2729, 4
        %v2779 = vsel %vm2329, %v2777, %v2778
        %v2780 = vrot.slane %v2728, 4
        %v2781 = vrot.slane %v2730, 4
        %v2782 = vsel %vm2329, %v2780, %v2781
        %v2783 = vrot.slane %v2731, 4
        %v2784 = vsel %vm2329, %v2778, %v2783
        %v2785 = vrot.slane %v2732, 4
        %v2786 = vsel %vm2329, %v2781, %v2785
        %v2787 = vrot.slane %v2733, 4
        %v2788 = vsel %vm2329, %v2783, %v2787
        %v2789 = vrot.slane %v2734, 4
        %v2790 = vsel %vm2329, %v2785, %v2789
        %v2791 = vrot.slane %v2735, 4
        %v2792 = vsel %vm2329, %v2787, %v2791
        %v2793 = vrot.slane %v2736, 4
        %v2794 = vsel %vm2329, %v2789, %v2793
        %v2795 = vrot.slane %v2737, 4
        %v2796 = vsel %vm2329, %v2791, %v2795
        %v2797 = vrot.slane %v2738, 4
        %v2798 = vsel %vm2329, %v2793, %v2797
        %v2799 = vrot.slane %v2739, 4
        %v2800 = vsel %vm2329, %v2795, %v2799
        %v2801 = vrot.slane %v2740, 4
        %v2802 = vsel %vm2329, %v2797, %v2801
        %v2803 = vrot.slane %v2741, 4
        %v2804 = vsel %vm2329, %v2799, %v2803
        %v2805 = vrot.slane %v2742, 4
        %v2806 = vsel %vm2329, %v2801, %v2805
        %v2807 = vrot.slane %v2743, 4
        %v2808 = vsel %vm2329, %v2803, %v2807
        %v2809 = vrot.slane %v2744, 4
        %v2810 = vsel %vm2329, %v2805, %v2809
        %v2811 = vrot.slane %v2745, 4
        %v2812 = vsel %vm2329, %v2807, %v2811
        %v2813 = vrot.slane %v2746, 4
        %v2814 = vsel %vm2329, %v2809, %v2813
        %v2815 = vrot.slane %v2747, 4
        %v2816 = vsel %vm2329, %v2811, %v2815
        %v2817 = vrot.slane %v2748, 4
        %v2818 = vsel %vm2329, %v2813, %v2817
        %vm2839 = vcmask 687104
        %v2840 = vsel %vm2839, %v2754, 0
        %v2842 = vsel %vm2839, %v2753, 0
        %v2844 = vsel %vm2329, %v2815, 0
        %v2846 = vsel %vm2329, %v2817, 0
        %2848 = vmatprep.subr.mxu0 %v2782
        %2849 = vmatpush1.msra.mxu0 %v2779
        %2850 = vmatprep.subr.mxu0 %v2786
        %2851 = vmatpush1.msra.mxu0 %v2784
        %2852 = vmatprep.subr.mxu0 %v2790
        %2853 = vmatpush1.msra.mxu0 %v2788
        %2854 = vmatprep.subr.mxu0 %v2794
        %2855 = vmatpush1.msra.mxu0 %v2792
        %2856 = vmatprep.subr.mxu0 %v2798
        %2857 = vmatpush1.msra.mxu0 %v2796
        %2858 = vmatprep.subr.mxu0 %v2802
        %2859 = vmatpush1.msra.mxu0 %v2800
        %2860 = vmatprep.subr.mxu0 %v2806
        %2861 = vmatpush1.msra.mxu0 %v2804
        %2862 = vmatprep.subr.mxu0 %v2810
        %2863 = vmatpush1.msra.mxu0 %v2808
        %2864 = vmatprep.subr.mxu0 %v2814
        %2865 = vmatpush1.msra.mxu0 %v2812
        %2866 = vmatprep.subr.mxu0 %v2818
        %2867 = vmatpush1.msra.mxu0 %v2816
        %2868 = vmatprep.subr.mxu0 %v2846
        %2869 = vmatpush1.msra.mxu0 %v2844
        %2870 = vmatprep.subr.mxu0 0.0
        %2871 = vmatpush1.msra.mxu0 0.0
        %2872 = vmatprep.subr.mxu0 0.0
        %2873 = vmatpush1.msra.mxu0 0.0
        %2874 = vmatprep.subr.mxu0 0.0
        %2875 = vmatpush1.msra.mxu0 0.0
        %2876 = vmatprep.subr.mxu0 0.0
        %2877 = vmatpush1.msra.mxu0 0.0
        %2878 = vmatprep.subr.mxu0 0.0
        %2879 = vmatpush1.msra.mxu0 0.0
        %2880 = vmatprep.subr.mxu0 0.0
        %2881 = vmatpush1.msra.mxu0 0.0
        %2882 = vmatprep.subr.mxu0 0.0
        %2883 = vmatpush1.msra.mxu0 0.0
        %2884 = vmatprep.subr.mxu0 0.0
        %2885 = vmatpush1.msra.mxu0 0.0
        %2886 = vmatprep.subr.mxu0 0.0
        %2887 = vmatpush1.msra.mxu0 0.0
        %2888 = vmatprep.subr.mxu0 0.0
        %2889 = vmatpush1.msra.mxu0 0.0
        %2890 = vmatprep.subr.mxu0 0.0
        %2891 = vmatpush1.msra.mxu0 0.0
        %2892 = vmatprep.subr.mxu0 0.0
        %2893 = vmatpush1.msra.mxu0 0.0
        %2894 = vmatprep.subr.mxu0 0.0
        %2895 = vmatpush1.msra.mxu0 0.0
        %2896 = vmatprep.subr.mxu0 0.0
        %2897 = vmatpush1.msra.mxu0 0.0
        %2898 = vmatprep.subr.mxu0 0.0
        %2899 = vmatpush1.msra.mxu0 0.0
        %2900 = vmatprep.subr.mxu0 0.0
        %2901 = vmatpush1.msra.mxu0 0.0
        %2902 = vmatprep.subr.mxu0 0.0
        %2903 = vmatpush1.msra.mxu0 0.0
        %2904 = vmatprep.subr.mxu0 0.0
        %2905 = vmatpush1.msra.mxu0 0.0
        %2906 = vmatprep.subr.mxu0 0.0
        %2907 = vmatpush1.msra.mxu0 0.0
        %2908 = vmatprep.subr.mxu0 0.0
        %2909 = vmatpush1.msra.mxu0 0.0
        %2910 = vmatprep.subr.mxu0 0.0
        %2911 = vmatpush1.msra.mxu0 0.0
        %2912 = vmatprep.mubr.f32.mxu0 0.0
        %2913 = vmatmul.mubr.f32.gmra.mrb[0].mxu0 %v2840
        %v2914 = vpop.f32.mrb[0].mxu0
        %v2915 = vadd.f32 0.0, %v2914
        %v2916 = vpop.f32.mrb[0].mxu0
        %v2917 = vadd.f32 0.0, %v2916
        %2918 = vmatprep.mubr.f32.mxu0 0.0
        %2919 = vmatmul.mubr.f32.gmra.mrb[0].mxu0 %v2842
        %v2920 = vpop.f32.mrb[0].mxu0
        %v2921 = vadd.f32 0.0, %v2920
        %v2922 = vpop.f32.mrb[0].mxu0
        %v2923 = vadd.f32 0.0, %v2922
        %2924 = vdwg.mxu0
        %v2925 = vsel %vm2839, %v2703, 0
        %v2927 = vsel %vm2839, %v2704, 0
        %v2930 = vsel %vm2329, %v2725, 0
        %v2933 = vsel %vm2329, %v2726, 0
        %2935 = vmatprep.subr.mxu0 %v2706
        %2936 = vmatpush1.msra.mxu0 %v2705
        %2937 = vmatprep.subr.mxu0 %v2708
        %2938 = vmatpush1.msra.mxu0 %v2707
        %2939 = vmatprep.subr.mxu0 %v2710
        %2940 = vmatpush1.msra.mxu0 %v2709
        %2941 = vmatprep.subr.mxu0 %v2712
        %2942 = vmatpush1.msra.mxu0 %v2711
        %2943 = vmatprep.subr.mxu0 %v2714
        %2944 = vmatpush1.msra.mxu0 %v2713
        %2945 = vmatprep.subr.mxu0 %v2716
        %2946 = vmatpush1.msra.mxu0 %v2715
        %2947 = vmatprep.subr.mxu0 %v2718
        %2948 = vmatpush1.msra.mxu0 %v2717
        %2949 = vmatprep.subr.mxu0 %v2720
        %2950 = vmatpush1.msra.mxu0 %v2719
        %2951 = vmatprep.subr.mxu0 %v2722
        %2952 = vmatpush1.msra.mxu0 %v2721
        %2953 = vmatprep.subr.mxu0 %v2724
        %2954 = vmatpush1.msra.mxu0 %v2723
        %2955 = vmatprep.subr.mxu0 %v2933
        %2956 = vmatpush1.msra.mxu0 %v2930
        %2957 = vmatprep.subr.mxu0 0.0
        %2958 = vmatpush1.msra.mxu0 0.0
        %2959 = vmatprep.subr.mxu0 0.0
        %2960 = vmatpush1.msra.mxu0 0.0
        %2961 = vmatprep.subr.mxu0 0.0
        %2962 = vmatpush1.msra.mxu0 0.0
        %2963 = vmatprep.subr.mxu0 0.0
        %2964 = vmatpush1.msra.mxu0 0.0
        %2965 = vmatprep.subr.mxu0 0.0
        %2966 = vmatpush1.msra.mxu0 0.0
        %2967 = vmatprep.subr.mxu0 0.0
        %2968 = vmatpush1.msra.mxu0 0.0
        %2969 = vmatprep.subr.mxu0 0.0
        %2970 = vmatpush1.msra.mxu0 0.0
        %2971 = vmatprep.subr.mxu0 0.0
        %2972 = vmatpush1.msra.mxu0 0.0
        %2973 = vmatprep.subr.mxu0 0.0
        %2974 = vmatpush1.msra.mxu0 0.0
        %2975 = vmatprep.subr.mxu0 0.0
        %2976 = vmatpush1.msra.mxu0 0.0
        %2977 = vmatprep.subr.mxu0 0.0
        %2978 = vmatpush1.msra.mxu0 0.0
        %2979 = vmatprep.subr.mxu0 0.0
        %2980 = vmatpush1.msra.mxu0 0.0
        %2981 = vmatprep.subr.mxu0 0.0
        %2982 = vmatpush1.msra.mxu0 0.0
        %2983 = vmatprep.subr.mxu0 0.0
        %2984 = vmatpush1.msra.mxu0 0.0
        %2985 = vmatprep.subr.mxu0 0.0
        %2986 = vmatpush1.msra.mxu0 0.0
        %2987 = vmatprep.subr.mxu0 0.0
        %2988 = vmatpush1.msra.mxu0 0.0
        %2989 = vmatprep.subr.mxu0 0.0
        %2990 = vmatpush1.msra.mxu0 0.0
        %2991 = vmatprep.subr.mxu0 0.0
        %2992 = vmatpush1.msra.mxu0 0.0
        %2993 = vmatprep.subr.mxu0 0.0
        %2994 = vmatpush1.msra.mxu0 0.0
        %2995 = vmatprep.subr.mxu0 0.0
        %2996 = vmatpush1.msra.mxu0 0.0
        %2997 = vmatprep.subr.mxu0 0.0
        %2998 = vmatpush1.msra.mxu0 0.0
        %2999 = vmatprep.mubr.f32.mxu0 0.0
        %3000 = vmatmul.mubr.f32.gmra.mrb[0].mxu0 %v2925
        %v3001 = vpop.f32.mrb[0].mxu0
        %v3002 = vadd.f32 %v2915, %v3001
        %v3003 = vpop.f32.mrb[0].mxu0
        %v3004 = vadd.f32 %v2917, %v3003
        %3005 = vmatprep.mubr.f32.mxu0 0.0
        %3006 = vmatmul.mubr.f32.gmra.mrb[0].mxu0 %v2927
        %v3007 = vpop.f32.mrb[0].mxu0
        %v3008 = vadd.f32 %v2921, %v3007
        %v3009 = vpop.f32.mrb[0].mxu0
        %v3010 = vadd.f32 %v2923, %v3009
        %3011 = vdwg.mxu0
        %v3012 = vld [vmem:[%s5 + $0x150] sm:$0xff]
        %v3013 = vld [vmem:[%s5 + $0x158] sm:$0xff]
        %v3014 = vld [vmem:[%s5 + $0x160] sm:$0xff]
        %v3015 = vld [vmem:[%s5 + $0x168] sm:$0xff]
        %v3016 = vld [vmem:[%s5 + $0x170] sm:$0xff]
        %v3017 = vld [vmem:[%s5 + $0x178] sm:$0xff]
        %v3018 = vld [vmem:[%s5 + $0x180] sm:$0xff]
        %v3019 = vld [vmem:[%s5 + $0x188] sm:$0xff]
        %v3020 = vld [vmem:[%s5 + $0x190] sm:$0xff]
        %v3021 = vld [vmem:[%s5 + $0x198] sm:$0xff]
        %v3022 = vld [vmem:[%s5 + $0x1a0] sm:$0xff]
        %v3023 = vld [vmem:[%s5 + $0x1a8] sm:$0xff]
        %v3024 = vld [vmem:[%s5 + $0x1b0] sm:$0xff]
        %v3025 = vld [vmem:[%s5 + $0x1b8] sm:$0xff]
        %v3026 = vld [vmem:[%s5 + $0x1c0] sm:$0xff]
        %v3027 = vld [vmem:[%s5 + $0x1c8] sm:$0xff]
        %v3028 = vld [vmem:[%s5 + $0x1d0] sm:$0xff]
        %v3029 = vld [vmem:[%s5 + $0x1d8] sm:$0xff]
        %v3030 = vld [vmem:[%s5 + $0x1e0] sm:$0xff]
        %v3031 = vld [vmem:[%s5 + $0x1e8] sm:$0xff]
        %v3032 = vld [vmem:[%s5 + $0x1f0] sm:$0xf]
        %v3033 = vld [vmem:[%s5 + $0x1f8] sm:$0xf]
        %vm3034 = vcmask 1045504
        %v3035 = vrot.slane %v2703, 2
        %v3036 = vrot.slane %v2704, 2
        %v3037 = vsel %vm3034, %v3035, %v3036
        %v3038 = vsel %vm2839, %v3037, 0
        %v3040 = vsel %vm2839, %v3036, 0
        %v3043 = vsel %vm2329, %v3032, 0
        %v3046 = vsel %vm2329, %v3033, 0
        %3048 = vmatprep.subr.mxu0 %v3013
        %3049 = vmatpush1.msra.mxu0 %v3012
        %3050 = vmatprep.subr.mxu0 %v3015
        %3051 = vmatpush1.msra.mxu0 %v3014
        %3052 = vmatprep.subr.mxu0 %v3017
        %3053 = vmatpush1.msra.mxu0 %v3016
        %3054 = vmatprep.subr.mxu0 %v3019
        %3055 = vmatpush1.msra.mxu0 %v3018
        %3056 = vmatprep.subr.mxu0 %v3021
        %3057 = vmatpush1.msra.mxu0 %v3020
        %3058 = vmatprep.subr.mxu0 %v3023
        %3059 = vmatpush1.msra.mxu0 %v3022
        %3060 = vmatprep.subr.mxu0 %v3025
        %3061 = vmatpush1.msra.mxu0 %v3024
        %3062 = vmatprep.subr.mxu0 %v3027
        %3063 = vmatpush1.msra.mxu0 %v3026
        %3064 = vmatprep.subr.mxu0 %v3029
        %3065 = vmatpush1.msra.mxu0 %v3028
        %3066 = vmatprep.subr.mxu0 %v3031
        %3067 = vmatpush1.msra.mxu0 %v3030
        %3068 = vmatprep.subr.mxu0 %v3046
        %3069 = vmatpush1.msra.mxu0 %v3043
        %3070 = vmatprep.subr.mxu0 0.0
        %3071 = vmatpush1.msra.mxu0 0.0
        %3072 = vmatprep.subr.mxu0 0.0
        %3073 = vmatpush1.msra.mxu0 0.0
        %3074 = vmatprep.subr.mxu0 0.0
        %3075 = vmatpush1.msra.mxu0 0.0
        %3076 = vmatprep.subr.mxu0 0.0
        %3077 = vmatpush1.msra.mxu0 0.0
        %3078 = vmatprep.subr.mxu0 0.0
        %3079 = vmatpush1.msra.mxu0 0.0
        %3080 = vmatprep.subr.mxu0 0.0
        %3081 = vmatpush1.msra.mxu0 0.0
        %3082 = vmatprep.subr.mxu0 0.0
        %3083 = vmatpush1.msra.mxu0 0.0
        %3084 = vmatprep.subr.mxu0 0.0
        %3085 = vmatpush1.msra.mxu0 0.0
        %3086 = vmatprep.subr.mxu0 0.0
        %3087 = vmatpush1.msra.mxu0 0.0
        %3088 = vmatprep.subr.mxu0 0.0
        %3089 = vmatpush1.msra.mxu0 0.0
        %3090 = vmatprep.subr.mxu0 0.0
        %3091 = vmatpush1.msra.mxu0 0.0
        %3092 = vmatprep.subr.mxu0 0.0
        %3093 = vmatpush1.msra.mxu0 0.0
        %3094 = vmatprep.subr.mxu0 0.0
        %3095 = vmatpush1.msra.mxu0 0.0
        %3096 = vmatprep.subr.mxu0 0.0
        %3097 = vmatpush1.msra.mxu0 0.0
        %3098 = vmatprep.subr.mxu0 0.0
        %3099 = vmatpush1.msra.mxu0 0.0
        %3100 = vmatprep.subr.mxu0 0.0
        %3101 = vmatpush1.msra.mxu0 0.0
        %3102 = vmatprep.subr.mxu0 0.0
        %3103 = vmatpush1.msra.mxu0 0.0
        %3104 = vmatprep.subr.mxu0 0.0
        %3105 = vmatpush1.msra.mxu0 0.0
        %3106 = vmatprep.subr.mxu0 0.0
        %3107 = vmatpush1.msra.mxu0 0.0
        %3108 = vmatprep.subr.mxu0 0.0
        %3109 = vmatpush1.msra.mxu0 0.0
        %3110 = vmatprep.subr.mxu0 0.0
        %3111 = vmatpush1.msra.mxu0 0.0
        %3112 = vmatprep.mubr.f32.mxu0 0.0
        %3113 = vmatmul.mubr.f32.gmra.mrb[0].mxu0 %v3038
        %v3114 = vpop.f32.mrb[0].mxu0
        %v3115 = vadd.f32 0.0, %v3114
        %v3116 = vpop.f32.mrb[0].mxu0
        %v3117 = vadd.f32 0.0, %v3116
        %3118 = vmatprep.mubr.f32.mxu0 0.0
        %3119 = vmatmul.mubr.f32.gmra.mrb[0].mxu0 %v3040
        %v3120 = vpop.f32.mrb[0].mxu0
        %v3121 = vadd.f32 0.0, %v3120
        %v3122 = vpop.f32.mrb[0].mxu0
        %v3123 = vadd.f32 0.0, %v3122
        %3124 = vdwg.mxu0
        %v3125 = vadd.f32 %v3002, %v3115
        %v3126 = vadd.f32 %v3004, %v3117
        %v3127 = vadd.f32 %v3008, %v3121
        %v3128 = vadd.f32 %v3010, %v3123
        %v3129 = vld [vmem:[%s5 + $0x1f0] sm:$0xf0]
        %v3130 = vld [vmem:[%s5 + $0x1f8] sm:$0xf0]
        %v3131 = vld [vmem:[%s5 + $0x200] sm:$0xff]
        %v3132 = vld [vmem:[%s5 + $0x208] sm:$0xff]
        %v3133 = vld [vmem:[%s5 + $0x210] sm:$0xff]
        %v3134 = vld [vmem:[%s5 + $0x218] sm:$0xff]
        %v3135 = vld [vmem:[%s5 + $0x220] sm:$0xff]
        %v3136 = vld [vmem:[%s5 + $0x228] sm:$0xff]
        %v3137 = vld [vmem:[%s5 + $0x230] sm:$0xff]
        %v3138 = vld [vmem:[%s5 + $0x238] sm:$0xff]
        %v3139 = vld [vmem:[%s5 + $0x240] sm:$0xff]
        %v3140 = vld [vmem:[%s5 + $0x248] sm:$0xff]
        %v3141 = vld [vmem:[%s5 + $0x250] sm:$0xff]
        %v3142 = vld [vmem:[%s5 + $0x258] sm:$0xff]
        %v3143 = vld [vmem:[%s5 + $0x260] sm:$0xff]
        %v3144 = vld [vmem:[%s5 + $0x268] sm:$0xff]
        %v3145 = vld [vmem:[%s5 + $0x270] sm:$0xff]
        %v3146 = vld [vmem:[%s5 + $0x278] sm:$0xff]
        %v3147 = vld [vmem:[%s5 + $0x280] sm:$0xff]
        %v3148 = vld [vmem:[%s5 + $0x288] sm:$0xff]
        %v3149 = vld [vmem:[%s5 + $0x290] sm:$0xff]
        %v3150 = vld [vmem:[%s5 + $0x298] sm:$0xff]
        %vm3151 = vcmask 1044480
        %v3152 = vrot.slane %v2703, 3
        %v3153 = vrot.slane %v2704, 3
        %v3154 = vsel %vm3151, %v3152, %v3153
        %v3177 = vrot.slane %v3129, 4
        %v3178 = vrot.slane %v3131, 4
        %v3179 = vsel %vm2329, %v3177, %v3178
        %v3180 = vrot.slane %v3130, 4
        %v3181 = vrot.slane %v3132, 4
        %v3182 = vsel %vm2329, %v3180, %v3181
        %v3183 = vrot.slane %v3133, 4
        %v3184 = vsel %vm2329, %v3178, %v3183
        %v3185 = vrot.slane %v3134, 4
        %v3186 = vsel %vm2329, %v3181, %v3185
        %v3187 = vrot.slane %v3135, 4
        %v3188 = vsel %vm2329, %v3183, %v3187
        %v3189 = vrot.slane %v3136, 4
        %v3190 = vsel %vm2329, %v3185, %v3189
        %v3191 = vrot.slane %v3137, 4
        %v3192 = vsel %vm2329, %v3187, %v3191
        %v3193 = vrot.slane %v3138, 4
        %v3194 = vsel %vm2329, %v3189, %v3193
        %v3195 = vrot.slane %v3139, 4
        %v3196 = vsel %vm2329, %v3191, %v3195
        %v3197 = vrot.slane %v3140, 4
        %v3198 = vsel %vm2329, %v3193, %v3197
        %v3199 = vrot.slane %v3141, 4
        %v3200 = vsel %vm2329, %v3195, %v3199
        %v3201 = vrot.slane %v3142, 4
        %v3202 = vsel %vm2329, %v3197, %v3201
        %v3203 = vrot.slane %v3143, 4
        %v3204 = vsel %vm2329, %v3199, %v3203
        %v3205 = vrot.slane %v3144, 4
        %v3206 = vsel %vm2329, %v3201, %v3205
        %v3207 = vrot.slane %v3145, 4
        %v3208 = vsel %vm2329, %v3203, %v3207
        %v3209 = vrot.slane %v3146, 4
        %v3210 = vsel %vm2329, %v3205, %v3209
        %v3211 = vrot.slane %v3147, 4
        %v3212 = vsel %vm2329, %v3207, %v3211
        %v3213 = vrot.slane %v3148, 4
        %v3214 = vsel %vm2329, %v3209, %v3213
        %v3215 = vrot.slane %v3149, 4
        %v3216 = vsel %vm2329, %v3211, %v3215
        %v3217 = vrot.slane %v3150, 4
        %v3218 = vsel %vm2329, %v3213, %v3217
        %v3239 = vsel %vm2839, %v3154, 0
        %v3241 = vsel %vm2839, %v3153, 0
        %v3243 = vsel %vm2329, %v3215, 0
        %v3245 = vsel %vm2329, %v3217, 0
        %3247 = vmatprep.subr.mxu0 %v3182
        %3248 = vmatpush1.msra.mxu0 %v3179
        %3249 = vmatprep.subr.mxu0 %v3186
        %3250 = vmatpush1.msra.mxu0 %v3184
        %3251 = vmatprep.subr.mxu0 %v3190
        %3252 = vmatpush1.msra.mxu0 %v3188
        %3253 = vmatprep.subr.mxu0 %v3194
        %3254 = vmatpush1.msra.mxu0 %v3192
        %3255 = vmatprep.subr.mxu0 %v3198
        %3256 = vmatpush1.msra.mxu0 %v3196
        %3257 = vmatprep.subr.mxu0 %v3202
        %3258 = vmatpush1.msra.mxu0 %v3200
        %3259 = vmatprep.subr.mxu0 %v3206
        %3260 = vmatpush1.msra.mxu0 %v3204
        %3261 = vmatprep.subr.mxu0 %v3210
        %3262 = vmatpush1.msra.mxu0 %v3208
        %3263 = vmatprep.subr.mxu0 %v3214
        %3264 = vmatpush1.msra.mxu0 %v3212
        %3265 = vmatprep.subr.mxu0 %v3218
        %3266 = vmatpush1.msra.mxu0 %v3216
        %3267 = vmatprep.subr.mxu0 %v3245
        %3268 = vmatpush1.msra.mxu0 %v3243
        %3269 = vmatprep.subr.mxu0 0.0
        %3270 = vmatpush1.msra.mxu0 0.0
        %3271 = vmatprep.subr.mxu0 0.0
        %3272 = vmatpush1.msra.mxu0 0.0
        %3273 = vmatprep.subr.mxu0 0.0
        %3274 = vmatpush1.msra.mxu0 0.0
        %3275 = vmatprep.subr.mxu0 0.0
        %3276 = vmatpush1.msra.mxu0 0.0
        %3277 = vmatprep.subr.mxu0 0.0
        %3278 = vmatpush1.msra.mxu0 0.0
        %3279 = vmatprep.subr.mxu0 0.0
        %3280 = vmatpush1.msra.mxu0 0.0
        %3281 = vmatprep.subr.mxu0 0.0
        %3282 = vmatpush1.msra.mxu0 0.0
        %3283 = vmatprep.subr.mxu0 0.0
        %3284 = vmatpush1.msra.mxu0 0.0
        %3285 = vmatprep.subr.mxu0 0.0
        %3286 = vmatpush1.msra.mxu0 0.0
        %3287 = vmatprep.subr.mxu0 0.0
        %3288 = vmatpush1.msra.mxu0 0.0
        %3289 = vmatprep.subr.mxu0 0.0
        %3290 = vmatpush1.msra.mxu0 0.0
        %3291 = vmatprep.subr.mxu0 0.0
        %3292 = vmatpush1.msra.mxu0 0.0
        %3293 = vmatprep.subr.mxu0 0.0
        %3294 = vmatpush1.msra.mxu0 0.0
        %3295 = vmatprep.subr.mxu0 0.0
        %3296 = vmatpush1.msra.mxu0 0.0
        %3297 = vmatprep.subr.mxu0 0.0
        %3298 = vmatpush1.msra.mxu0 0.0
        %3299 = vmatprep.subr.mxu0 0.0
        %3300 = vmatpush1.msra.mxu0 0.0
        %3301 = vmatprep.subr.mxu0 0.0
        %3302 = vmatpush1.msra.mxu0 0.0
        %3303 = vmatprep.subr.mxu0 0.0
        %3304 = vmatpush1.msra.mxu0 0.0
        %3305 = vmatprep.subr.mxu0 0.0
        %3306 = vmatpush1.msra.mxu0 0.0
        %3307 = vmatprep.subr.mxu0 0.0
        %3308 = vmatpush1.msra.mxu0 0.0
        %3309 = vmatprep.subr.mxu0 0.0
        %3310 = vmatpush1.msra.mxu0 0.0
        %3311 = vmatprep.mubr.f32.mxu0 0.0
        %3312 = vmatmul.mubr.f32.gmra.mrb[0].mxu0 %v3239
        %v3313 = vpop.f32.mrb[0].mxu0
        %v3314 = vadd.f32 0.0, %v3313
        %v3315 = vpop.f32.mrb[0].mxu0
        %v3316 = vadd.f32 0.0, %v3315
        %3317 = vmatprep.mubr.f32.mxu0 0.0
        %3318 = vmatmul.mubr.f32.gmra.mrb[0].mxu0 %v3241
        %v3319 = vpop.f32.mrb[0].mxu0
        %v3320 = vadd.f32 0.0, %v3319
        %v3321 = vpop.f32.mrb[0].mxu0
        %v3322 = vadd.f32 0.0, %v3321
        %3323 = vdwg.mxu0
        %v3324 = vadd.f32 %v3125, %v3314
        %v3325 = vadd.f32 %v3126, %v3316
        %v3326 = vadd.f32 %v3127, %v3320
        %v3327 = vadd.f32 %v3128, %v3322
        %v3328 = vld [vmem:[%s5 + $0x2a0] sm:$0xff]
        %v3329 = vld [vmem:[%s5 + $0x2a8] sm:$0xff]
        %v3330 = vld [vmem:[%s5 + $0x2b0] sm:$0xff]
        %v3331 = vld [vmem:[%s5 + $0x2b8] sm:$0xff]
        %v3332 = vld [vmem:[%s5 + $0x2c0] sm:$0xff]
        %v3333 = vld [vmem:[%s5 + $0x2c8] sm:$0xff]
        %v3334 = vld [vmem:[%s5 + $0x2d0] sm:$0xff]
        %v3335 = vld [vmem:[%s5 + $0x2d8] sm:$0xff]
        %v3336 = vld [vmem:[%s5 + $0x2e0] sm:$0xff]
        %v3337 = vld [vmem:[%s5 + $0x2e8] sm:$0xff]
        %v3338 = vld [vmem:[%s5 + $0x2f0] sm:$0xff]
        %v3339 = vld [vmem:[%s5 + $0x2f8] sm:$0xff]
        %v3340 = vld [vmem:[%s5 + $0x300] sm:$0xff]
        %v3341 = vld [vmem:[%s5 + $0x308] sm:$0xff]
        %v3342 = vld [vmem:[%s5 + $0x310] sm:$0xff]
        %v3343 = vld [vmem:[%s5 + $0x318] sm:$0xff]
        %v3344 = vld [vmem:[%s5 + $0x320] sm:$0xff]
        %v3345 = vld [vmem:[%s5 + $0x328] sm:$0xff]
        %v3346 = vld [vmem:[%s5 + $0x330] sm:$0xff]
        %v3347 = vld [vmem:[%s5 + $0x338] sm:$0xff]
        %v3348 = vld [vmem:[%s5 + $0x340] sm:$0xf]
        %v3349 = vld [vmem:[%s5 + $0x348] sm:$0xf]
        %v3350 = vrot.slane %v2703, 4
        %v3351 = vrot.slane %v2704, 4
        %v3352 = vsel %vm2329, %v3350, %v3351
        %v3353 = vsel %vm2839, %v3352, 0
        %v3355 = vsel %vm2839, %v3351, 0
        %v3358 = vsel %vm2329, %v3348, 0
        %v3361 = vsel %vm2329, %v3349, 0
        %3363 = vmatprep.subr.mxu0 %v3329
        %3364 = vmatpush1.msra.mxu0 %v3328
        %3365 = vmatprep.subr.mxu0 %v3331
        %3366 = vmatpush1.msra.mxu0 %v3330
        %3367 = vmatprep.subr.mxu0 %v3333
        %3368 = vmatpush1.msra.mxu0 %v3332
        %3369 = vmatprep.subr.mxu0 %v3335
        %3370 = vmatpush1.msra.mxu0 %v3334
        %3371 = vmatprep.subr.mxu0 %v3337
        %3372 = vmatpush1.msra.mxu0 %v3336
        %3373 = vmatprep.subr.mxu0 %v3339
        %3374 = vmatpush1.msra.mxu0 %v3338
        %3375 = vmatprep.subr.mxu0 %v3341
        %3376 = vmatpush1.msra.mxu0 %v3340
        %3377 = vmatprep.subr.mxu0 %v3343
        %3378 = vmatpush1.msra.mxu0 %v3342
        %3379 = vmatprep.subr.mxu0 %v3345
        %3380 = vmatpush1.msra.mxu0 %v3344
        %3381 = vmatprep.subr.mxu0 %v3347
        %3382 = vmatpush1.msra.mxu0 %v3346
        %3383 = vmatprep.subr.mxu0 %v3361
        %3384 = vmatpush1.msra.mxu0 %v3358
        %3385 = vmatprep.subr.mxu0 0.0
        %3386 = vmatpush1.msra.mxu0 0.0
        %3387 = vmatprep.subr.mxu0 0.0
        %3388 = vmatpush1.msra.mxu0 0.0
        %3389 = vmatprep.subr.mxu0 0.0
        %3390 = vmatpush1.msra.mxu0 0.0
        %3391 = vmatprep.subr.mxu0 0.0
        %3392 = vmatpush1.msra.mxu0 0.0
        %3393 = vmatprep.subr.mxu0 0.0
        %3394 = vmatpush1.msra.mxu0 0.0
        %3395 = vmatprep.subr.mxu0 0.0
        %3396 = vmatpush1.msra.mxu0 0.0
        %3397 = vmatprep.subr.mxu0 0.0
        %3398 = vmatpush1.msra.mxu0 0.0
        %3399 = vmatprep.subr.mxu0 0.0
        %3400 = vmatpush1.msra.mxu0 0.0
        %3401 = vmatprep.subr.mxu0 0.0
        %3402 = vmatpush1.msra.mxu0 0.0
        %3403 = vmatprep.subr.mxu0 0.0
        %3404 = vmatpush1.msra.mxu0 0.0
        %3405 = vmatprep.subr.mxu0 0.0
        %3406 = vmatpush1.msra.mxu0 0.0
        %3407 = vmatprep.subr.mxu0 0.0
        %3408 = vmatpush1.msra.mxu0 0.0
        %3409 = vmatprep.subr.mxu0 0.0
        %3410 = vmatpush1.msra.mxu0 0.0
        %3411 = vmatprep.subr.mxu0 0.0
        %3412 = vmatpush1.msra.mxu0 0.0
        %3413 = vmatprep.subr.mxu0 0.0
        %3414 = vmatpush1.msra.mxu0 0.0
        %3415 = vmatprep.subr.mxu0 0.0
        %3416 = vmatpush1.msra.mxu0 0.0
        %3417 = vmatprep.subr.mxu0 0.0
        %3418 = vmatpush1.msra.mxu0 0.0
        %3419 = vmatprep.subr.mxu0 0.0
        %3420 = vmatpush1.msra.mxu0 0.0
        %3421 = vmatprep.subr.mxu0 0.0
        %3422 = vmatpush1.msra.mxu0 0.0
        %3423 = vmatprep.subr.mxu0 0.0
        %3424 = vmatpush1.msra.mxu0 0.0
        %3425 = vmatprep.subr.mxu0 0.0
        %3426 = vmatpush1.msra.mxu0 0.0
        %3427 = vmatprep.mubr.f32.mxu0 0.0
        %3428 = vmatmul.mubr.f32.gmra.mrb[0].mxu0 %v3353
        %v3429 = vpop.f32.mrb[0].mxu0
        %v3430 = vadd.f32 0.0, %v3429
        %v3431 = vpop.f32.mrb[0].mxu0
        %v3432 = vadd.f32 0.0, %v3431
        %3433 = vmatprep.mubr.f32.mxu0 0.0
        %3434 = vmatmul.mubr.f32.gmra.mrb[0].mxu0 %v3355
        %v3435 = vpop.f32.mrb[0].mxu0
        %v3436 = vadd.f32 0.0, %v3435
        %v3437 = vpop.f32.mrb[0].mxu0
        %v3438 = vadd.f32 0.0, %v3437
        %3439 = vdwg.mxu0
        %v3440 = vadd.f32 %v3324, %v3430
        %v3441 = vadd.f32 %v3325, %v3432
        %v3442 = vadd.f32 %v3326, %v3436
        %v3443 = vadd.f32 %v3327, %v3438
        %v3444 = vld [vmem:[%s6] sm:$0x3]
        %v3446 = vlaneseq
        %v3447 = vshrl.u32 %v3446, 7
        %v3448 = vsub.s32 0, %v3447
        %v3449 = vrot.slane %v3444, %v3448
        %v3450 = vlaneseq
        %v3451 = vshrl.u32 %v3450, 7
        %v3452 = vsub.s32 1, %v3451
        %v3453 = vrot.slane %v3444, %v3452
        %v3456 = vadd.f32 %v3440, %v3449
        %v3457 = vadd.f32 %v3441, %v3453
        %v3458 = vadd.f32 %v3442, %v3449
        %v3459 = vadd.f32 %v3443, %v3453
        %v3460 = vmax.f32 %v3456, 0.0
        %v3461 = vmax.f32 %v3457, 0.0
        %v3462 = vmax.f32 %v3458, 0.0
        %v3463 = vmax.f32 %v3459, 0.0
        %v3464 = vld [vmem:[%s7] sm:$0x1f]
        %vm3465 = vcmask 80896
        %v3467 = vsel %vm3465, %v3464, 0
        %vm3469 = vcmask 1041408
        %v3471 = vsel %vm3469, %v3462, 0
        %v3474 = vsel %vm3469, %v3463, 0
        %3476 = vmatprep.subr.mxu0 %v3461
        %3477 = vmatpush1.msra.mxu0 %v3460
        %3478 = vmatprep.subr.mxu0 %v3474
        %3479 = vmatpush1.msra.mxu0 %v3471
        %3480 = vmatprep.subr.mxu0 0.0
        %3481 = vmatpush1.msra.mxu0 0.0
        %3482 = vmatprep.subr.mxu0 0.0
        %3483 = vmatpush1.msra.mxu0 0.0
        %3484 = vmatprep.subr.mxu0 0.0
        %3485 = vmatpush1.msra.mxu0 0.0
        %3486 = vmatprep.subr.mxu0 0.0
        %3487 = vmatpush1.msra.mxu0 0.0
        %3488 = vmatprep.subr.mxu0 0.0
        %3489 = vmatpush1.msra.mxu0 0.0
        %3490 = vmatprep.subr.mxu0 0.0
        %3491 = vmatpush1.msra.mxu0 0.0
        %3492 = vmatprep.subr.mxu0 0.0
        %3493 = vmatpush1.msra.mxu0 0.0
        %3494 = vmatprep.subr.mxu0 0.0
        %3495 = vmatpush1.msra.mxu0 0.0
        %3496 = vmatprep.subr.mxu0 0.0
        %3497 = vmatpush1.msra.mxu0 0.0
        %3498 = vmatprep.subr.mxu0 0.0
        %3499 = vmatpush1.msra.mxu0 0.0
        %3500 = vmatprep.subr.mxu0 0.0
        %3501 = vmatpush1.msra.mxu0 0.0
        %3502 = vmatprep.subr.mxu0 0.0
        %3503 = vmatpush1.msra.mxu0 0.0
        %3504 = vmatprep.subr.mxu0 0.0
        %3505 = vmatpush1.msra.mxu0 0.0
        %3506 = vmatprep.subr.mxu0 0.0
        %3507 = vmatpush1.msra.mxu0 0.0
        %3508 = vmatprep.subr.mxu0 0.0
        %3509 = vmatpush1.msra.mxu0 0.0
        %3510 = vmatprep.subr.mxu0 0.0
        %3511 = vmatpush1.msra.mxu0 0.0
        %3512 = vmatprep.subr.mxu0 0.0
        %3513 = vmatpush1.msra.mxu0 0.0
        %3514 = vmatprep.subr.mxu0 0.0
        %3515 = vmatpush1.msra.mxu0 0.0
        %3516 = vmatprep.subr.mxu0 0.0
        %3517 = vmatpush1.msra.mxu0 0.0
        %3518 = vmatprep.subr.mxu0 0.0
        %3519 = vmatpush1.msra.mxu0 0.0
        %3520 = vmatprep.subr.mxu0 0.0
        %3521 = vmatpush1.msra.mxu0 0.0
        %3522 = vmatprep.subr.mxu0 0.0
        %3523 = vmatpush1.msra.mxu0 0.0
        %3524 = vmatprep.subr.mxu0 0.0
        %3525 = vmatpush1.msra.mxu0 0.0
        %3526 = vmatprep.subr.mxu0 0.0
        %3527 = vmatpush1.msra.mxu0 0.0
        %3528 = vmatprep.subr.mxu0 0.0
        %3529 = vmatpush1.msra.mxu0 0.0
        %3530 = vmatprep.subr.mxu0 0.0
        %3531 = vmatpush1.msra.mxu0 0.0
        %3532 = vmatprep.subr.mxu0 0.0
        %3533 = vmatpush1.msra.mxu0 0.0
        %3534 = vmatprep.subr.mxu0 0.0
        %3535 = vmatpush1.msra.mxu0 0.0
        %3536 = vmatprep.subr.mxu0 0.0
        %3537 = vmatpush1.msra.mxu0 0.0
        %3538 = vmatprep.subr.mxu0 0.0
        %3539 = vmatpush1.msra.mxu0 0.0
        %3540 = vmatprep.mubr.f32.mxu0 0.0
        %3541 = vmatmul.mubr.f32.gmra.mrb[0].mxu0 %v3467
        %v3542 = vpop.f32.mrb[0].mxu0
        %v3543 = vadd.f32 0.0, %v3542
        %v3544 = vpop.f32.mrb[0].mxu0
        %v3545 = vadd.f32 0.0, %v3544
        %3546 = vdwg.mxu0
        %s3547 = scalar_lea.vmem %s7, 8
        %v3548 = vld [vmem:[%s3547] sm:$0x1f]
        %v3550 = vsel %vm3465, %v3548, 0
        %3552 = vmatprep.subr.mxu0 %v3461
        %3553 = vmatpush1.msra.mxu0 %v3460
        %3554 = vmatprep.subr.mxu0 %v3474
        %3555 = vmatpush1.msra.mxu0 %v3471
        %3556 = vmatprep.subr.mxu0 0.0
        %3557 = vmatpush1.msra.mxu0 0.0
        %3558 = vmatprep.subr.mxu0 0.0
        %3559 = vmatpush1.msra.mxu0 0.0
        %3560 = vmatprep.subr.mxu0 0.0
        %3561 = vmatpush1.msra.mxu0 0.0
        %3562 = vmatprep.subr.mxu0 0.0
        %3563 = vmatpush1.msra.mxu0 0.0
        %3564 = vmatprep.subr.mxu0 0.0
        %3565 = vmatpush1.msra.mxu0 0.0
        %3566 = vmatprep.subr.mxu0 0.0
        %3567 = vmatpush1.msra.mxu0 0.0
        %3568 = vmatprep.subr.mxu0 0.0
        %3569 = vmatpush1.msra.mxu0 0.0
        %3570 = vmatprep.subr.mxu0 0.0
        %3571 = vmatpush1.msra.mxu0 0.0
        %3572 = vmatprep.subr.mxu0 0.0
        %3573 = vmatpush1.msra.mxu0 0.0
        %3574 = vmatprep.subr.mxu0 0.0
        %3575 = vmatpush1.msra.mxu0 0.0
        %3576 = vmatprep.subr.mxu0 0.0
        %3577 = vmatpush1.msra.mxu0 0.0
        %3578 = vmatprep.subr.mxu0 0.0
        %3579 = vmatpush1.msra.mxu0 0.0
        %3580 = vmatprep.subr.mxu0 0.0
        %3581 = vmatpush1.msra.mxu0 0.0
        %3582 = vmatprep.subr.mxu0 0.0
        %3583 = vmatpush1.msra.mxu0 0.0
        %3584 = vmatprep.subr.mxu0 0.0
        %3585 = vmatpush1.msra.mxu0 0.0
        %3586 = vmatprep.subr.mxu0 0.0
        %3587 = vmatpush1.msra.mxu0 0.0
        %3588 = vmatprep.subr.mxu0 0.0
        %3589 = vmatpush1.msra.mxu0 0.0
        %3590 = vmatprep.subr.mxu0 0.0
        %3591 = vmatpush1.msra.mxu0 0.0
        %3592 = vmatprep.subr.mxu0 0.0
        %3593 = vmatpush1.msra.mxu0 0.0
        %3594 = vmatprep.subr.mxu0 0.0
        %3595 = vmatpush1.msra.mxu0 0.0
        %3596 = vmatprep.subr.mxu0 0.0
        %3597 = vmatpush1.msra.mxu0 0.0
        %3598 = vmatprep.subr.mxu0 0.0
        %3599 = vmatpush1.msra.mxu0 0.0
        %3600 = vmatprep.subr.mxu0 0.0
        %3601 = vmatpush1.msra.mxu0 0.0
        %3602 = vmatprep.subr.mxu0 0.0
        %3603 = vmatpush1.msra.mxu0 0.0
        %3604 = vmatprep.subr.mxu0 0.0
        %3605 = vmatpush1.msra.mxu0 0.0
        %3606 = vmatprep.subr.mxu0 0.0
        %3607 = vmatpush1.msra.mxu0 0.0
        %3608 = vmatprep.subr.mxu0 0.0
        %3609 = vmatpush1.msra.mxu0 0.0
        %3610 = vmatprep.subr.mxu0 0.0
        %3611 = vmatpush1.msra.mxu0 0.0
        %3612 = vmatprep.subr.mxu0 0.0
        %3613 = vmatpush1.msra.mxu0 0.0
        %3614 = vmatprep.subr.mxu0 0.0
        %3615 = vmatpush1.msra.mxu0 0.0
        %3616 = vmatprep.mubr.f32.mxu0 0.0
        %3617 = vmatmul.mubr.f32.gmra.mrb[0].mxu0 %v3550
        %v3618 = vpop.f32.mrb[0].mxu0
        %v3619 = vadd.f32 0.0, %v3618
        %v3620 = vpop.f32.mrb[0].mxu0
        %v3621 = vadd.f32 0.0, %v3620
        %3622 = vdwg.mxu0
        %v3623 = vmax.f32 %v3543, %v3619
        %v3624 = vmax.f32 %v3545, %v3621
        %v3625 = vld [vmem:[%s8] sm:$0xff]
        %v3626 = vld [vmem:[%s8 + $0x8] sm:$0xff]
        %v3627 = vld [vmem:[%s8 + $0x10] sm:$0xff]
        %v3628 = vld [vmem:[%s8 + $0x18] sm:$0xff]
        %v3629 = vld [vmem:[%s8 + $0x20] sm:$0xff]
        %v3630 = vld [vmem:[%s8 + $0x28] sm:$0xff]
        %v3631 = vld [vmem:[%s8 + $0x30] sm:$0xff]
        %v3632 = vld [vmem:[%s8 + $0x38] sm:$0xff]
        %v3633 = vld [vmem:[%s8 + $0x40] sm:$0xff]
        %v3634 = vld [vmem:[%s8 + $0x48] sm:$0xff]
        %v3635 = vld [vmem:[%s8 + $0x50] sm:$0xff]
        %v3636 = vld [vmem:[%s8 + $0x58] sm:$0xff]
        %v3637 = vld [vmem:[%s8 + $0x60] sm:$0xff]
        %v3638 = vld [vmem:[%s8 + $0x68] sm:$0xff]
        %v3639 = vld [vmem:[%s8 + $0x70] sm:$0xff]
        %v3640 = vld [vmem:[%s8 + $0x78] sm:$0xff]
        %v3641 = vld [vmem:[%s8 + $0x80] sm:$0xff]
        %v3642 = vld [vmem:[%s8 + $0x88] sm:$0xff]
        %v3643 = vld [vmem:[%s8 + $0x90] sm:$0xff]
        %v3644 = vld [vmem:[%s8 + $0x98] sm:$0xff]
        %v3646 = vsel %vm516, %v3624, 0
        %3648 = vmatprep.subr.mxu0 0.0
        %3649 = vmatpush1.msra.mxu0 %v3625
        %3650 = vmatprep.subr.mxu0 0.0
        %3651 = vmatpush1.msra.mxu0 %v3626
        %3652 = vmatprep.subr.mxu0 0.0
        %3653 = vmatpush1.msra.mxu0 %v3627
        %3654 = vmatprep.subr.mxu0 0.0
        %3655 = vmatpush1.msra.mxu0 %v3628
        %3656 = vmatprep.subr.mxu0 0.0
        %3657 = vmatpush1.msra.mxu0 %v3629
        %3658 = vmatprep.subr.mxu0 0.0
        %3659 = vmatpush1.msra.mxu0 %v3630
        %3660 = vmatprep.subr.mxu0 0.0
        %3661 = vmatpush1.msra.mxu0 %v3631
        %3662 = vmatprep.subr.mxu0 0.0
        %3663 = vmatpush1.msra.mxu0 %v3632
        %3664 = vmatprep.subr.mxu0 0.0
        %3665 = vmatpush1.msra.mxu0 %v3633
        %3666 = vmatprep.subr.mxu0 0.0
        %3667 = vmatpush1.msra.mxu0 %v3634
        %3668 = vmatprep.subr.mxu0 0.0
        %3669 = vmatpush1.msra.mxu0 %v3635
        %3670 = vmatprep.subr.mxu0 0.0
        %3671 = vmatpush1.msra.mxu0 %v3636
        %3672 = vmatprep.subr.mxu0 0.0
        %3673 = vmatpush1.msra.mxu0 %v3637
        %3674 = vmatprep.subr.mxu0 0.0
        %3675 = vmatpush1.msra.mxu0 %v3638
        %3676 = vmatprep.subr.mxu0 0.0
        %3677 = vmatpush1.msra.mxu0 %v3639
        %3678 = vmatprep.subr.mxu0 0.0
        %3679 = vmatpush1.msra.mxu0 %v3640
        %3680 = vmatprep.subr.mxu0 0.0
        %3681 = vmatpush1.msra.mxu0 %v3641
        %3682 = vmatprep.subr.mxu0 0.0
        %3683 = vmatpush1.msra.mxu0 %v3642
        %3684 = vmatprep.subr.mxu0 0.0
        %3685 = vmatpush1.msra.mxu0 %v3643
        %3686 = vmatprep.subr.mxu0 0.0
        %3687 = vmatpush1.msra.mxu0 %v3644
        %3688 = vmatprep.subr.mxu0 0.0
        %3689 = vmatpush1.msra.mxu0 0.0
        %3690 = vmatprep.subr.mxu0 0.0
        %3691 = vmatpush1.msra.mxu0 0.0
        %3692 = vmatprep.subr.mxu0 0.0
        %3693 = vmatpush1.msra.mxu0 0.0
        %3694 = vmatprep.subr.mxu0 0.0
        %3695 = vmatpush1.msra.mxu0 0.0
        %3696 = vmatprep.subr.mxu0 0.0
        %3697 = vmatpush1.msra.mxu0 0.0
        %3698 = vmatprep.subr.mxu0 0.0
        %3699 = vmatpush1.msra.mxu0 0.0
        %3700 = vmatprep.subr.mxu0 0.0
        %3701 = vmatpush1.msra.mxu0 0.0
        %3702 = vmatprep.subr.mxu0 0.0
        %3703 = vmatpush1.msra.mxu0 0.0
        %3704 = vmatprep.subr.mxu0 0.0
        %3705 = vmatpush1.msra.mxu0 0.0
        %3706 = vmatprep.subr.mxu0 0.0
        %3707 = vmatpush1.msra.mxu0 0.0
        %3708 = vmatprep.subr.mxu0 0.0
        %3709 = vmatpush1.msra.mxu0 0.0
        %3710 = vmatprep.subr.mxu0 0.0
        %3711 = vmatpush1.msra.mxu0 0.0
        %3712 = vmatprep.mubr.f32.mxu0 %v3646
        %3713 = vmatmul.mubr.f32.gmra.mrb[0].mxu0 %v3623
        %v3714 = vpop.f32.mrb[0].mxu0
        %v3715 = vadd.f32 0.0, %v3714
        %v3716 = vpop.f32.mrb[0].mxu0
        %3717 = vdwg.mxu0
        %s3718 = scalar_lea.vmem %s8, 160
        %v3719 = vld [vmem:[%s3718] sm:$0xff]
        %v3720 = vld [vmem:[%s3718 + $0x8] sm:$0xff]
        %v3721 = vld [vmem:[%s3718 + $0x10] sm:$0xff]
        %v3722 = vld [vmem:[%s3718 + $0x18] sm:$0xff]
        %v3723 = vld [vmem:[%s3718 + $0x20] sm:$0xff]
        %v3724 = vld [vmem:[%s3718 + $0x28] sm:$0xff]
        %v3725 = vld [vmem:[%s3718 + $0x30] sm:$0xff]
        %v3726 = vld [vmem:[%s3718 + $0x38] sm:$0xff]
        %v3727 = vld [vmem:[%s3718 + $0x40] sm:$0xff]
        %v3728 = vld [vmem:[%s3718 + $0x48] sm:$0xff]
        %v3729 = vld [vmem:[%s3718 + $0x50] sm:$0xff]
        %v3730 = vld [vmem:[%s3718 + $0x58] sm:$0xff]
        %v3731 = vld [vmem:[%s3718 + $0x60] sm:$0xff]
        %v3732 = vld [vmem:[%s3718 + $0x68] sm:$0xff]
        %v3733 = vld [vmem:[%s3718 + $0x70] sm:$0xff]
        %v3734 = vld [vmem:[%s3718 + $0x78] sm:$0xff]
        %v3735 = vld [vmem:[%s3718 + $0x80] sm:$0xff]
        %v3736 = vld [vmem:[%s3718 + $0x88] sm:$0xff]
        %v3737 = vld [vmem:[%s3718 + $0x90] sm:$0xff]
        %v3738 = vld [vmem:[%s3718 + $0x98] sm:$0xff]
        %3739 = vmatprep.subr.mxu0 0.0
        %3740 = vmatpush1.msra.mxu0 %v3719
        %3741 = vmatprep.subr.mxu0 0.0
        %3742 = vmatpush1.msra.mxu0 %v3720
        %3743 = vmatprep.subr.mxu0 0.0
        %3744 = vmatpush1.msra.mxu0 %v3721
        %3745 = vmatprep.subr.mxu0 0.0
        %3746 = vmatpush1.msra.mxu0 %v3722
        %3747 = vmatprep.subr.mxu0 0.0
        %3748 = vmatpush1.msra.mxu0 %v3723
        %3749 = vmatprep.subr.mxu0 0.0
        %3750 = vmatpush1.msra.mxu0 %v3724
        %3751 = vmatprep.subr.mxu0 0.0
        %3752 = vmatpush1.msra.mxu0 %v3725
        %3753 = vmatprep.subr.mxu0 0.0
        %3754 = vmatpush1.msra.mxu0 %v3726
        %3755 = vmatprep.subr.mxu0 0.0
        %3756 = vmatpush1.msra.mxu0 %v3727
        %3757 = vmatprep.subr.mxu0 0.0
        %3758 = vmatpush1.msra.mxu0 %v3728
        %3759 = vmatprep.subr.mxu0 0.0
        %3760 = vmatpush1.msra.mxu0 %v3729
        %3761 = vmatprep.subr.mxu0 0.0
        %3762 = vmatpush1.msra.mxu0 %v3730
        %3763 = vmatprep.subr.mxu0 0.0
        %3764 = vmatpush1.msra.mxu0 %v3731
        %3765 = vmatprep.subr.mxu0 0.0
        %3766 = vmatpush1.msra.mxu0 %v3732
        %3767 = vmatprep.subr.mxu0 0.0
        %3768 = vmatpush1.msra.mxu0 %v3733
        %3769 = vmatprep.subr.mxu0 0.0
        %3770 = vmatpush1.msra.mxu0 %v3734
        %3771 = vmatprep.subr.mxu0 0.0
        %3772 = vmatpush1.msra.mxu0 %v3735
        %3773 = vmatprep.subr.mxu0 0.0
        %3774 = vmatpush1.msra.mxu0 %v3736
        %3775 = vmatprep.subr.mxu0 0.0
        %3776 = vmatpush1.msra.mxu0 %v3737
        %3777 = vmatprep.subr.mxu0 0.0
        %3778 = vmatpush1.msra.mxu0 %v3738
        %3779 = vmatprep.subr.mxu0 0.0
        %3780 = vmatpush1.msra.mxu0 0.0
        %3781 = vmatprep.subr.mxu0 0.0
        %3782 = vmatpush1.msra.mxu0 0.0
        %3783 = vmatprep.subr.mxu0 0.0
        %3784 = vmatpush1.msra.mxu0 0.0
        %3785 = vmatprep.subr.mxu0 0.0
        %3786 = vmatpush1.msra.mxu0 0.0
        %3787 = vmatprep.subr.mxu0 0.0
        %3788 = vmatpush1.msra.mxu0 0.0
        %3789 = vmatprep.subr.mxu0 0.0
        %3790 = vmatpush1.msra.mxu0 0.0
        %3791 = vmatprep.subr.mxu0 0.0
        %3792 = vmatpush1.msra.mxu0 0.0
        %3793 = vmatprep.subr.mxu0 0.0
        %3794 = vmatpush1.msra.mxu0 0.0
        %3795 = vmatprep.subr.mxu0 0.0
        %3796 = vmatpush1.msra.mxu0 0.0
        %3797 = vmatprep.subr.mxu0 0.0
        %3798 = vmatpush1.msra.mxu0 0.0
        %3799 = vmatprep.subr.mxu0 0.0
        %3800 = vmatpush1.msra.mxu0 0.0
        %3801 = vmatprep.subr.mxu0 0.0
        %3802 = vmatpush1.msra.mxu0 0.0
        %3803 = vmatprep.mubr.f32.mxu0 %v3646
        %3804 = vmatmul.mubr.f32.gmra.mrb[0].mxu0 %v3623
        %v3805 = vpop.f32.mrb[0].mxu0
        %v3806 = vadd.f32 0.0, %v3805
        %v3807 = vpop.f32.mrb[0].mxu0
        %3808 = vdwg.mxu0
        %v3809 = vmax.f32 %v3715, %v3806
        %v3810 = vld [vmem:[%s10] sm:$0x1]
        %v3811 = vld [vmem:[%s9] sm:$0xff]
        %v3812 = vld [vmem:[%s9 + $0x8] sm:$0xff]
        %v3813 = vld [vmem:[%s9 + $0x10] sm:$0xff]
        %v3814 = vld [vmem:[%s9 + $0x18] sm:$0xff]
        %v3815 = vld [vmem:[%s9 + $0x20] sm:$0xff]
        %v3816 = vld [vmem:[%s9 + $0x28] sm:$0xff]
        %v3817 = vld [vmem:[%s9 + $0x30] sm:$0xff]
        %v3818 = vld [vmem:[%s9 + $0x38] sm:$0xff]
        %v3819 = vld [vmem:[%s9 + $0x40] sm:$0xff]
        %v3820 = vld [vmem:[%s9 + $0x48] sm:$0xff]
        %vm3821 = vcmask 654336
        %v3823 = vsel %vm3821, %v3809, 0
        %3825 = vmatprep.subr.mxu0 0.0
        %3826 = vmatpush1.msra.mxu0 %v3811
        %3827 = vmatprep.subr.mxu0 0.0
        %3828 = vmatpush1.msra.mxu0 %v3812
        %3829 = vmatprep.subr.mxu0 0.0
        %3830 = vmatpush1.msra.mxu0 %v3813
        %3831 = vmatprep.subr.mxu0 0.0
        %3832 = vmatpush1.msra.mxu0 %v3814
        %3833 = vmatprep.subr.mxu0 0.0
        %3834 = vmatpush1.msra.mxu0 %v3815
        %3835 = vmatprep.subr.mxu0 0.0
        %3836 = vmatpush1.msra.mxu0 %v3816
        %3837 = vmatprep.subr.mxu0 0.0
        %3838 = vmatpush1.msra.mxu0 %v3817
        %3839 = vmatprep.subr.mxu0 0.0
        %3840 = vmatpush1.msra.mxu0 %v3818
        %3841 = vmatprep.subr.mxu0 0.0
        %3842 = vmatpush1.msra.mxu0 %v3819
        %3843 = vmatprep.subr.mxu0 0.0
        %3844 = vmatpush1.msra.mxu0 %v3820
        %3845 = vmatprep.subr.mxu0 0.0
        %3846 = vmatpush1.msra.mxu0 0.0
        %3847 = vmatprep.subr.mxu0 0.0
        %3848 = vmatpush1.msra.mxu0 0.0
        %3849 = vmatprep.subr.mxu0 0.0
        %3850 = vmatpush1.msra.mxu0 0.0
        %3851 = vmatprep.subr.mxu0 0.0
        %3852 = vmatpush1.msra.mxu0 0.0
        %3853 = vmatprep.subr.mxu0 0.0
        %3854 = vmatpush1.msra.mxu0 0.0
        %3855 = vmatprep.subr.mxu0 0.0
        %3856 = vmatpush1.msra.mxu0 0.0
        %3857 = vmatprep.subr.mxu0 0.0
        %3858 = vmatpush1.msra.mxu0 0.0
        %3859 = vmatprep.subr.mxu0 0.0
        %3860 = vmatpush1.msra.mxu0 0.0
        %3861 = vmatprep.subr.mxu0 0.0
        %3862 = vmatpush1.msra.mxu0 0.0
        %3863 = vmatprep.subr.mxu0 0.0
        %3864 = vmatpush1.msra.mxu0 0.0
        %3865 = vmatprep.subr.mxu0 0.0
        %3866 = vmatpush1.msra.mxu0 0.0
        %3867 = vmatprep.subr.mxu0 0.0
        %3868 = vmatpush1.msra.mxu0 0.0
        %3869 = vmatprep.subr.mxu0 0.0
        %3870 = vmatpush1.msra.mxu0 0.0
        %3871 = vmatprep.subr.mxu0 0.0
        %3872 = vmatpush1.msra.mxu0 0.0
        %3873 = vmatprep.subr.mxu0 0.0
        %3874 = vmatpush1.msra.mxu0 0.0
        %3875 = vmatprep.subr.mxu0 0.0
        %3876 = vmatpush1.msra.mxu0 0.0
        %3877 = vmatprep.subr.mxu0 0.0
        %3878 = vmatpush1.msra.mxu0 0.0
        %3879 = vmatprep.subr.mxu0 0.0
        %3880 = vmatpush1.msra.mxu0 0.0
        %3881 = vmatprep.subr.mxu0 0.0
        %3882 = vmatpush1.msra.mxu0 0.0
        %3883 = vmatprep.subr.mxu0 0.0
        %3884 = vmatpush1.msra.mxu0 0.0
        %3885 = vmatprep.subr.mxu0 0.0
        %3886 = vmatpush1.msra.mxu0 0.0
        %3887 = vmatprep.subr.mxu0 0.0
        %3888 = vmatpush1.msra.mxu0 0.0
        %3889 = vmatprep.mubr.f32.mxu0 0.0
        %3890 = vmatmul.mubr.f32.gmra.mrb[0].mxu0 %v3823
        %v3891 = vpop.f32.mrb[0].mxu0
        %v3892 = vadd.f32 0.0, %v3891
        %v3893 = vpop.f32.mrb[0].mxu0
        %3894 = vdwg.mxu0
        %v3895 = vadd.f32 %v3810, %v3892
        %v3896 = vld [vmem:[%s9 + $0x50] sm:$0xff]
        %v3897 = vld [vmem:[%s9 + $0x58] sm:$0xff]
        %v3898 = vld [vmem:[%s9 + $0x60] sm:$0xff]
        %v3899 = vld [vmem:[%s9 + $0x68] sm:$0xff]
        %v3900 = vld [vmem:[%s9 + $0x70] sm:$0xff]
        %v3901 = vld [vmem:[%s9 + $0x78] sm:$0xff]
        %v3902 = vld [vmem:[%s9 + $0x80] sm:$0xff]
        %v3903 = vld [vmem:[%s9 + $0x88] sm:$0xff]
        %v3904 = vld [vmem:[%s9 + $0x90] sm:$0xff]
        %v3905 = vld [vmem:[%s9 + $0x98] sm:$0xff]
        %v3906 = vrot.slane %v3809, 1
        %v3907 = vsel %vm3821, %v3906, 0
        %3909 = vmatprep.subr.mxu0 0.0
        %3910 = vmatpush1.msra.mxu0 %v3896
        %3911 = vmatprep.subr.mxu0 0.0
        %3912 = vmatpush1.msra.mxu0 %v3897
        %3913 = vmatprep.subr.mxu0 0.0
        %3914 = vmatpush1.msra.mxu0 %v3898
        %3915 = vmatprep.subr.mxu0 0.0
        %3916 = vmatpush1.msra.mxu0 %v3899
        %3917 = vmatprep.subr.mxu0 0.0
        %3918 = vmatpush1.msra.mxu0 %v3900
        %3919 = vmatprep.subr.mxu0 0.0
        %3920 = vmatpush1.msra.mxu0 %v3901
        %3921 = vmatprep.subr.mxu0 0.0
        %3922 = vmatpush1.msra.mxu0 %v3902
        %3923 = vmatprep.subr.mxu0 0.0
        %3924 = vmatpush1.msra.mxu0 %v3903
        %3925 = vmatprep.subr.mxu0 0.0
        %3926 = vmatpush1.msra.mxu0 %v3904
        %3927 = vmatprep.subr.mxu0 0.0
        %3928 = vmatpush1.msra.mxu0 %v3905
        %3929 = vmatprep.subr.mxu0 0.0
        %3930 = vmatpush1.msra.mxu0 0.0
        %3931 = vmatprep.subr.mxu0 0.0
        %3932 = vmatpush1.msra.mxu0 0.0
        %3933 = vmatprep.subr.mxu0 0.0
        %3934 = vmatpush1.msra.mxu0 0.0
        %3935 = vmatprep.subr.mxu0 0.0
        %3936 = vmatpush1.msra.mxu0 0.0
        %3937 = vmatprep.subr.mxu0 0.0
        %3938 = vmatpush1.msra.mxu0 0.0
        %3939 = vmatprep.subr.mxu0 0.0
        %3940 = vmatpush1.msra.mxu0 0.0
        %3941 = vmatprep.subr.mxu0 0.0
        %3942 = vmatpush1.msra.mxu0 0.0
        %3943 = vmatprep.subr.mxu0 0.0
        %3944 = vmatpush1.msra.mxu0 0.0
        %3945 = vmatprep.subr.mxu0 0.0
        %3946 = vmatpush1.msra.mxu0 0.0
        %3947 = vmatprep.subr.mxu0 0.0
        %3948 = vmatpush1.msra.mxu0 0.0
        %3949 = vmatprep.subr.mxu0 0.0
        %3950 = vmatpush1.msra.mxu0 0.0
        %3951 = vmatprep.subr.mxu0 0.0
        %3952 = vmatpush1.msra.mxu0 0.0
        %3953 = vmatprep.subr.mxu0 0.0
        %3954 = vmatpush1.msra.mxu0 0.0
        %3955 = vmatprep.subr.mxu0 0.0
        %3956 = vmatpush1.msra.mxu0 0.0
        %3957 = vmatprep.subr.mxu0 0.0
        %3958 = vmatpush1.msra.mxu0 0.0
        %3959 = vmatprep.subr.mxu0 0.0
        %3960 = vmatpush1.msra.mxu0 0.0
        %3961 = vmatprep.subr.mxu0 0.0
        %3962 = vmatpush1.msra.mxu0 0.0
        %3963 = vmatprep.subr.mxu0 0.0
        %3964 = vmatpush1.msra.mxu0 0.0
        %3965 = vmatprep.subr.mxu0 0.0
        %3966 = vmatpush1.msra.mxu0 0.0
        %3967 = vmatprep.subr.mxu0 0.0
        %3968 = vmatpush1.msra.mxu0 0.0
        %3969 = vmatprep.subr.mxu0 0.0
        %3970 = vmatpush1.msra.mxu0 0.0
        %3971 = vmatprep.subr.mxu0 0.0
        %3972 = vmatpush1.msra.mxu0 0.0
        %3973 = vmatprep.mubr.f32.mxu0 0.0
        %3974 = vmatmul.mubr.f32.gmra.mrb[0].mxu0 %v3907
        %v3975 = vpop.f32.mrb[0].mxu0
        %v3976 = vadd.f32 0.0, %v3975
        %v3977 = vpop.f32.mrb[0].mxu0
        %3978 = vdwg.mxu0
        %v3979 = vadd.f32 %v3895, %v3976
        %v3980 = vld [vmem:[%s9 + $0xa0] sm:$0xff]
        %v3981 = vld [vmem:[%s9 + $0xa8] sm:$0xff]
        %v3982 = vld [vmem:[%s9 + $0xb0] sm:$0xff]
        %v3983 = vld [vmem:[%s9 + $0xb8] sm:$0xff]
        %v3984 = vld [vmem:[%s9 + $0xc0] sm:$0xff]
        %v3985 = vld [vmem:[%s9 + $0xc8] sm:$0xff]
        %v3986 = vld [vmem:[%s9 + $0xd0] sm:$0xff]
        %v3987 = vld [vmem:[%s9 + $0xd8] sm:$0xff]
        %v3988 = vld [vmem:[%s9 + $0xe0] sm:$0xff]
        %v3989 = vld [vmem:[%s9 + $0xe8] sm:$0xff]
        %v3990 = vrot.slane %v3809, 2
        %v3991 = vsel %vm3821, %v3990, 0
        %3993 = vmatprep.subr.mxu0 0.0
        %3994 = vmatpush1.msra.mxu0 %v3980
        %3995 = vmatprep.subr.mxu0 0.0
        %3996 = vmatpush1.msra.mxu0 %v3981
        %3997 = vmatprep.subr.mxu0 0.0
        %3998 = vmatpush1.msra.mxu0 %v3982
        %3999 = vmatprep.subr.mxu0 0.0
        %4000 = vmatpush1.msra.mxu0 %v3983
        %4001 = vmatprep.subr.mxu0 0.0
        %4002 = vmatpush1.msra.mxu0 %v3984
        %4003 = vmatprep.subr.mxu0 0.0
        %4004 = vmatpush1.msra.mxu0 %v3985
        %4005 = vmatprep.subr.mxu0 0.0
        %4006 = vmatpush1.msra.mxu0 %v3986
        %4007 = vmatprep.subr.mxu0 0.0
        %4008 = vmatpush1.msra.mxu0 %v3987
        %4009 = vmatprep.subr.mxu0 0.0
        %4010 = vmatpush1.msra.mxu0 %v3988
        %4011 = vmatprep.subr.mxu0 0.0
        %4012 = vmatpush1.msra.mxu0 %v3989
        %4013 = vmatprep.subr.mxu0 0.0
        %4014 = vmatpush1.msra.mxu0 0.0
        %4015 = vmatprep.subr.mxu0 0.0
        %4016 = vmatpush1.msra.mxu0 0.0
        %4017 = vmatprep.subr.mxu0 0.0
        %4018 = vmatpush1.msra.mxu0 0.0
        %4019 = vmatprep.subr.mxu0 0.0
        %4020 = vmatpush1.msra.mxu0 0.0
        %4021 = vmatprep.subr.mxu0 0.0
        %4022 = vmatpush1.msra.mxu0 0.0
        %4023 = vmatprep.subr.mxu0 0.0
        %4024 = vmatpush1.msra.mxu0 0.0
        %4025 = vmatprep.subr.mxu0 0.0
        %4026 = vmatpush1.msra.mxu0 0.0
        %4027 = vmatprep.subr.mxu0 0.0
        %4028 = vmatpush1.msra.mxu0 0.0
        %4029 = vmatprep.subr.mxu0 0.0
        %4030 = vmatpush1.msra.mxu0 0.0
        %4031 = vmatprep.subr.mxu0 0.0
        %4032 = vmatpush1.msra.mxu0 0.0
        %4033 = vmatprep.subr.mxu0 0.0
        %4034 = vmatpush1.msra.mxu0 0.0
        %4035 = vmatprep.subr.mxu0 0.0
        %4036 = vmatpush1.msra.mxu0 0.0
        %4037 = vmatprep.subr.mxu0 0.0
        %4038 = vmatpush1.msra.mxu0 0.0
        %4039 = vmatprep.subr.mxu0 0.0
        %4040 = vmatpush1.msra.mxu0 0.0
        %4041 = vmatprep.subr.mxu0 0.0
        %4042 = vmatpush1.msra.mxu0 0.0
        %4043 = vmatprep.subr.mxu0 0.0
        %4044 = vmatpush1.msra.mxu0 0.0
        %4045 = vmatprep.subr.mxu0 0.0
        %4046 = vmatpush1.msra.mxu0 0.0
        %4047 = vmatprep.subr.mxu0 0.0
        %4048 = vmatpush1.msra.mxu0 0.0
        %4049 = vmatprep.subr.mxu0 0.0
        %4050 = vmatpush1.msra.mxu0 0.0
        %4051 = vmatprep.subr.mxu0 0.0
        %4052 = vmatpush1.msra.mxu0 0.0
        %4053 = vmatprep.subr.mxu0 0.0
        %4054 = vmatpush1.msra.mxu0 0.0
        %4055 = vmatprep.subr.mxu0 0.0
        %4056 = vmatpush1.msra.mxu0 0.0
        %4057 = vmatprep.mubr.f32.mxu0 0.0
        %4058 = vmatmul.mubr.f32.gmra.mrb[0].mxu0 %v3991
        %v4059 = vpop.f32.mrb[0].mxu0
        %v4060 = vadd.f32 0.0, %v4059
        %v4061 = vpop.f32.mrb[0].mxu0
        %4062 = vdwg.mxu0
        %v4063 = vadd.f32 %v3979, %v4060
        %v4064 = vld [vmem:[%s9 + $0xf0] sm:$0xff]
        %v4065 = vld [vmem:[%s9 + $0xf8] sm:$0xff]
        %v4066 = vld [vmem:[%s9 + $0x100] sm:$0xff]
        %v4067 = vld [vmem:[%s9 + $0x108] sm:$0xff]
        %v4068 = vld [vmem:[%s9 + $0x110] sm:$0xff]
        %v4069 = vld [vmem:[%s9 + $0x118] sm:$0xff]
        %v4070 = vld [vmem:[%s9 + $0x120] sm:$0xff]
        %v4071 = vld [vmem:[%s9 + $0x128] sm:$0xff]
        %v4072 = vld [vmem:[%s9 + $0x130] sm:$0xff]
        %v4073 = vld [vmem:[%s9 + $0x138] sm:$0xff]
        %v4074 = vrot.slane %v3809, 3
        %v4075 = vsel %vm3821, %v4074, 0
        %4077 = vmatprep.subr.mxu0 0.0
        %4078 = vmatpush1.msra.mxu0 %v4064
        %4079 = vmatprep.subr.mxu0 0.0
        %4080 = vmatpush1.msra.mxu0 %v4065
        %4081 = vmatprep.subr.mxu0 0.0
        %4082 = vmatpush1.msra.mxu0 %v4066
        %4083 = vmatprep.subr.mxu0 0.0
        %4084 = vmatpush1.msra.mxu0 %v4067
        %4085 = vmatprep.subr.mxu0 0.0
        %4086 = vmatpush1.msra.mxu0 %v4068
        %4087 = vmatprep.subr.mxu0 0.0
        %4088 = vmatpush1.msra.mxu0 %v4069
        %4089 = vmatprep.subr.mxu0 0.0
        %4090 = vmatpush1.msra.mxu0 %v4070
        %4091 = vmatprep.subr.mxu0 0.0
        %4092 = vmatpush1.msra.mxu0 %v4071
        %4093 = vmatprep.subr.mxu0 0.0
        %4094 = vmatpush1.msra.mxu0 %v4072
        %4095 = vmatprep.subr.mxu0 0.0
        %4096 = vmatpush1.msra.mxu0 %v4073
        %4097 = vmatprep.subr.mxu0 0.0
        %4098 = vmatpush1.msra.mxu0 0.0
        %4099 = vmatprep.subr.mxu0 0.0
        %4100 = vmatpush1.msra.mxu0 0.0
        %4101 = vmatprep.subr.mxu0 0.0
        %4102 = vmatpush1.msra.mxu0 0.0
        %4103 = vmatprep.subr.mxu0 0.0
        %4104 = vmatpush1.msra.mxu0 0.0
        %4105 = vmatprep.subr.mxu0 0.0
        %4106 = vmatpush1.msra.mxu0 0.0
        %4107 = vmatprep.subr.mxu0 0.0
        %4108 = vmatpush1.msra.mxu0 0.0
        %4109 = vmatprep.subr.mxu0 0.0
        %4110 = vmatpush1.msra.mxu0 0.0
        %4111 = vmatprep.subr.mxu0 0.0
        %4112 = vmatpush1.msra.mxu0 0.0
        %4113 = vmatprep.subr.mxu0 0.0
        %4114 = vmatpush1.msra.mxu0 0.0
        %4115 = vmatprep.subr.mxu0 0.0
        %4116 = vmatpush1.msra.mxu0 0.0
        %4117 = vmatprep.subr.mxu0 0.0
        %4118 = vmatpush1.msra.mxu0 0.0
        %4119 = vmatprep.subr.mxu0 0.0
        %4120 = vmatpush1.msra.mxu0 0.0
        %4121 = vmatprep.subr.mxu0 0.0
        %4122 = vmatpush1.msra.mxu0 0.0
        %4123 = vmatprep.subr.mxu0 0.0
        %4124 = vmatpush1.msra.mxu0 0.0
        %4125 = vmatprep.subr.mxu0 0.0
        %4126 = vmatpush1.msra.mxu0 0.0
        %4127 = vmatprep.subr.mxu0 0.0
        %4128 = vmatpush1.msra.mxu0 0.0
        %4129 = vmatprep.subr.mxu0 0.0
        %4130 = vmatpush1.msra.mxu0 0.0
        %4131 = vmatprep.subr.mxu0 0.0
        %4132 = vmatpush1.msra.mxu0 0.0
        %4133 = vmatprep.subr.mxu0 0.0
        %4134 = vmatpush1.msra.mxu0 0.0
        %4135 = vmatprep.subr.mxu0 0.0
        %4136 = vmatpush1.msra.mxu0 0.0
        %4137 = vmatprep.subr.mxu0 0.0
        %4138 = vmatpush1.msra.mxu0 0.0
        %4139 = vmatprep.subr.mxu0 0.0
        %4140 = vmatpush1.msra.mxu0 0.0
        %4141 = vmatprep.mubr.f32.mxu0 0.0
        %4142 = vmatmul.mubr.f32.gmra.mrb[0].mxu0 %v4075
        %v4143 = vpop.f32.mrb[0].mxu0
        %v4144 = vadd.f32 0.0, %v4143
        %v4145 = vpop.f32.mrb[0].mxu0
        %4146 = vdwg.mxu0
        %v4147 = vadd.f32 %v4063, %v4144
        %v4148 = vld [vmem:[%s9 + $0x140] sm:$0xff]
        %v4149 = vld [vmem:[%s9 + $0x148] sm:$0xff]
        %v4150 = vld [vmem:[%s9 + $0x150] sm:$0xff]
        %v4151 = vld [vmem:[%s9 + $0x158] sm:$0xff]
        %v4152 = vld [vmem:[%s9 + $0x160] sm:$0xff]
        %v4153 = vld [vmem:[%s9 + $0x168] sm:$0xff]
        %v4154 = vld [vmem:[%s9 + $0x170] sm:$0xff]
        %v4155 = vld [vmem:[%s9 + $0x178] sm:$0xff]
        %v4156 = vld [vmem:[%s9 + $0x180] sm:$0xff]
        %v4157 = vld [vmem:[%s9 + $0x188] sm:$0xff]
        %v4158 = vrot.slane %v3809, 4
        %v4159 = vsel %vm3821, %v4158, 0
        %4161 = vmatprep.subr.mxu0 0.0
        %4162 = vmatpush1.msra.mxu0 %v4148
        %4163 = vmatprep.subr.mxu0 0.0
        %4164 = vmatpush1.msra.mxu0 %v4149
        %4165 = vmatprep.subr.mxu0 0.0
        %4166 = vmatpush1.msra.mxu0 %v4150
        %4167 = vmatprep.subr.mxu0 0.0
        %4168 = vmatpush1.msra.mxu0 %v4151
        %4169 = vmatprep.subr.mxu0 0.0
        %4170 = vmatpush1.msra.mxu0 %v4152
        %4171 = vmatprep.subr.mxu0 0.0
        %4172 = vmatpush1.msra.mxu0 %v4153
        %4173 = vmatprep.subr.mxu0 0.0
        %4174 = vmatpush1.msra.mxu0 %v4154
        %4175 = vmatprep.subr.mxu0 0.0
        %4176 = vmatpush1.msra.mxu0 %v4155
        %4177 = vmatprep.subr.mxu0 0.0
        %4178 = vmatpush1.msra.mxu0 %v4156
        %4179 = vmatprep.subr.mxu0 0.0
        %4180 = vmatpush1.msra.mxu0 %v4157
        %4181 = vmatprep.subr.mxu0 0.0
        %4182 = vmatpush1.msra.mxu0 0.0
        %4183 = vmatprep.subr.mxu0 0.0
        %4184 = vmatpush1.msra.mxu0 0.0
        %4185 = vmatprep.subr.mxu0 0.0
        %4186 = vmatpush1.msra.mxu0 0.0
        %4187 = vmatprep.subr.mxu0 0.0
        %4188 = vmatpush1.msra.mxu0 0.0
        %4189 = vmatprep.subr.mxu0 0.0
        %4190 = vmatpush1.msra.mxu0 0.0
        %4191 = vmatprep.subr.mxu0 0.0
        %4192 = vmatpush1.msra.mxu0 0.0
        %4193 = vmatprep.subr.mxu0 0.0
        %4194 = vmatpush1.msra.mxu0 0.0
        %4195 = vmatprep.subr.mxu0 0.0
        %4196 = vmatpush1.msra.mxu0 0.0
        %4197 = vmatprep.subr.mxu0 0.0
        %4198 = vmatpush1.msra.mxu0 0.0
        %4199 = vmatprep.subr.mxu0 0.0
        %4200 = vmatpush1.msra.mxu0 0.0
        %4201 = vmatprep.subr.mxu0 0.0
        %4202 = vmatpush1.msra.mxu0 0.0
        %4203 = vmatprep.subr.mxu0 0.0
        %4204 = vmatpush1.msra.mxu0 0.0
        %4205 = vmatprep.subr.mxu0 0.0
        %4206 = vmatpush1.msra.mxu0 0.0
        %4207 = vmatprep.subr.mxu0 0.0
        %4208 = vmatpush1.msra.mxu0 0.0
        %4209 = vmatprep.subr.mxu0 0.0
        %4210 = vmatpush1.msra.mxu0 0.0
        %4211 = vmatprep.subr.mxu0 0.0
        %4212 = vmatpush1.msra.mxu0 0.0
        %4213 = vmatprep.subr.mxu0 0.0
        %4214 = vmatpush1.msra.mxu0 0.0
        %4215 = vmatprep.subr.mxu0 0.0
        %4216 = vmatpush1.msra.mxu0 0.0
        %4217 = vmatprep.subr.mxu0 0.0
        %4218 = vmatpush1.msra.mxu0 0.0
        %4219 = vmatprep.subr.mxu0 0.0
        %4220 = vmatpush1.msra.mxu0 0.0
        %4221 = vmatprep.subr.mxu0 0.0
        %4222 = vmatpush1.msra.mxu0 0.0
        %4223 = vmatprep.subr.mxu0 0.0
        %4224 = vmatpush1.msra.mxu0 0.0
        %4225 = vmatprep.mubr.f32.mxu0 0.0
        %4226 = vmatmul.mubr.f32.gmra.mrb[0].mxu0 %v4159
        %v4227 = vpop.f32.mrb[0].mxu0
        %v4228 = vadd.f32 0.0, %v4227
        %v4229 = vpop.f32.mrb[0].mxu0
        %4230 = vdwg.mxu0
        %v4231 = vadd.f32 %v4147, %v4228
        %v4232 = vmax.f32 %v4231, 0.0
        %v4233 = vld [vmem:[%s11] sm:$0xff]
        %v4234 = vld [vmem:[%s11 + $0x8] sm:$0xff]
        %v4235 = vld [vmem:[%s11 + $0x10] sm:$0xff]
        %v4236 = vld [vmem:[%s11 + $0x18] sm:$0xff]
        %v4237 = vld [vmem:[%s11 + $0x20] sm:$0xff]
        %v4238 = vld [vmem:[%s11 + $0x28] sm:$0xff]
        %v4239 = vld [vmem:[%s11 + $0x30] sm:$0xff]
        %v4240 = vld [vmem:[%s11 + $0x38] sm:$0xff]
        %v4241 = vld [vmem:[%s11 + $0x40] sm:$0xff]
        %v4242 = vld [vmem:[%s11 + $0x48] sm:$0xff]
        %v4243 = vld [vmem:[%s11 + $0x50] sm:$0xff]
        %v4244 = vld [vmem:[%s11 + $0x58] sm:$0xff]
        %v4245 = vld [vmem:[%s11 + $0x60] sm:$0xff]
        %v4246 = vld [vmem:[%s11 + $0x68] sm:$0xff]
        %v4247 = vld [vmem:[%s11 + $0x70] sm:$0xff]
        %v4248 = vld [vmem:[%s12] sm:$0x1]
        %vm4249 = vcmask 982016
        %v4251 = vsel %vm4249, %v4232, 0
        %4253 = vmatprep.subr.mxu0 0.0
        %4254 = vmatpush1.msra.mxu0 %v4233
        %4255 = vmatprep.subr.mxu0 0.0
        %4256 = vmatpush1.msra.mxu0 %v4234
        %4257 = vmatprep.subr.mxu0 0.0
        %4258 = vmatpush1.msra.mxu0 %v4235
        %4259 = vmatprep.subr.mxu0 0.0
        %4260 = vmatpush1.msra.mxu0 %v4236
        %4261 = vmatprep.subr.mxu0 0.0
        %4262 = vmatpush1.msra.mxu0 %v4237
        %4263 = vmatprep.subr.mxu0 0.0
        %4264 = vmatpush1.msra.mxu0 %v4238
        %4265 = vmatprep.subr.mxu0 0.0
        %4266 = vmatpush1.msra.mxu0 %v4239
        %4267 = vmatprep.subr.mxu0 0.0
        %4268 = vmatpush1.msra.mxu0 %v4240
        %4269 = vmatprep.subr.mxu0 0.0
        %4270 = vmatpush1.msra.mxu0 %v4241
        %4271 = vmatprep.subr.mxu0 0.0
        %4272 = vmatpush1.msra.mxu0 %v4242
        %4273 = vmatprep.subr.mxu0 0.0
        %4274 = vmatpush1.msra.mxu0 %v4243
        %4275 = vmatprep.subr.mxu0 0.0
        %4276 = vmatpush1.msra.mxu0 %v4244
        %4277 = vmatprep.subr.mxu0 0.0
        %4278 = vmatpush1.msra.mxu0 %v4245
        %4279 = vmatprep.subr.mxu0 0.0
        %4280 = vmatpush1.msra.mxu0 %v4246
        %4281 = vmatprep.subr.mxu0 0.0
        %4282 = vmatpush1.msra.mxu0 %v4247
        %4283 = vmatprep.subr.mxu0 0.0
        %4284 = vmatpush1.msra.mxu0 0.0
        %4285 = vmatprep.subr.mxu0 0.0
        %4286 = vmatpush1.msra.mxu0 0.0
        %4287 = vmatprep.subr.mxu0 0.0
        %4288 = vmatpush1.msra.mxu0 0.0
        %4289 = vmatprep.subr.mxu0 0.0
        %4290 = vmatpush1.msra.mxu0 0.0
        %4291 = vmatprep.subr.mxu0 0.0
        %4292 = vmatpush1.msra.mxu0 0.0
        %4293 = vmatprep.subr.mxu0 0.0
        %4294 = vmatpush1.msra.mxu0 0.0
        %4295 = vmatprep.subr.mxu0 0.0
        %4296 = vmatpush1.msra.mxu0 0.0
        %4297 = vmatprep.subr.mxu0 0.0
        %4298 = vmatpush1.msra.mxu0 0.0
        %4299 = vmatprep.subr.mxu0 0.0
        %4300 = vmatpush1.msra.mxu0 0.0
        %4301 = vmatprep.subr.mxu0 0.0
        %4302 = vmatpush1.msra.mxu0 0.0
        %4303 = vmatprep.subr.mxu0 0.0
        %4304 = vmatpush1.msra.mxu0 0.0
        %4305 = vmatprep.subr.mxu0 0.0
        %4306 = vmatpush1.msra.mxu0 0.0
        %4307 = vmatprep.subr.mxu0 0.0
        %4308 = vmatpush1.msra.mxu0 0.0
        %4309 = vmatprep.subr.mxu0 0.0
        %4310 = vmatpush1.msra.mxu0 0.0
        %4311 = vmatprep.subr.mxu0 0.0
        %4312 = vmatpush1.msra.mxu0 0.0
        %4313 = vmatprep.subr.mxu0 0.0
        %4314 = vmatpush1.msra.mxu0 0.0
        %4315 = vmatprep.subr.mxu0 0.0
        %4316 = vmatpush1.msra.mxu0 0.0
        %4317 = vmatprep.mubr.f32.mxu0 0.0
        %4318 = vmatmul.mubr.f32.gmra.mrb[0].mxu0 %v4251
        %v4319 = vpop.f32.mrb[0].mxu0
        %v4320 = vadd.f32 %v4248, %v4319
        %v4321 = vpop.f32.mrb[0].mxu0
        %4322 = vdwg.mxu0
        %v4323 = vmax.f32 %v4320, 0.0
        %v4324 = vld [vmem:[%s13] sm:$0xff]
        %v4325 = vld [vmem:[%s13 + $0x8] sm:$0xff]
        %v4326 = vld [vmem:[%s13 + $0x10] sm:$0xff]
        %v4327 = vld [vmem:[%s13 + $0x18] sm:$0xff]
        %v4328 = vld [vmem:[%s13 + $0x20] sm:$0xff]
        %v4329 = vld [vmem:[%s13 + $0x28] sm:$0xff]
        %v4330 = vld [vmem:[%s13 + $0x30] sm:$0xff]
        %v4331 = vld [vmem:[%s13 + $0x38] sm:$0xff]
        %v4332 = vld [vmem:[%s13 + $0x40] sm:$0xff]
        %v4333 = vld [vmem:[%s13 + $0x48] sm:$0xff]
        %v4334 = vld [vmem:[%s13 + $0x50] sm:$0xf]
        %v4335 = vld [vmem:[%s14] sm:$0x1]
        %v4337 = vsel %vm2839, %v4323, 0
        %v4340 = vsel %vm2329, %v4334, 0
        %4342 = vmatprep.subr.mxu0 0.0
        %4343 = vmatpush1.msra.mxu0 %v4324
        %4344 = vmatprep.subr.mxu0 0.0
        %4345 = vmatpush1.msra.mxu0 %v4325
        %4346 = vmatprep.subr.mxu0 0.0
        %4347 = vmatpush1.msra.mxu0 %v4326
        %4348 = vmatprep.subr.mxu0 0.0
        %4349 = vmatpush1.msra.mxu0 %v4327
        %4350 = vmatprep.subr.mxu0 0.0
        %4351 = vmatpush1.msra.mxu0 %v4328
        %4352 = vmatprep.subr.mxu0 0.0
        %4353 = vmatpush1.msra.mxu0 %v4329
        %4354 = vmatprep.subr.mxu0 0.0
        %4355 = vmatpush1.msra.mxu0 %v4330
        %4356 = vmatprep.subr.mxu0 0.0
        %4357 = vmatpush1.msra.mxu0 %v4331
        %4358 = vmatprep.subr.mxu0 0.0
        %4359 = vmatpush1.msra.mxu0 %v4332
        %4360 = vmatprep.subr.mxu0 0.0
        %4361 = vmatpush1.msra.mxu0 %v4333
        %4362 = vmatprep.subr.mxu0 0.0
        %4363 = vmatpush1.msra.mxu0 %v4340
        %4364 = vmatprep.subr.mxu0 0.0
        %4365 = vmatpush1.msra.mxu0 0.0
        %4366 = vmatprep.subr.mxu0 0.0
        %4367 = vmatpush1.msra.mxu0 0.0
        %4368 = vmatprep.subr.mxu0 0.0
        %4369 = vmatpush1.msra.mxu0 0.0
        %4370 = vmatprep.subr.mxu0 0.0
        %4371 = vmatpush1.msra.mxu0 0.0
        %4372 = vmatprep.subr.mxu0 0.0
        %4373 = vmatpush1.msra.mxu0 0.0
        %4374 = vmatprep.subr.mxu0 0.0
        %4375 = vmatpush1.msra.mxu0 0.0
        %4376 = vmatprep.subr.mxu0 0.0
        %4377 = vmatpush1.msra.mxu0 0.0
        %4378 = vmatprep.subr.mxu0 0.0
        %4379 = vmatpush1.msra.mxu0 0.0
        %4380 = vmatprep.subr.mxu0 0.0
        %4381 = vmatpush1.msra.mxu0 0.0
        %4382 = vmatprep.subr.mxu0 0.0
        %4383 = vmatpush1.msra.mxu0 0.0
        %4384 = vmatprep.subr.mxu0 0.0
        %4385 = vmatpush1.msra.mxu0 0.0
        %4386 = vmatprep.subr.mxu0 0.0
        %4387 = vmatpush1.msra.mxu0 0.0
        %4388 = vmatprep.subr.mxu0 0.0
        %4389 = vmatpush1.msra.mxu0 0.0
        %4390 = vmatprep.subr.mxu0 0.0
        %4391 = vmatpush1.msra.mxu0 0.0
        %4392 = vmatprep.subr.mxu0 0.0
        %4393 = vmatpush1.msra.mxu0 0.0
        %4394 = vmatprep.subr.mxu0 0.0
        %4395 = vmatpush1.msra.mxu0 0.0
        %4396 = vmatprep.subr.mxu0 0.0
        %4397 = vmatpush1.msra.mxu0 0.0
        %4398 = vmatprep.subr.mxu0 0.0
        %4399 = vmatpush1.msra.mxu0 0.0
        %4400 = vmatprep.subr.mxu0 0.0
        %4401 = vmatpush1.msra.mxu0 0.0
        %4402 = vmatprep.subr.mxu0 0.0
        %4403 = vmatpush1.msra.mxu0 0.0
        %4404 = vmatprep.subr.mxu0 0.0
        %4405 = vmatpush1.msra.mxu0 0.0
        %4406 = vmatprep.mubr.f32.mxu0 0.0
        %4407 = vmatmul.mubr.f32.gmra.mrb[0].mxu0 %v4337
        %v4408 = vpop.f32.mrb[0].mxu0
        %v4409 = vadd.f32 %v4335, %v4408
        %v4410 = vpop.f32.mrb[0].mxu0
        %4411 = vdwg.mxu0
        %vm4412 = vcmask 73728
        %4413 = vst.msk [vmem:[%s486] sm:$0x1] %vm4412, %v4409
        %s4414 = sand.u32 %s357, 1
        %s4415 = scalar_lea.sflag [#allocation3], %s4414
        %s4416 = sand.u32 %s357, 1
        %s4417 = scalar_lea.vmem [#allocation2], %s4416
        // Predicated region
        $region81: #{net_forward.1} parent=79 // pred_check
          %p4418 = pneg %p367
        $region82: #{net_forward.1} parent=79 // pred_check_branch
          %4420 = sbr.rel (%p4418) target = $region84
        $region83: #{net_forward.1} parent=79 // pred_region
          %s4422 = ssub.s32 16, 16
          %4423 = vsyncadd %s4415, %s4422
          %s4424 = smul.addr %s29, 16
          %s4425 = scalar_lea.hbm %s15, %s4424
          %s4427 = sshll.u32 %s4417, 4
          %s4428 = int_to_ptr.vmem [resolvable:$true] %s4427
          %4430 = dma.vmem_to_hbm [thread:$0]  %s4428, 16, %s4425, %s4415
        $region84: #{net_forward.1} parent=79 // pred_fallthru
          _
      $region80: #{net_forward.1} parent=5 // pred_fallthru
        _
      %p4431 = scmp.le.s32.totalorder 2, %s24
      // Predicated region
      $region85: #{net_forward.1} parent=5 // pred_check
        %p4432 = pneg %p4431
      $region86: #{net_forward.1} parent=5 // pred_check_branch
        %4434 = sbr.rel (%p4432) target = $region88
      $region87: #{net_forward.1} parent=5 // pred_region
        %s4435 = ssub.s32 %s24, 2
        // Predicated region
        $region89: #{net_forward.1} parent=87 // pred_check
          %p4436 = pneg %p373
        $region90: #{net_forward.1} parent=87 // pred_check_branch
          %4438 = sbr.rel (%p4436) target = $region92
        $region91: #{net_forward.1} parent=87 // pred_region
          %s4439 = sand.u32 %s358, 1
          %s4440 = scalar_lea.sflag [#allocation3], %s4439
          %s4441 = sand.u32 %s358, 1
          %s4442 = scalar_lea.vmem [#allocation2], %s4441
          %4443 = dma.done %s4440, 16
        $region92: #{net_forward.1} parent=87 // pred_fallthru
          _
      $region88: #{net_forward.1} parent=5 // pred_fallthru
        _
    $region6: #{net_forward.1} parent=1 // loop_footer
      %s28 = sadd.s32 1, %s24
    $region7: #{net_forward.1} parent=1 // loop_footer_branch
      %23 = sbr.rel target = $region3
    $region8: #{net_forward.1} parent=1 // loop_exit
      _
    %4444 = vsyncpa [#allocation3], 1
    %s4445 = scalar_lea.sflag [#allocation3], 1
    %4446 = vsyncpa %s4445, 1

</llo_original>
